<compile_context>
chip_gen: v7x
topology: tpu7x:2x2x1
jax: 0.10.0
libtpu: 0.0.40
codegen_flags: <defaults>
</compile_context>

<pallas_src>
import jax
import jax.numpy as jnp
from jax import lax
from jax.experimental import pallas as pl
from jax.experimental.pallas import tpu as pltpu


# ----------------------------- helpers -----------------------------

def _round_up(x, m):
    return ((x + m - 1) // m) * m


def _vmem_limit():
    """Generation-aware scoped-VMEM limit: ~3/4 of physical, capped at 100 MiB.
    (v5e/v6e: 128 MiB physical -> 96 MiB; v7x: 64 MiB -> 48 MiB)."""
    try:
        cap = int(pltpu.get_tpu_info().vmem_capacity_bytes)
    except Exception:
        cap = 64 * 1024 * 1024
    return max(32 * 1024 * 1024, min(cap * 3 // 4, 100 * 1024 * 1024))


def _pick_tile(m, block_rows):
    """Row-tile size: multiple of 16 (bf16 sublane packing), capped at cdiv(m, 2) so
    the grid has >= 2 steps whenever possible (v7x dual TC + double buffering)."""
    half = -(-m // 2)
    tm = min(block_rows, _round_up(half, 16))
    tm = max(16, _round_up(tm, 16))
    return tm, _round_up(m, tm)


# ----------------------------- Pallas kernels -----------------------------

def _conv_relu_pool_kernel(a_ref, w_ref, b_ref, o_ref):
    """Fused conv-as-GEMM + 2x2 max-pool + bias + ReLU.

    a_ref: (4, TM, K) bf16 -- stacked im2col of the 4 pool-window quadrants.
    w_ref: (K, N) bf16 resident weight; b_ref: (1, N) f32 bias.
    o_ref: (TM, N) bf16 = relu(max_q(a_q @ w) + b).
    """
    q, tm, k = a_ref.shape
    a = a_ref[...].reshape(q * tm, k)                      # leading-dim merge: free
    acc = jnp.dot(a, w_ref[...], preferred_element_type=jnp.float32)
    acc = acc.reshape(q, tm, -1)
    pooled = jnp.max(acc, axis=0)                          # max over the 4 quadrants
    o_ref[...] = jnp.maximum(pooled + b_ref[...], 0.0).astype(o_ref.dtype)


def _mlp_head_kernel(x_ref, w1_ref, b1_ref, w2_ref, b2_ref, o_ref):
    """Fused fc1 + ReLU + fc2 + log_softmax(dim=1).

    x (TM, 1024) bf16, w1 (1024, 512) bf16, w2 (512, 128) bf16.
    Padded logit columns carry a -1e30 bias so exp() underflows to 0 and the
    log_softmax over 128 columns equals the log_softmax over the 10 real classes.
    """
    h = jnp.dot(x_ref[...], w1_ref[...], preferred_element_type=jnp.float32) + b1_ref[...]
    h = jnp.maximum(h, 0.0).astype(w2_ref.dtype)           # ReLU, back to bf16 for MXU
    logits = jnp.dot(h, w2_ref[...], preferred_element_type=jnp.float32) + b2_ref[...]
    m = jnp.max(logits, axis=-1, keepdims=True)
    z = logits - m
    o_ref[...] = z - jnp.log(jnp.sum(jnp.exp(z), axis=-1, keepdims=True))


# ----------------------------- im2col (pool-quadrant) glue -----------------------------

def _im2col_pool_quadrants_stacked(x, kh, kw):
    """x: (B, H, W, C) NHWC bf16. Returns a single stacked array (4, B*PH*PW, kh*kw*C)
    with one slab per 2x2 pool quadrant (di, dj); column order (ki, kj, c), row order
    (b, pooled_i, pooled_j)."""
    B, H, W, C = x.shape
    OH, OW = H - kh + 1, W - kw + 1
    PH, PW = OH // 2, OW // 2
    quads = []
    for di in (0, 1):
        for dj in (0, 1):
            taps = [x[:, di + ki: di + ki + 2 * PH - 1: 2,
                         dj + kj: dj + kj + 2 * PW - 1: 2, :]
                    for ki in range(kh) for kj in range(kw)]       # each (B, PH, PW, C)
            quads.append(jnp.stack(taps, axis=3).reshape(B * PH * PW, kh * kw * C))
    return jnp.stack(quads, axis=0), PH, PW                        # (4, M, K)


# ----------------------------- pallas_call wrappers -----------------------------

def conv_relu_pool(x_nhwc, w_gemm, bias, *, kh=5, kw=5, block_rows=1024):
    """conv(kh x kw, stride 1) + bias + ReLU + maxpool(2,2) on an NHWC input.
    Returns the pooled activation (B, PH, PW, N) in bf16 (N lane-padded)."""
    B = x_nhwc.shape[0]
    a, PH, PW = _im2col_pool_quadrants_stacked(x_nhwc.astype(jnp.bfloat16), kh, kw)
    _, M, K = a.shape
    N = w_gemm.shape[1]

    tm, Mp = _pick_tile(M, block_rows)
    if Mp != M:
        a = jnp.pad(a, ((0, 0), (0, Mp - M), (0, 0)))      # single pad of the stack

    out = pl.pallas_call(
        _conv_relu_pool_kernel,
        out_shape=jax.ShapeDtypeStruct((Mp, N), jnp.bfloat16),
        grid=(Mp // tm,),
        in_specs=[pl.BlockSpec((4, tm, K), lambda i: (0, i, 0)),
                  pl.BlockSpec((K, N), lambda i: (0, 0)),
                  pl.BlockSpec((1, N), lambda i: (0, 0))],
        out_specs=pl.BlockSpec((tm, N), lambda i: (i, 0)),
        compiler_params=pltpu.CompilerParams(
            dimension_semantics=("parallel",),
            vmem_limit_bytes=_vmem_limit()),
    )(a, w_gemm, bias.reshape(1, N).astype(jnp.float32))

    return out[:M].reshape(B, PH, PW, N)


def mlp_head(flat, w1, b1, w2, b2, *, block_rows=1024):
    """fc1 + ReLU + fc2 + log_softmax on (B, 1024) bf16 features."""
    B, K = flat.shape
    H = w1.shape[1]
    N = w2.shape[1]

    tm, Bp = _pick_tile(B, block_rows)
    if Bp != B:
        flat = jnp.pad(flat, ((0, Bp - B), (0, 0)))

    out = pl.pallas_call(
        _mlp_head_kernel,
        out_shape=jax.ShapeDtypeStruct((Bp, N), jnp.float32),
        grid=(Bp // tm,),
        in_specs=[pl.BlockSpec((tm, K), lambda i: (i, 0)),
                  pl.BlockSpec((K, H), lambda i: (0, 0)),
                  pl.BlockSpec((1, H), lambda i: (0, 0)),
                  pl.BlockSpec((H, N), lambda i: (0, 0)),
                  pl.BlockSpec((1, N), lambda i: (0, 0))],
        out_specs=pl.BlockSpec((tm, N), lambda i: (i, 0)),
        compiler_params=pltpu.CompilerParams(
            dimension_semantics=("parallel",),
            vmem_limit_bytes=_vmem_limit()),
    )(flat, w1, b1.reshape(1, H).astype(jnp.float32), w2, b2.reshape(1, N).astype(jnp.float32))
    return out


# ----------------------------- parameters -----------------------------

_C1PAD = 32    # lane-padded conv1 output channels (20 real)
_C2PAD = 64    # lane-padded conv2 output channels (50 real)
_FPAD = 512    # lane-padded fc1 width (500 real)
_NPAD = 128    # lane-padded logits width (10 real)


def init_raw_params(key):
    """PyTorch-layout parameters (as nn.Conv2d / nn.Linear would hold them)."""
    ks = jax.random.split(key, 8)
    return dict(
        w1=jax.random.normal(ks[0], (20, 1, 5, 5), jnp.float32) * 0.10,    # conv1
        b1=jax.random.normal(ks[1], (20,), jnp.float32) * 0.10,
        w2=jax.random.normal(ks[2], (50, 20, 5, 5), jnp.float32) * 0.05,   # conv2
        b2=jax.random.normal(ks[3], (50,), jnp.float32) * 0.05,
        fc1_w=jax.random.normal(ks[4], (500, 800), jnp.float32) * 0.05,    # fc1 (out, c*h*w)
        fc1_b=jax.random.normal(ks[5], (500,), jnp.float32) * 0.05,
        fc2_w=jax.random.normal(ks[6], (10, 500), jnp.float32) * 0.05,     # fc2
        fc2_b=jax.random.normal(ks[7], (10,), jnp.float32) * 0.05,
    )


def pack_params(raw):
    """Pack PyTorch-layout parameters into GEMM-ready, lane-padded bf16 weights."""
    # conv1: (co,ci,ki,kj) -> (ki,kj,ci) x co, pad co 20->32.
    w1g = jnp.transpose(raw["w1"], (2, 3, 1, 0)).reshape(25, 20)
    w1g = jnp.pad(w1g, ((0, 0), (0, _C1PAD - 20))).astype(jnp.bfloat16)        # (25, 32)
    b1g = jnp.pad(raw["b1"], (0, _C1PAD - 20))                                 # (32,)

    # conv2: contraction over (ki,kj,ci_pad=32); padded cin rows are zero. Pad co 50->64.
    w2 = jnp.transpose(raw["w2"], (2, 3, 1, 0))                                # (5,5,20,50)
    w2 = jnp.pad(w2, ((0, 0), (0, 0), (0, _C1PAD - 20), (0, _C2PAD - 50)))
    w2g = w2.reshape(5 * 5 * _C1PAD, _C2PAD).astype(jnp.bfloat16)              # (800, 64)
    b2g = jnp.pad(raw["b2"], (0, _C2PAD - 50))                                 # (64,)

    # fc1: fold the NCHW flatten (c,h,w order) into a permuted, channel-padded weight so
    # the pooled NHWC (h,w,c_pad=64) activation flattens directly.
    w = raw["fc1_w"].reshape(500, 50, 4, 4)                                    # (out, c, h, w)
    w = jnp.transpose(w, (2, 3, 1, 0))                                         # (h, w, c, out)
    w = jnp.pad(w, ((0, 0), (0, 0), (0, _C2PAD - 50), (0, _FPAD - 500)))
    fc1_wg = w.reshape(4 * 4 * _C2PAD, _FPAD).astype(jnp.bfloat16)             # (1024, 512)
    fc1_bg = jnp.pad(raw["fc1_b"], (0, _FPAD - 500))                           # (512,)

    # fc2: pad K 500->512 (zero rows), N 10->128; padded logits get -1e30 bias.
    fc2_wg = jnp.pad(raw["fc2_w"].T,
                     ((0, _FPAD - 500), (0, _NPAD - 10))).astype(jnp.bfloat16)  # (512, 128)
    fc2_bg = jnp.concatenate(
        [raw["fc2_b"], jnp.full((_NPAD - 10,), -1e30, jnp.float32)])            # (128,)

    return dict(w1g=w1g, b1g=b1g, w2g=w2g, b2g=b2g,
                fc1_wg=fc1_wg, fc1_bg=fc1_bg, fc2_wg=fc2_wg, fc2_bg=fc2_bg)


# ----------------------------- model forward -----------------------------

def lenet_forward(x, params):
    """x: (B, 1, 28, 28) float32 NCHW -> (B, 10) log-probabilities (float32)."""
    B = x.shape[0]
    x_nhwc = x.reshape(B, 28, 28, 1)          # C==1: NCHW -> NHWC is a pure reshape

    # conv1 + ReLU + 2x2 max-pool (fused kernel) -> (B, 12, 12, 32) bf16.
    # Padded channels are exactly zero (zero weight cols + zero bias + ReLU).
    p1 = conv_relu_pool(x_nhwc, params["w1g"], params["b1g"], block_rows=2048)

    # conv2 + ReLU + 2x2 max-pool (fused kernel) -> (B, 4, 4, 64) bf16.
    p2 = conv_relu_pool(p1, params["w2g"], params["b2g"], block_rows=1024)

    # Flatten (free view); the (c,h,w) ordering of x.view(-1, 4*4*50) is folded into fc1_wg.
    flat = p2.reshape(B, 4 * 4 * _C2PAD)       # (B, 1024) bf16

    # fc1 + ReLU + fc2 + log_softmax (fused kernel), then drop padding.
    out = mlp_head(flat, params["fc1_wg"], params["fc1_bg"],
                   params["fc2_wg"], params["fc2_bg"], block_rows=1024)
    return out[:B, :10]


# ----------------------------- pure-JAX f32 reference -----------------------------

def lenet_reference(x, raw):
    dn = ("NCHW", "OIHW", "NCHW")
    y = lax.conv_general_dilated(x, raw["w1"], (1, 1), "VALID",
                                 dimension_numbers=dn) + raw["b1"][None, :, None, None]
    y = jnp.maximum(y, 0.0)
    y = lax.reduce_window(y, -jnp.inf, lax.max, (1, 1, 2, 2), (1, 1, 2, 2), "VALID")
    y = lax.conv_general_dilated(y, raw["w2"], (1, 1), "VALID",
                                 dimension_numbers=dn) + raw["b2"][None, :, None, None]
    y = jnp.maximum(y, 0.0)
    y = lax.reduce_window(y, -jnp.inf, lax.max, (1, 1, 2, 2), (1, 1, 2, 2), "VALID")
    y = y.reshape(y.shape[0], -1)                               # NCHW flatten (c,h,w)
    h = jnp.maximum(y @ raw["fc1_w"].T + raw["fc1_b"], 0.0)
    logits = h @ raw["fc2_w"].T + raw["fc2_b"]
    return jax.nn.log_softmax(logits, axis=-1)


if __name__ == "__main__":
    key = jax.random.PRNGKey(0)
    pkey, xkey = jax.random.split(key)
    raw = init_raw_params(pkey)
    params = pack_params(raw)
    # MNIST-shaped input (28x28 required by the 4*4*50 flatten); small batch of 2.
    x = jax.random.normal(xkey, (2, 1, 28, 28), dtype=jnp.float32)

    out = jax.jit(lenet_forward)(x, params)
    out = jax.block_until_ready(out)

    assert out.shape == (2, 10) and out.dtype == jnp.float32
    # log_softmax rows must (approximately) exponentiate-sum to 1.
    assert bool(jnp.all(jnp.abs(jnp.sum(jnp.exp(out), axis=1) - 1.0) < 1e-3))

    # Validate against a pure-JAX f32 reference (bf16 MXU inputs -> loose tolerance).
    ref = lenet_reference(x, raw)
    max_diff = float(jnp.max(jnp.abs(out - ref)))
    assert max_diff < 0.1, f"max |pallas - reference| = {max_diff}"

    print("KERNEL_OK")
</pallas_src>

<mosaic_0001>
module attributes {stable_mosaic.version = 11 : i64} {
  func.func @_conv_relu_pool_kernel(%arg0: i32, %arg1: memref<4x144x25xbf16, #tpu.memory_space<vmem>>, %arg2: memref<25x32xbf16, #tpu.memory_space<vmem>>, %arg3: memref<1x32xf32, #tpu.memory_space<vmem>>, %arg4: memref<144x32xbf16, #tpu.memory_space<vmem>>) attributes {dimension_semantics = [#tpu.dimension_semantics<parallel>], iteration_bounds = array<i64: 2>, scalar_prefetch = 0 : i64, scratch_operands = 0 : i64, tpu.core_type = #tpu.core_type<tc>, window_params = [{transform_indices = @transform_0, window_bounds = array<i64: 4, 144, 25>}, {pipeline_mode = #tpu.pipeline_mode<synchronous>, transform_indices = @transform_1, window_bounds = array<i64: 25, 32>}, {pipeline_mode = #tpu.pipeline_mode<synchronous>, transform_indices = @transform_2, window_bounds = array<i64: 1, 32>}, {transform_indices = @transform_3, window_bounds = array<i64: 144, 32>}]} {
    %c0 = arith.constant 0 : index
    %c0_0 = arith.constant 0 : index
    %c0_1 = arith.constant 0 : index
    %0 = vector.load %arg1[%c0, %c0_0, %c0_1] : memref<4x144x25xbf16, #tpu.memory_space<vmem>>, vector<4x144x25xbf16>
    %1 = vector.shape_cast %0 : vector<4x144x25xbf16> to vector<576x25xbf16>
    %c0_2 = arith.constant 0 : index
    %c0_3 = arith.constant 0 : index
    %2 = vector.load %arg2[%c0_2, %c0_3] : memref<25x32xbf16, #tpu.memory_space<vmem>>, vector<25x32xbf16>
    %cst = arith.constant dense<0.000000e+00> : vector<576x32xf32>
    %3 = tpu.matmul %1, %2, %cst {dimension_numbers = #tpu.dot_dimension_numbers<[1], [0], [0], [1], [0, 0, 1, 1], [], []>} : vector<576x25xbf16>, vector<25x32xbf16>, vector<576x32xf32> -> vector<576x32xf32>
    %4 = vector.shape_cast %3 : vector<576x32xf32> to vector<4x144x32xf32>
    %cst_4 = arith.constant dense<0xFF800000> : vector<144x32xf32>
    %5 = vector.multi_reduction <maximumf>, %4, %cst_4 [0] : vector<4x144x32xf32> to vector<144x32xf32>
    %c0_5 = arith.constant 0 : index
    %c0_6 = arith.constant 0 : index
    %6 = vector.load %arg3[%c0_5, %c0_6] : memref<1x32xf32, #tpu.memory_space<vmem>>, vector<1x32xf32>
    %7 = vector.broadcast %6 : vector<1x32xf32> to vector<144x32xf32>
    %8 = arith.addf %5, %7 : vector<144x32xf32>
    %cst_7 = arith.constant 0.000000e+00 : f32
    %9 = vector.broadcast %cst_7 : f32 to vector<144x32xf32>
    %10 = arith.maximumf %8, %9 : vector<144x32xf32>
    %11 = arith.truncf %10 : vector<144x32xf32> to vector<144x32xbf16>
    %c0_8 = arith.constant 0 : index
    %c0_9 = arith.constant 0 : index
    %12 = vector.load %arg4[%c0_8, %c0_9] : memref<144x32xbf16, #tpu.memory_space<vmem>>, vector<144x32xbf16>
    tpu.vector_store %arg4[%c0_8, %c0_9], %11 {strides = array<i32>} : memref<144x32xbf16, #tpu.memory_space<vmem>>, vector<144x32xbf16>,
    return
  }
  func.func @transform_0(%arg0: i32) -> (i32, i32, i32) {
    %c0_i32 = arith.constant 0 : i32
    %c0_i32_0 = arith.constant 0 : i32
    %c0_i32_1 = arith.constant 0 : i32
    return %c0_i32, %arg0, %c0_i32_0 : i32, i32, i32
  }
  func.func @transform_1(%arg0: i32) -> (i32, i32) {
    %c0_i32 = arith.constant 0 : i32
    %c0_i32_0 = arith.constant 0 : i32
    %c0_i32_1 = arith.constant 0 : i32
    return %c0_i32, %c0_i32_0 : i32, i32
  }
  func.func @transform_2(%arg0: i32) -> (i32, i32) {
    %c0_i32 = arith.constant 0 : i32
    %c0_i32_0 = arith.constant 0 : i32
    %c0_i32_1 = arith.constant 0 : i32
    return %c0_i32, %c0_i32_0 : i32, i32
  }
  func.func @transform_3(%arg0: i32) -> (i32, i32) {
    %c0_i32 = arith.constant 0 : i32
    %c0_i32_0 = arith.constant 0 : i32
    return %arg0, %c0_i32 : i32, i32
  }
}

module attributes {stable_mosaic.version = 11 : i64} {
  func.func @_conv_relu_pool_kernel(%arg0: i32, %arg1: memref<4x16x800xbf16, #tpu.memory_space<vmem>>, %arg2: memref<800x64xbf16, #tpu.memory_space<vmem>>, %arg3: memref<1x64xf32, #tpu.memory_space<vmem>>, %arg4: memref<16x64xbf16, #tpu.memory_space<vmem>>) attributes {dimension_semantics = [#tpu.dimension_semantics<parallel>], iteration_bounds = array<i64: 2>, scalar_prefetch = 0 : i64, scratch_operands = 0 : i64, tpu.core_type = #tpu.core_type<tc>, window_params = [{transform_indices = @transform_0, window_bounds = array<i64: 4, 16, 800>}, {pipeline_mode = #tpu.pipeline_mode<synchronous>, transform_indices = @transform_1, window_bounds = array<i64: 800, 64>}, {pipeline_mode = #tpu.pipeline_mode<synchronous>, transform_indices = @transform_2, window_bounds = array<i64: 1, 64>}, {transform_indices = @transform_3, window_bounds = array<i64: 16, 64>}]} {
    %c0 = arith.constant 0 : index
    %c0_0 = arith.constant 0 : index
    %c0_1 = arith.constant 0 : index
    %0 = vector.load %arg1[%c0, %c0_0, %c0_1] : memref<4x16x800xbf16, #tpu.memory_space<vmem>>, vector<4x16x800xbf16>
    %1 = vector.shape_cast %0 : vector<4x16x800xbf16> to vector<64x800xbf16>
    %c0_2 = arith.constant 0 : index
    %c0_3 = arith.constant 0 : index
    %2 = vector.load %arg2[%c0_2, %c0_3] : memref<800x64xbf16, #tpu.memory_space<vmem>>, vector<800x64xbf16>
    %cst = arith.constant dense<0.000000e+00> : vector<64x64xf32>
    %3 = tpu.matmul %1, %2, %cst {dimension_numbers = #tpu.dot_dimension_numbers<[1], [0], [0], [1], [0, 0, 1, 1], [], []>} : vector<64x800xbf16>, vector<800x64xbf16>, vector<64x64xf32> -> vector<64x64xf32>
    %4 = vector.shape_cast %3 : vector<64x64xf32> to vector<4x16x64xf32>
    %cst_4 = arith.constant dense<0xFF800000> : vector<16x64xf32>
    %5 = vector.multi_reduction <maximumf>, %4, %cst_4 [0] : vector<4x16x64xf32> to vector<16x64xf32>
    %c0_5 = arith.constant 0 : index
    %c0_6 = arith.constant 0 : index
    %6 = vector.load %arg3[%c0_5, %c0_6] : memref<1x64xf32, #tpu.memory_space<vmem>>, vector<1x64xf32>
    %7 = vector.broadcast %6 : vector<1x64xf32> to vector<16x64xf32>
    %8 = arith.addf %5, %7 : vector<16x64xf32>
    %cst_7 = arith.constant 0.000000e+00 : f32
    %9 = vector.broadcast %cst_7 : f32 to vector<16x64xf32>
    %10 = arith.maximumf %8, %9 : vector<16x64xf32>
    %11 = arith.truncf %10 : vector<16x64xf32> to vector<16x64xbf16>
    %c0_8 = arith.constant 0 : index
    %c0_9 = arith.constant 0 : index
    %12 = vector.load %arg4[%c0_8, %c0_9] : memref<16x64xbf16, #tpu.memory_space<vmem>>, vector<16x64xbf16>
    tpu.vector_store %arg4[%c0_8, %c0_9], %11 {strides = array<i32>} : memref<16x64xbf16, #tpu.memory_space<vmem>>, vector<16x64xbf16>,
    return
  }
  func.func @transform_0(%arg0: i32) -> (i32, i32, i32) {
    %c0_i32 = arith.constant 0 : i32
    %c0_i32_0 = arith.constant 0 : i32
    %c0_i32_1 = arith.constant 0 : i32
    return %c0_i32, %arg0, %c0_i32_0 : i32, i32, i32
  }
  func.func @transform_1(%arg0: i32) -> (i32, i32) {
    %c0_i32 = arith.constant 0 : i32
    %c0_i32_0 = arith.constant 0 : i32
    %c0_i32_1 = arith.constant 0 : i32
    return %c0_i32, %c0_i32_0 : i32, i32
  }
  func.func @transform_2(%arg0: i32) -> (i32, i32) {
    %c0_i32 = arith.constant 0 : i32
    %c0_i32_0 = arith.constant 0 : i32
    %c0_i32_1 = arith.constant 0 : i32
    return %c0_i32, %c0_i32_0 : i32, i32
  }
  func.func @transform_3(%arg0: i32) -> (i32, i32) {
    %c0_i32 = arith.constant 0 : i32
    %c0_i32_0 = arith.constant 0 : i32
    return %arg0, %c0_i32 : i32, i32
  }
}

module attributes {stable_mosaic.version = 11 : i64} {
  func.func @_mlp_head_kernel(%arg0: i32, %arg1: memref<16x1024xbf16, #tpu.memory_space<vmem>>, %arg2: memref<1024x512xbf16, #tpu.memory_space<vmem>>, %arg3: memref<1x512xf32, #tpu.memory_space<vmem>>, %arg4: memref<512x128xbf16, #tpu.memory_space<vmem>>, %arg5: memref<1x128xf32, #tpu.memory_space<vmem>>, %arg6: memref<16x128xf32, #tpu.memory_space<vmem>>) attributes {dimension_semantics = [#tpu.dimension_semantics<parallel>], iteration_bounds = array<i64: 1>, scalar_prefetch = 0 : i64, scratch_operands = 0 : i64, tpu.core_type = #tpu.core_type<tc>, window_params = [{transform_indices = @transform_0, window_bounds = array<i64: 16, 1024>}, {pipeline_mode = #tpu.pipeline_mode<synchronous>, transform_indices = @transform_1, window_bounds = array<i64: 1024, 512>}, {pipeline_mode = #tpu.pipeline_mode<synchronous>, transform_indices = @transform_2, window_bounds = array<i64: 1, 512>}, {pipeline_mode = #tpu.pipeline_mode<synchronous>, transform_indices = @transform_3, window_bounds = array<i64: 512, 128>}, {pipeline_mode = #tpu.pipeline_mode<synchronous>, transform_indices = @transform_4, window_bounds = array<i64: 1, 128>}, {transform_indices = @transform_5, window_bounds = array<i64: 16, 128>}]} {
    %c0 = arith.constant 0 : index
    %c0_0 = arith.constant 0 : index
    %0 = vector.load %arg1[%c0, %c0_0] : memref<16x1024xbf16, #tpu.memory_space<vmem>>, vector<16x1024xbf16>
    %c0_1 = arith.constant 0 : index
    %c0_2 = arith.constant 0 : index
    %1 = vector.load %arg2[%c0_1, %c0_2] : memref<1024x512xbf16, #tpu.memory_space<vmem>>, vector<1024x512xbf16>
    %cst = arith.constant dense<0.000000e+00> : vector<16x512xf32>
    %2 = tpu.matmul %0, %1, %cst {dimension_numbers = #tpu.dot_dimension_numbers<[1], [0], [0], [1], [0, 0, 1, 1], [], []>} : vector<16x1024xbf16>, vector<1024x512xbf16>, vector<16x512xf32> -> vector<16x512xf32>
    %c0_3 = arith.constant 0 : index
    %c0_4 = arith.constant 0 : index
    %3 = vector.load %arg3[%c0_3, %c0_4] : memref<1x512xf32, #tpu.memory_space<vmem>>, vector<1x512xf32>
    %4 = vector.broadcast %3 : vector<1x512xf32> to vector<16x512xf32>
    %5 = arith.addf %2, %4 : vector<16x512xf32>
    %cst_5 = arith.constant 0.000000e+00 : f32
    %6 = vector.broadcast %cst_5 : f32 to vector<16x512xf32>
    %7 = arith.maximumf %5, %6 : vector<16x512xf32>
    %8 = arith.truncf %7 : vector<16x512xf32> to vector<16x512xbf16>
    %c0_6 = arith.constant 0 : index
    %c0_7 = arith.constant 0 : index
    %9 = vector.load %arg4[%c0_6, %c0_7] : memref<512x128xbf16, #tpu.memory_space<vmem>>, vector<512x128xbf16>
    %cst_8 = arith.constant dense<0.000000e+00> : vector<16x128xf32>
    %10 = tpu.matmul %8, %9, %cst_8 {dimension_numbers = #tpu.dot_dimension_numbers<[1], [0], [0], [1], [0, 0, 1, 1], [], []>} : vector<16x512xbf16>, vector<512x128xbf16>, vector<16x128xf32> -> vector<16x128xf32>
    %c0_9 = arith.constant 0 : index
    %c0_10 = arith.constant 0 : index
    %11 = vector.load %arg5[%c0_9, %c0_10] : memref<1x128xf32, #tpu.memory_space<vmem>>, vector<1x128xf32>
    %12 = vector.broadcast %11 : vector<1x128xf32> to vector<16x128xf32>
    %13 = arith.addf %10, %12 : vector<16x128xf32>
    %cst_11 = arith.constant dense<0xFF800000> : vector<16xf32>
    %14 = vector.multi_reduction <maximumf>, %13, %cst_11 [1] : vector<16x128xf32> to vector<16xf32>
    %15 = vector.shape_cast %14 : vector<16xf32> to vector<16x1xf32>
    %16 = vector.broadcast %15 : vector<16x1xf32> to vector<16x128xf32>
    %17 = arith.subf %13, %16 : vector<16x128xf32>
    %18 = math.exp %17 : vector<16x128xf32>
    %cst_12 = arith.constant dense<0.000000e+00> : vector<16xf32>
    %19 = vector.multi_reduction <add>, %18, %cst_12 [1] : vector<16x128xf32> to vector<16xf32>
    %20 = vector.shape_cast %19 : vector<16xf32> to vector<16x1xf32>
    %21 = math.log %20 : vector<16x1xf32>
    %22 = vector.broadcast %21 : vector<16x1xf32> to vector<16x128xf32>
    %23 = arith.subf %17, %22 : vector<16x128xf32>
    %c0_13 = arith.constant 0 : index
    %c0_14 = arith.constant 0 : index
    %24 = vector.load %arg6[%c0_13, %c0_14] : memref<16x128xf32, #tpu.memory_space<vmem>>, vector<16x128xf32>
    tpu.vector_store %arg6[%c0_13, %c0_14], %23 {strides = array<i32>} : memref<16x128xf32, #tpu.memory_space<vmem>>, vector<16x128xf32>,
    return
  }
  func.func @transform_0(%arg0: i32) -> (i32, i32) {
    %c0_i32 = arith.constant 0 : i32
    %c0_i32_0 = arith.constant 0 : i32
    return %arg0, %c0_i32 : i32, i32
  }
  func.func @transform_1(%arg0: i32) -> (i32, i32) {
    %c0_i32 = arith.constant 0 : i32
    %c0_i32_0 = arith.constant 0 : i32
    %c0_i32_1 = arith.constant 0 : i32
    return %c0_i32, %c0_i32_0 : i32, i32
  }
  func.func @transform_2(%arg0: i32) -> (i32, i32) {
    %c0_i32 = arith.constant 0 : i32
    %c0_i32_0 = arith.constant 0 : i32
    %c0_i32_1 = arith.constant 0 : i32
    return %c0_i32, %c0_i32_0 : i32, i32
  }
  func.func @transform_3(%arg0: i32) -> (i32, i32) {
    %c0_i32 = arith.constant 0 : i32
    %c0_i32_0 = arith.constant 0 : i32
    %c0_i32_1 = arith.constant 0 : i32
    return %c0_i32, %c0_i32_0 : i32, i32
  }
  func.func @transform_4(%arg0: i32) -> (i32, i32) {
    %c0_i32 = arith.constant 0 : i32
    %c0_i32_0 = arith.constant 0 : i32
    %c0_i32_1 = arith.constant 0 : i32
    return %c0_i32, %c0_i32_0 : i32, i32
  }
  func.func @transform_5(%arg0: i32) -> (i32, i32) {
    %c0_i32 = arith.constant 0 : i32
    %c0_i32_0 = arith.constant 0 : i32
    return %arg0, %c0_i32 : i32, i32
  }
}

</mosaic_0001>

<llo_original>
// kernel: lenet_forward.3
$region0: #{lenet_forward.3}
  #allocation0 [shape = 'u32[]', space=smem, size = 0x4, offset = 0x4, fixed_abs, tag = 'smem constant byte address 0x4 - core index']
  #allocation1 [shape = 'u32[144,128]{1,0:T(1,128)}', space=vmem, size = 0x12000, scoped, tag = 'internal scratch']
  %s0 = inlined_call_operand.vmem [shape: bf16[4,288,25], index: 0, kind: input, shape index: {}]
  %s1 = inlined_call_operand.vmem [shape: bf16[25,32], index: 1, kind: input, shape index: {}]
  %s2 = inlined_call_operand.vmem [shape: f32[1,32], index: 2, kind: input, shape index: {}]
  %s3 = inlined_call_operand.vmem [shape: bf16[288,32], index: 3, kind: output, shape index: {}]
  %s4 = sld [smem:[#allocation0]]
  $region86: #{lenet_forward.3} parent=0
    _
  %s6 = ssub.s32 1, %s4
  %s7 = scalar_select 0, %s6, %s4
  $region1: #{lenet_forward.3} parent=0
    #allocation2 [shape = 'u8[294912]{0}', space=vmem, size = 0x48000, scoped, tag = 'input window, operand 0']
    loop: start=0, step=1, limit=4
    $region2: #{lenet_forward.3} parent=1 // loop_pre_header
      _
    $region3: #{lenet_forward.3} parent=1 // loop_header
      %s9 = sphi 0, %s13
      %p10 = scmp.ge.s32.totalorder %s9, 4
      %s19 = sphi 0, %s21
      %s22 = sphi 0, %s19
      %s23 = sphi 0, %s22
      %s39 = sphi 0, %s23
      %s43 = sphi 0, %s43
      %s45 = sphi 0, %s43
      %s46 = sphi 0, %s45
      %s60 = sphi 0, %s46
      %s64 = sphi 0, %s64
      %s66 = sphi 0, %s64
      %s67 = sphi 0, %s66
      %s81 = sphi 0, %s67
      %s87 = sphi 0, %s89
      %s90 = sphi 0, %s87
      %s91 = sphi 0, %s90
      %s107 = sphi 0, %s91
    $region4: #{lenet_forward.3} parent=1 // loop_header_branch
      %12 = sbr.rel (%p10) target = $region8
    $region5: #{lenet_forward.3} parent=1 // loop_body
      %s14 = ssub.s32 %s9, 1
      %s15 = ssub.s32 %s9, 2
      %s16 = sadd.s32 %s9, 1
      %s17 = ssub.s32 %s9, %s16
      %p18 = scmp.eq.s32.totalorder %s17, 0
      %s20 = sadd.s32 %s19, 1
      %s21 = scalar_select %p18, %s19, %s20
      %p24 = pneg %p18
      %p25 = scmp.eq.s32.totalorder %s9, 1
      %p26 = por %p24, %p25
      %p27 = scmp.ne.s32.totalorder %s19, %s22
      %p28 = scmp.eq.s32.totalorder %s9, 0
      %p29 = por %p27, %p28
      %p30 = scmp.ne.s32.totalorder %s19, %s22
      %p31 = scmp.eq.s32.totalorder %s14, 1
      %p32 = por %p30, %p31
      %p33 = scmp.ne.s32.totalorder %s22, %s23
      %p34 = scmp.eq.s32.totalorder %s14, 0
      %p35 = por %p33, %p34
      %p36 = scmp.ne.s32.totalorder %s22, %s23
      %p37 = scmp.eq.s32.totalorder %s15, 1
      %p38 = por %p36, %p37
      %p40 = scmp.ne.s32.totalorder %s23, %s39
      %p41 = scmp.eq.s32.totalorder %s15, 0
      %p42 = por %p40, %p41
      %s44 = sadd.s32 %s43, 1
      %p47 = scmp.eq.s32.totalorder %s9, 1
      %p48 = scmp.ne.s32.totalorder %s43, %s45
      %p49 = scmp.eq.s32.totalorder %s9, 0
      %p50 = por %p48, %p49
      %p51 = scmp.ne.s32.totalorder %s43, %s45
      %p52 = scmp.eq.s32.totalorder %s14, 1
      %p53 = por %p51, %p52
      %p54 = scmp.ne.s32.totalorder %s45, %s46
      %p55 = scmp.eq.s32.totalorder %s14, 0
      %p56 = por %p54, %p55
      %p57 = scmp.ne.s32.totalorder %s45, %s46
      %p58 = scmp.eq.s32.totalorder %s15, 1
      %p59 = por %p57, %p58
      %p61 = scmp.ne.s32.totalorder %s46, %s60
      %p62 = scmp.eq.s32.totalorder %s15, 0
      %p63 = por %p61, %p62
      %s65 = sadd.s32 %s64, 1
      %p68 = scmp.eq.s32.totalorder %s9, 1
      %p69 = scmp.ne.s32.totalorder %s64, %s66
      %p70 = scmp.eq.s32.totalorder %s9, 0
      %p71 = por %p69, %p70
      %p72 = scmp.ne.s32.totalorder %s64, %s66
      %p73 = scmp.eq.s32.totalorder %s14, 1
      %p74 = por %p72, %p73
      %p75 = scmp.ne.s32.totalorder %s66, %s67
      %p76 = scmp.eq.s32.totalorder %s14, 0
      %p77 = por %p75, %p76
      %p78 = scmp.ne.s32.totalorder %s66, %s67
      %p79 = scmp.eq.s32.totalorder %s15, 1
      %p80 = por %p78, %p79
      %p82 = scmp.ne.s32.totalorder %s67, %s81
      %p83 = scmp.eq.s32.totalorder %s15, 0
      %p84 = por %p82, %p83
      %s85 = ssub.s32 %s9, %s16
      %p86 = scmp.eq.s32.totalorder %s85, 0
      %s88 = sadd.s32 %s87, 1
      %s89 = scalar_select %p86, %s87, %s88
      %p92 = pneg %p86
      %p93 = scmp.eq.s32.totalorder %s9, 1
      %p94 = por %p92, %p93
      %p95 = scmp.ne.s32.totalorder %s87, %s90
      %p96 = scmp.eq.s32.totalorder %s9, 0
      %p97 = por %p95, %p96
      %p98 = scmp.ne.s32.totalorder %s87, %s90
      %p99 = scmp.eq.s32.totalorder %s14, 1
      %p100 = por %p98, %p99
      %p101 = scmp.ne.s32.totalorder %s90, %s91
      %p102 = scmp.eq.s32.totalorder %s14, 0
      %p103 = por %p101, %p102
      %p104 = scmp.ne.s32.totalorder %s90, %s91
      %p105 = scmp.eq.s32.totalorder %s15, 1
      %p106 = por %p104, %p105
      %p108 = scmp.ne.s32.totalorder %s91, %s107
      %p109 = scmp.eq.s32.totalorder %s15, 0
      %p110 = por %p108, %p109
      %p111 = scmp.le.s32.totalorder 1, %s9
      %p112 = scmp.lt.s32.totalorder %s9, 3
      %p113 = pnand %p111, %p112
      %p114 = pneg %p113
      // Predicated region
      $region9: #{lenet_forward.3} parent=5 // pred_check
        _
      $region10: #{lenet_forward.3} parent=5 // pred_check_branch
        %116 = sbr.rel (%p113) target = $region12
      $region11: #{lenet_forward.3} parent=5 // pred_region
        %s117 = ssub.s32 %s9, 1
        // Predicated region
        $region13: #{lenet_forward.3} parent=11 // pred_check
          %p118 = pneg %p56
        $region14: #{lenet_forward.3} parent=11 // pred_check_branch
          %120 = sbr.rel (%p118) target = $region16
        $region15: #{lenet_forward.3} parent=11 // pred_region
          _
        $region16: #{lenet_forward.3} parent=11 // pred_fallthru
          _
        // Predicated region
        $region17: #{lenet_forward.3} parent=11 // pred_check
          %p121 = pneg %p77
        $region18: #{lenet_forward.3} parent=11 // pred_check_branch
          %123 = sbr.rel (%p121) target = $region20
        $region19: #{lenet_forward.3} parent=11 // pred_region
          _
        $region20: #{lenet_forward.3} parent=11 // pred_fallthru
          _
      $region12: #{lenet_forward.3} parent=5 // pred_fallthru
        _
      %p124 = scmp.lt.s32.totalorder %s9, 2
      // Predicated region
      $region21: #{lenet_forward.3} parent=5 // pred_check
        %p125 = pneg %p124
      $region22: #{lenet_forward.3} parent=5 // pred_check_branch
        %127 = sbr.rel (%p125) target = $region24
      $region23: #{lenet_forward.3} parent=5 // pred_region
        // Predicated region
        $region25: #{lenet_forward.3} parent=23 // pred_check
          %p128 = pneg %p29
        $region26: #{lenet_forward.3} parent=23 // pred_check_branch
          %130 = sbr.rel (%p128) target = $region28
        $region27: #{lenet_forward.3} parent=23 // pred_region
          %s131 = sand.u32 %s19, 1
          %s132 = sand.u32 %s19, 1
          %s133 = smul.addr %s132, 288
          %s134 = scalar_lea.vmem [#allocation2], %s133
          %s135 = smul.u32 18, %s9
          %s136 = smul.addr %s135, 4
          %s137 = scalar_lea.vmem %s0, %s136
          // Predicated region
          $region29: #{lenet_forward.3} parent=27 // pred_check
            _
          $region30: #{lenet_forward.3} parent=27 // pred_check_branch
            %139 = sbr.rel (0) target = $region32
          $region31: #{lenet_forward.3} parent=27 // pred_region
            // Predicated region
            $region33: #{lenet_forward.3} parent=31 // pred_check
              _
            $region34: #{lenet_forward.3} parent=31 // pred_check_branch
              %141 = sbr.rel target = $region36
            $region35: #{lenet_forward.3} parent=31 // pred_region
              // Predicated region
              $region48: #{lenet_forward.3} parent=35 // pred_check
                _
              $region49: #{lenet_forward.3} parent=35 // pred_check_branch
                %298 = sbr.rel (0) target = $region51
              $region50: #{lenet_forward.3} parent=35 // pred_region
                loop: start=0, step=1, limit=1
                $region52: #{lenet_forward.3} parent=50 // loop_pre_header
                  _
                $region53: #{lenet_forward.3} parent=50 // loop_header
                  %s300 = sphi 0, %s304
                  %p301 = scmp.ge.s32.totalorder %s300, 1
                  %s305 = sphi %s137, %s137
                  %s306 = sphi %s134, %s134
                $region54: #{lenet_forward.3} parent=50 // loop_header_branch
                  %303 = sbr.rel (%p301) target = $region58
                $region55: #{lenet_forward.3} parent=50 // loop_body
                  _
                $region56: #{lenet_forward.3} parent=50 // loop_footer
                  %s304 = sadd.s32 1, %s300
                $region57: #{lenet_forward.3} parent=50 // loop_footer_branch
                  %299 = sbr.rel target = $region53
                $region58: #{lenet_forward.3} parent=50 // loop_exit
                  _
                loop: start=0, step=1, limit=1
                $region59: #{lenet_forward.3} parent=50 // loop_pre_header
                  _
                $region60: #{lenet_forward.3} parent=50 // loop_header
                  %s309 = sphi 0, %s313
                  %p310 = scmp.ge.s32.totalorder %s309, 1
                  %s314 = sphi %s137, %s137
                  %s315 = sphi %s134, %s134
                $region61: #{lenet_forward.3} parent=50 // loop_header_branch
                  %312 = sbr.rel (%p310) target = $region65
                $region62: #{lenet_forward.3} parent=50 // loop_body
                  %v316 = vld [vmem:[%s314] sm:$0xf]
                  %317 = vst [vmem:[%s315] sm:$0xf] %v316
                  %v318 = vld [vmem:[%s314 + $0x4] sm:$0xf]
                  %319 = vst [vmem:[%s315 + $0x4] sm:$0xf] %v318
                  %v320 = vld [vmem:[%s314 + $0x8] sm:$0xf]
                  %321 = vst [vmem:[%s315 + $0x8] sm:$0xf] %v320
                  %v322 = vld [vmem:[%s314 + $0xc] sm:$0xf]
                  %323 = vst [vmem:[%s315 + $0xc] sm:$0xf] %v322
                  %v324 = vld [vmem:[%s314 + $0x10] sm:$0xf]
                  %325 = vst [vmem:[%s315 + $0x10] sm:$0xf] %v324
                  %v326 = vld [vmem:[%s314 + $0x14] sm:$0xf]
                  %327 = vst [vmem:[%s315 + $0x14] sm:$0xf] %v326
                  %v328 = vld [vmem:[%s314 + $0x18] sm:$0xf]
                  %329 = vst [vmem:[%s315 + $0x18] sm:$0xf] %v328
                  %v330 = vld [vmem:[%s314 + $0x1c] sm:$0xf]
                  %331 = vst [vmem:[%s315 + $0x1c] sm:$0xf] %v330
                  %v332 = vld [vmem:[%s314 + $0x20] sm:$0xf]
                  %333 = vst [vmem:[%s315 + $0x20] sm:$0xf] %v332
                  %v334 = vld [vmem:[%s314 + $0x24] sm:$0xf]
                  %335 = vst [vmem:[%s315 + $0x24] sm:$0xf] %v334
                  %v336 = vld [vmem:[%s314 + $0x28] sm:$0xf]
                  %337 = vst [vmem:[%s315 + $0x28] sm:$0xf] %v336
                  %v338 = vld [vmem:[%s314 + $0x2c] sm:$0xf]
                  %339 = vst [vmem:[%s315 + $0x2c] sm:$0xf] %v338
                  %v340 = vld [vmem:[%s314 + $0x30] sm:$0xf]
                  %341 = vst [vmem:[%s315 + $0x30] sm:$0xf] %v340
                  %v342 = vld [vmem:[%s314 + $0x34] sm:$0xf]
                  %343 = vst [vmem:[%s315 + $0x34] sm:$0xf] %v342
                  %v344 = vld [vmem:[%s314 + $0x38] sm:$0xf]
                  %345 = vst [vmem:[%s315 + $0x38] sm:$0xf] %v344
                  %v346 = vld [vmem:[%s314 + $0x3c] sm:$0xf]
                  %347 = vst [vmem:[%s315 + $0x3c] sm:$0xf] %v346
                  %v348 = vld [vmem:[%s314 + $0x40] sm:$0xf]
                  %349 = vst [vmem:[%s315 + $0x40] sm:$0xf] %v348
                  %v350 = vld [vmem:[%s314 + $0x44] sm:$0xf]
                  %351 = vst [vmem:[%s315 + $0x44] sm:$0xf] %v350
                  %v352 = vld [vmem:[%s314 + $0x90] sm:$0xf]
                  %353 = vst [vmem:[%s315 + $0x48] sm:$0xf] %v352
                  %v354 = vld [vmem:[%s314 + $0x94] sm:$0xf]
                  %355 = vst [vmem:[%s315 + $0x4c] sm:$0xf] %v354
                  %v356 = vld [vmem:[%s314 + $0x98] sm:$0xf]
                  %357 = vst [vmem:[%s315 + $0x50] sm:$0xf] %v356
                  %v358 = vld [vmem:[%s314 + $0x9c] sm:$0xf]
                  %359 = vst [vmem:[%s315 + $0x54] sm:$0xf] %v358
                  %v360 = vld [vmem:[%s314 + $0xa0] sm:$0xf]
                  %361 = vst [vmem:[%s315 + $0x58] sm:$0xf] %v360
                  %v362 = vld [vmem:[%s314 + $0xa4] sm:$0xf]
                  %363 = vst [vmem:[%s315 + $0x5c] sm:$0xf] %v362
                  %v364 = vld [vmem:[%s314 + $0xa8] sm:$0xf]
                  %365 = vst [vmem:[%s315 + $0x60] sm:$0xf] %v364
                  %v366 = vld [vmem:[%s314 + $0xac] sm:$0xf]
                  %367 = vst [vmem:[%s315 + $0x64] sm:$0xf] %v366
                  %v368 = vld [vmem:[%s314 + $0xb0] sm:$0xf]
                  %369 = vst [vmem:[%s315 + $0x68] sm:$0xf] %v368
                  %v370 = vld [vmem:[%s314 + $0xb4] sm:$0xf]
                  %371 = vst [vmem:[%s315 + $0x6c] sm:$0xf] %v370
                  %v372 = vld [vmem:[%s314 + $0xb8] sm:$0xf]
                  %373 = vst [vmem:[%s315 + $0x70] sm:$0xf] %v372
                  %v374 = vld [vmem:[%s314 + $0xbc] sm:$0xf]
                  %375 = vst [vmem:[%s315 + $0x74] sm:$0xf] %v374
                  %v376 = vld [vmem:[%s314 + $0xc0] sm:$0xf]
                  %377 = vst [vmem:[%s315 + $0x78] sm:$0xf] %v376
                  %v378 = vld [vmem:[%s314 + $0xc4] sm:$0xf]
                  %379 = vst [vmem:[%s315 + $0x7c] sm:$0xf] %v378
                  %v380 = vld [vmem:[%s314 + $0xc8] sm:$0xf]
                  %381 = vst [vmem:[%s315 + $0x80] sm:$0xf] %v380
                  %v382 = vld [vmem:[%s314 + $0xcc] sm:$0xf]
                  %383 = vst [vmem:[%s315 + $0x84] sm:$0xf] %v382
                  %v384 = vld [vmem:[%s314 + $0xd0] sm:$0xf]
                  %385 = vst [vmem:[%s315 + $0x88] sm:$0xf] %v384
                  %v386 = vld [vmem:[%s314 + $0xd4] sm:$0xf]
                  %387 = vst [vmem:[%s315 + $0x8c] sm:$0xf] %v386
                  %v388 = vld [vmem:[%s314 + $0x120] sm:$0xf]
                  %389 = vst [vmem:[%s315 + $0x90] sm:$0xf] %v388
                  %v390 = vld [vmem:[%s314 + $0x124] sm:$0xf]
                  %391 = vst [vmem:[%s315 + $0x94] sm:$0xf] %v390
                  %v392 = vld [vmem:[%s314 + $0x128] sm:$0xf]
                  %393 = vst [vmem:[%s315 + $0x98] sm:$0xf] %v392
                  %v394 = vld [vmem:[%s314 + $0x12c] sm:$0xf]
                  %395 = vst [vmem:[%s315 + $0x9c] sm:$0xf] %v394
                  %v396 = vld [vmem:[%s314 + $0x130] sm:$0xf]
                  %397 = vst [vmem:[%s315 + $0xa0] sm:$0xf] %v396
                  %v398 = vld [vmem:[%s314 + $0x134] sm:$0xf]
                  %399 = vst [vmem:[%s315 + $0xa4] sm:$0xf] %v398
                  %v400 = vld [vmem:[%s314 + $0x138] sm:$0xf]
                  %401 = vst [vmem:[%s315 + $0xa8] sm:$0xf] %v400
                  %v402 = vld [vmem:[%s314 + $0x13c] sm:$0xf]
                  %403 = vst [vmem:[%s315 + $0xac] sm:$0xf] %v402
                  %v404 = vld [vmem:[%s314 + $0x140] sm:$0xf]
                  %405 = vst [vmem:[%s315 + $0xb0] sm:$0xf] %v404
                  %v406 = vld [vmem:[%s314 + $0x144] sm:$0xf]
                  %407 = vst [vmem:[%s315 + $0xb4] sm:$0xf] %v406
                  %v408 = vld [vmem:[%s314 + $0x148] sm:$0xf]
                  %409 = vst [vmem:[%s315 + $0xb8] sm:$0xf] %v408
                  %v410 = vld [vmem:[%s314 + $0x14c] sm:$0xf]
                  %411 = vst [vmem:[%s315 + $0xbc] sm:$0xf] %v410
                  %v412 = vld [vmem:[%s314 + $0x150] sm:$0xf]
                  %413 = vst [vmem:[%s315 + $0xc0] sm:$0xf] %v412
                  %v414 = vld [vmem:[%s314 + $0x154] sm:$0xf]
                  %415 = vst [vmem:[%s315 + $0xc4] sm:$0xf] %v414
                  %v416 = vld [vmem:[%s314 + $0x158] sm:$0xf]
                  %417 = vst [vmem:[%s315 + $0xc8] sm:$0xf] %v416
                  %v418 = vld [vmem:[%s314 + $0x15c] sm:$0xf]
                  %419 = vst [vmem:[%s315 + $0xcc] sm:$0xf] %v418
                  %v420 = vld [vmem:[%s314 + $0x160] sm:$0xf]
                  %421 = vst [vmem:[%s315 + $0xd0] sm:$0xf] %v420
                  %v422 = vld [vmem:[%s314 + $0x164] sm:$0xf]
                  %423 = vst [vmem:[%s315 + $0xd4] sm:$0xf] %v422
                  %v424 = vld [vmem:[%s314 + $0x1b0] sm:$0xf]
                  %425 = vst [vmem:[%s315 + $0xd8] sm:$0xf] %v424
                  %v426 = vld [vmem:[%s314 + $0x1b4] sm:$0xf]
                  %427 = vst [vmem:[%s315 + $0xdc] sm:$0xf] %v426
                  %v428 = vld [vmem:[%s314 + $0x1b8] sm:$0xf]
                  %429 = vst [vmem:[%s315 + $0xe0] sm:$0xf] %v428
                  %v430 = vld [vmem:[%s314 + $0x1bc] sm:$0xf]
                  %431 = vst [vmem:[%s315 + $0xe4] sm:$0xf] %v430
                  %v432 = vld [vmem:[%s314 + $0x1c0] sm:$0xf]
                  %433 = vst [vmem:[%s315 + $0xe8] sm:$0xf] %v432
                  %v434 = vld [vmem:[%s314 + $0x1c4] sm:$0xf]
                  %435 = vst [vmem:[%s315 + $0xec] sm:$0xf] %v434
                  %v436 = vld [vmem:[%s314 + $0x1c8] sm:$0xf]
                  %437 = vst [vmem:[%s315 + $0xf0] sm:$0xf] %v436
                  %v438 = vld [vmem:[%s314 + $0x1cc] sm:$0xf]
                  %439 = vst [vmem:[%s315 + $0xf4] sm:$0xf] %v438
                  %v440 = vld [vmem:[%s314 + $0x1d0] sm:$0xf]
                  %441 = vst [vmem:[%s315 + $0xf8] sm:$0xf] %v440
                  %v442 = vld [vmem:[%s314 + $0x1d4] sm:$0xf]
                  %443 = vst [vmem:[%s315 + $0xfc] sm:$0xf] %v442
                  %v444 = vld [vmem:[%s314 + $0x1d8] sm:$0xf]
                  %445 = vst [vmem:[%s315 + $0x100] sm:$0xf] %v444
                  %v446 = vld [vmem:[%s314 + $0x1dc] sm:$0xf]
                  %447 = vst [vmem:[%s315 + $0x104] sm:$0xf] %v446
                  %v448 = vld [vmem:[%s314 + $0x1e0] sm:$0xf]
                  %449 = vst [vmem:[%s315 + $0x108] sm:$0xf] %v448
                  %v450 = vld [vmem:[%s314 + $0x1e4] sm:$0xf]
                  %451 = vst [vmem:[%s315 + $0x10c] sm:$0xf] %v450
                  %v452 = vld [vmem:[%s314 + $0x1e8] sm:$0xf]
                  %453 = vst [vmem:[%s315 + $0x110] sm:$0xf] %v452
                  %v454 = vld [vmem:[%s314 + $0x1ec] sm:$0xf]
                  %455 = vst [vmem:[%s315 + $0x114] sm:$0xf] %v454
                  %v456 = vld [vmem:[%s314 + $0x1f0] sm:$0xf]
                  %457 = vst [vmem:[%s315 + $0x118] sm:$0xf] %v456
                  %v458 = vld [vmem:[%s314 + $0x1f4] sm:$0xf]
                  %459 = vst [vmem:[%s315 + $0x11c] sm:$0xf] %v458
                $region63: #{lenet_forward.3} parent=50 // loop_footer
                  %s313 = sadd.s32 1, %s309
                $region64: #{lenet_forward.3} parent=50 // loop_footer_branch
                  %308 = sbr.rel target = $region60
                $region65: #{lenet_forward.3} parent=50 // loop_exit
                  _
              $region51: #{lenet_forward.3} parent=35 // pred_fallthru
                _
            $region36: #{lenet_forward.3} parent=31 // pred_fallthru
              _
            // Predicated region
            $region37: #{lenet_forward.3} parent=31 // pred_check
              _
            $region38: #{lenet_forward.3} parent=31 // pred_check_branch
              %143 = sbr.rel (0) target = $region40
            $region39: #{lenet_forward.3} parent=31 // pred_region
              loop: start=0, step=1, limit=1
              $region41: #{lenet_forward.3} parent=39 // loop_pre_header
                _
              $region42: #{lenet_forward.3} parent=39 // loop_header
                %s146 = sphi 0, %s150
                %p147 = scmp.ge.s32.totalorder %s146, 1
                %s151 = sphi %s137, %s137
                %s152 = sphi %s134, %s134
              $region43: #{lenet_forward.3} parent=39 // loop_header_branch
                %149 = sbr.rel (%p147) target = $region47
              $region44: #{lenet_forward.3} parent=39 // loop_body
                %v153 = vld [vmem:[%s151] sm:$0xf]
                %154 = vst [vmem:[%s152] sm:$0xf] %v153
                %v155 = vld [vmem:[%s151 + $0x4] sm:$0xf]
                %156 = vst [vmem:[%s152 + $0x4] sm:$0xf] %v155
                %v157 = vld [vmem:[%s151 + $0x8] sm:$0xf]
                %158 = vst [vmem:[%s152 + $0x8] sm:$0xf] %v157
                %v159 = vld [vmem:[%s151 + $0xc] sm:$0xf]
                %160 = vst [vmem:[%s152 + $0xc] sm:$0xf] %v159
                %v161 = vld [vmem:[%s151 + $0x10] sm:$0xf]
                %162 = vst [vmem:[%s152 + $0x10] sm:$0xf] %v161
                %v163 = vld [vmem:[%s151 + $0x14] sm:$0xf]
                %164 = vst [vmem:[%s152 + $0x14] sm:$0xf] %v163
                %v165 = vld [vmem:[%s151 + $0x18] sm:$0xf]
                %166 = vst [vmem:[%s152 + $0x18] sm:$0xf] %v165
                %v167 = vld [vmem:[%s151 + $0x1c] sm:$0xf]
                %168 = vst [vmem:[%s152 + $0x1c] sm:$0xf] %v167
                %v169 = vld [vmem:[%s151 + $0x20] sm:$0xf]
                %170 = vst [vmem:[%s152 + $0x20] sm:$0xf] %v169
                %v171 = vld [vmem:[%s151 + $0x24] sm:$0xf]
                %172 = vst [vmem:[%s152 + $0x24] sm:$0xf] %v171
                %v173 = vld [vmem:[%s151 + $0x28] sm:$0xf]
                %174 = vst [vmem:[%s152 + $0x28] sm:$0xf] %v173
                %v175 = vld [vmem:[%s151 + $0x2c] sm:$0xf]
                %176 = vst [vmem:[%s152 + $0x2c] sm:$0xf] %v175
                %v177 = vld [vmem:[%s151 + $0x30] sm:$0xf]
                %178 = vst [vmem:[%s152 + $0x30] sm:$0xf] %v177
                %v179 = vld [vmem:[%s151 + $0x34] sm:$0xf]
                %180 = vst [vmem:[%s152 + $0x34] sm:$0xf] %v179
                %v181 = vld [vmem:[%s151 + $0x38] sm:$0xf]
                %182 = vst [vmem:[%s152 + $0x38] sm:$0xf] %v181
                %v183 = vld [vmem:[%s151 + $0x3c] sm:$0xf]
                %184 = vst [vmem:[%s152 + $0x3c] sm:$0xf] %v183
                %v185 = vld [vmem:[%s151 + $0x40] sm:$0xf]
                %186 = vst [vmem:[%s152 + $0x40] sm:$0xf] %v185
                %v187 = vld [vmem:[%s151 + $0x44] sm:$0xf]
                %188 = vst [vmem:[%s152 + $0x44] sm:$0xf] %v187
                %v189 = vld [vmem:[%s151 + $0x90] sm:$0xf]
                %190 = vst [vmem:[%s152 + $0x48] sm:$0xf] %v189
                %v191 = vld [vmem:[%s151 + $0x94] sm:$0xf]
                %192 = vst [vmem:[%s152 + $0x4c] sm:$0xf] %v191
                %v193 = vld [vmem:[%s151 + $0x98] sm:$0xf]
                %194 = vst [vmem:[%s152 + $0x50] sm:$0xf] %v193
                %v195 = vld [vmem:[%s151 + $0x9c] sm:$0xf]
                %196 = vst [vmem:[%s152 + $0x54] sm:$0xf] %v195
                %v197 = vld [vmem:[%s151 + $0xa0] sm:$0xf]
                %198 = vst [vmem:[%s152 + $0x58] sm:$0xf] %v197
                %v199 = vld [vmem:[%s151 + $0xa4] sm:$0xf]
                %200 = vst [vmem:[%s152 + $0x5c] sm:$0xf] %v199
                %v201 = vld [vmem:[%s151 + $0xa8] sm:$0xf]
                %202 = vst [vmem:[%s152 + $0x60] sm:$0xf] %v201
                %v203 = vld [vmem:[%s151 + $0xac] sm:$0xf]
                %204 = vst [vmem:[%s152 + $0x64] sm:$0xf] %v203
                %v205 = vld [vmem:[%s151 + $0xb0] sm:$0xf]
                %206 = vst [vmem:[%s152 + $0x68] sm:$0xf] %v205
                %v207 = vld [vmem:[%s151 + $0xb4] sm:$0xf]
                %208 = vst [vmem:[%s152 + $0x6c] sm:$0xf] %v207
                %v209 = vld [vmem:[%s151 + $0xb8] sm:$0xf]
                %210 = vst [vmem:[%s152 + $0x70] sm:$0xf] %v209
                %v211 = vld [vmem:[%s151 + $0xbc] sm:$0xf]
                %212 = vst [vmem:[%s152 + $0x74] sm:$0xf] %v211
                %v213 = vld [vmem:[%s151 + $0xc0] sm:$0xf]
                %214 = vst [vmem:[%s152 + $0x78] sm:$0xf] %v213
                %v215 = vld [vmem:[%s151 + $0xc4] sm:$0xf]
                %216 = vst [vmem:[%s152 + $0x7c] sm:$0xf] %v215
                %v217 = vld [vmem:[%s151 + $0xc8] sm:$0xf]
                %218 = vst [vmem:[%s152 + $0x80] sm:$0xf] %v217
                %v219 = vld [vmem:[%s151 + $0xcc] sm:$0xf]
                %220 = vst [vmem:[%s152 + $0x84] sm:$0xf] %v219
                %v221 = vld [vmem:[%s151 + $0xd0] sm:$0xf]
                %222 = vst [vmem:[%s152 + $0x88] sm:$0xf] %v221
                %v223 = vld [vmem:[%s151 + $0xd4] sm:$0xf]
                %224 = vst [vmem:[%s152 + $0x8c] sm:$0xf] %v223
                %v225 = vld [vmem:[%s151 + $0x120] sm:$0xf]
                %226 = vst [vmem:[%s152 + $0x90] sm:$0xf] %v225
                %v227 = vld [vmem:[%s151 + $0x124] sm:$0xf]
                %228 = vst [vmem:[%s152 + $0x94] sm:$0xf] %v227
                %v229 = vld [vmem:[%s151 + $0x128] sm:$0xf]
                %230 = vst [vmem:[%s152 + $0x98] sm:$0xf] %v229
                %v231 = vld [vmem:[%s151 + $0x12c] sm:$0xf]
                %232 = vst [vmem:[%s152 + $0x9c] sm:$0xf] %v231
                %v233 = vld [vmem:[%s151 + $0x130] sm:$0xf]
                %234 = vst [vmem:[%s152 + $0xa0] sm:$0xf] %v233
                %v235 = vld [vmem:[%s151 + $0x134] sm:$0xf]
                %236 = vst [vmem:[%s152 + $0xa4] sm:$0xf] %v235
                %v237 = vld [vmem:[%s151 + $0x138] sm:$0xf]
                %238 = vst [vmem:[%s152 + $0xa8] sm:$0xf] %v237
                %v239 = vld [vmem:[%s151 + $0x13c] sm:$0xf]
                %240 = vst [vmem:[%s152 + $0xac] sm:$0xf] %v239
                %v241 = vld [vmem:[%s151 + $0x140] sm:$0xf]
                %242 = vst [vmem:[%s152 + $0xb0] sm:$0xf] %v241
                %v243 = vld [vmem:[%s151 + $0x144] sm:$0xf]
                %244 = vst [vmem:[%s152 + $0xb4] sm:$0xf] %v243
                %v245 = vld [vmem:[%s151 + $0x148] sm:$0xf]
                %246 = vst [vmem:[%s152 + $0xb8] sm:$0xf] %v245
                %v247 = vld [vmem:[%s151 + $0x14c] sm:$0xf]
                %248 = vst [vmem:[%s152 + $0xbc] sm:$0xf] %v247
                %v249 = vld [vmem:[%s151 + $0x150] sm:$0xf]
                %250 = vst [vmem:[%s152 + $0xc0] sm:$0xf] %v249
                %v251 = vld [vmem:[%s151 + $0x154] sm:$0xf]
                %252 = vst [vmem:[%s152 + $0xc4] sm:$0xf] %v251
                %v253 = vld [vmem:[%s151 + $0x158] sm:$0xf]
                %254 = vst [vmem:[%s152 + $0xc8] sm:$0xf] %v253
                %v255 = vld [vmem:[%s151 + $0x15c] sm:$0xf]
                %256 = vst [vmem:[%s152 + $0xcc] sm:$0xf] %v255
                %v257 = vld [vmem:[%s151 + $0x160] sm:$0xf]
                %258 = vst [vmem:[%s152 + $0xd0] sm:$0xf] %v257
                %v259 = vld [vmem:[%s151 + $0x164] sm:$0xf]
                %260 = vst [vmem:[%s152 + $0xd4] sm:$0xf] %v259
                %v261 = vld [vmem:[%s151 + $0x1b0] sm:$0xf]
                %262 = vst [vmem:[%s152 + $0xd8] sm:$0xf] %v261
                %v263 = vld [vmem:[%s151 + $0x1b4] sm:$0xf]
                %264 = vst [vmem:[%s152 + $0xdc] sm:$0xf] %v263
                %v265 = vld [vmem:[%s151 + $0x1b8] sm:$0xf]
                %266 = vst [vmem:[%s152 + $0xe0] sm:$0xf] %v265
                %v267 = vld [vmem:[%s151 + $0x1bc] sm:$0xf]
                %268 = vst [vmem:[%s152 + $0xe4] sm:$0xf] %v267
                %v269 = vld [vmem:[%s151 + $0x1c0] sm:$0xf]
                %270 = vst [vmem:[%s152 + $0xe8] sm:$0xf] %v269
                %v271 = vld [vmem:[%s151 + $0x1c4] sm:$0xf]
                %272 = vst [vmem:[%s152 + $0xec] sm:$0xf] %v271
                %v273 = vld [vmem:[%s151 + $0x1c8] sm:$0xf]
                %274 = vst [vmem:[%s152 + $0xf0] sm:$0xf] %v273
                %v275 = vld [vmem:[%s151 + $0x1cc] sm:$0xf]
                %276 = vst [vmem:[%s152 + $0xf4] sm:$0xf] %v275
                %v277 = vld [vmem:[%s151 + $0x1d0] sm:$0xf]
                %278 = vst [vmem:[%s152 + $0xf8] sm:$0xf] %v277
                %v279 = vld [vmem:[%s151 + $0x1d4] sm:$0xf]
                %280 = vst [vmem:[%s152 + $0xfc] sm:$0xf] %v279
                %v281 = vld [vmem:[%s151 + $0x1d8] sm:$0xf]
                %282 = vst [vmem:[%s152 + $0x100] sm:$0xf] %v281
                %v283 = vld [vmem:[%s151 + $0x1dc] sm:$0xf]
                %284 = vst [vmem:[%s152 + $0x104] sm:$0xf] %v283
                %v285 = vld [vmem:[%s151 + $0x1e0] sm:$0xf]
                %286 = vst [vmem:[%s152 + $0x108] sm:$0xf] %v285
                %v287 = vld [vmem:[%s151 + $0x1e4] sm:$0xf]
                %288 = vst [vmem:[%s152 + $0x10c] sm:$0xf] %v287
                %v289 = vld [vmem:[%s151 + $0x1e8] sm:$0xf]
                %290 = vst [vmem:[%s152 + $0x110] sm:$0xf] %v289
                %v291 = vld [vmem:[%s151 + $0x1ec] sm:$0xf]
                %292 = vst [vmem:[%s152 + $0x114] sm:$0xf] %v291
                %v293 = vld [vmem:[%s151 + $0x1f0] sm:$0xf]
                %294 = vst [vmem:[%s152 + $0x118] sm:$0xf] %v293
                %v295 = vld [vmem:[%s151 + $0x1f4] sm:$0xf]
                %296 = vst [vmem:[%s152 + $0x11c] sm:$0xf] %v295
              $region45: #{lenet_forward.3} parent=39 // loop_footer
                %s150 = sadd.s32 1, %s146
              $region46: #{lenet_forward.3} parent=39 // loop_footer_branch
                %145 = sbr.rel target = $region42
              $region47: #{lenet_forward.3} parent=39 // loop_exit
                _
            $region40: #{lenet_forward.3} parent=31 // pred_fallthru
              _
          $region32: #{lenet_forward.3} parent=27 // pred_fallthru
            _
          %460 = vnop
        $region28: #{lenet_forward.3} parent=23 // pred_fallthru
          _
      $region24: #{lenet_forward.3} parent=5 // pred_fallthru
        _
      %p461 = scmp.le.s32.totalorder 1, %s9
      %p462 = scmp.lt.s32.totalorder %s9, 3
      %p463 = pnand %p461, %p462
      %p464 = pneg %p463
      // Predicated region
      $region66: #{lenet_forward.3} parent=5 // pred_check
        _
      $region67: #{lenet_forward.3} parent=5 // pred_check_branch
        %466 = sbr.rel (%p463) target = $region69
      $region68: #{lenet_forward.3} parent=5 // pred_region
        %s467 = ssub.s32 %s9, 1
        %s468 = sand.u32 %s22, 1
        %s469 = sand.u32 %s22, 1
        %s470 = smul.addr %s469, 288
        %s471 = scalar_lea.vmem [#allocation2], %s470
        // Predicated region
        $region70: #{lenet_forward.3} parent=68 // pred_check
          %p472 = pneg %p35
        $region71: #{lenet_forward.3} parent=68 // pred_check_branch
          %474 = sbr.rel (%p472) target = $region73
        $region72: #{lenet_forward.3} parent=68 // pred_region
          _
        $region73: #{lenet_forward.3} parent=68 // pred_fallthru
          _
        %s475 = sand.u32 %s22, 1
        %s476 = sand.u32 %s22, 1
        %s477 = smul.addr %s476, 288
        %s478 = scalar_lea.vmem [#allocation2], %s477
        %p479 = pneg %p35
        %p480 = pneg %p32
        %p481 = pneg %p56
        %p482 = pneg %p53
        %p483 = pneg %p77
        %p484 = pneg %p74
        %p485 = pneg %p103
        %p486 = pneg %p100
        %s487 = smul.u32 18, %s14
        %p488 = scmp.lt.s32.totalorder %s487, 35
        %s489 = scalar_select %p488, %s487, 35
        %s490 = smul.addr %s489, 4
        %s491 = scalar_lea.vmem %s3, %s490
        %s492 = smul.u32 18, %s14
        %s493 = smul.u32 18, %s14
        %p494 = scmp.lt.s32.totalorder %s493, 35
        %s495 = scalar_select %p494, %s493, 35
        %s496 = smul.addr %s495, 4
        %s497 = scalar_lea.vmem %s3, %s496
        %s498 = smul.u32 18, %s14
        %v500 = vld [vmem:[%s471] sm:$0xf]
        %v501 = vld [vmem:[%s471 + $0x4] sm:$0xf]
        %v502 = vld [vmem:[%s471 + $0x8] sm:$0xf]
        %v503 = vld [vmem:[%s471 + $0xc] sm:$0xf]
        %v504 = vld [vmem:[%s471 + $0x10] sm:$0xf]
        %v505 = vld [vmem:[%s471 + $0x14] sm:$0xf]
        %v506 = vld [vmem:[%s471 + $0x18] sm:$0xf]
        %v507 = vld [vmem:[%s471 + $0x1c] sm:$0xf]
        %v508 = vld [vmem:[%s471 + $0x20] sm:$0xf]
        %v509 = vld [vmem:[%s471 + $0x24] sm:$0xf]
        %v510 = vld [vmem:[%s471 + $0x28] sm:$0xf]
        %v511 = vld [vmem:[%s471 + $0x2c] sm:$0xf]
        %v512 = vld [vmem:[%s471 + $0x30] sm:$0xf]
        %v513 = vld [vmem:[%s471 + $0x34] sm:$0xf]
        %v514 = vld [vmem:[%s471 + $0x38] sm:$0xf]
        %v515 = vld [vmem:[%s471 + $0x3c] sm:$0xf]
        %v516 = vld [vmem:[%s471 + $0x40] sm:$0xf]
        %v517 = vld [vmem:[%s471 + $0x44] sm:$0xf]
        %v518 = vld [vmem:[%s471 + $0x48] sm:$0xf]
        %v519 = vld [vmem:[%s471 + $0x4c] sm:$0xf]
        %v520 = vld [vmem:[%s471 + $0x50] sm:$0xf]
        %v521 = vld [vmem:[%s471 + $0x54] sm:$0xf]
        %v522 = vld [vmem:[%s471 + $0x58] sm:$0xf]
        %v523 = vld [vmem:[%s471 + $0x5c] sm:$0xf]
        %v524 = vld [vmem:[%s471 + $0x60] sm:$0xf]
        %v525 = vld [vmem:[%s471 + $0x64] sm:$0xf]
        %v526 = vld [vmem:[%s471 + $0x68] sm:$0xf]
        %v527 = vld [vmem:[%s471 + $0x6c] sm:$0xf]
        %v528 = vld [vmem:[%s471 + $0x70] sm:$0xf]
        %v529 = vld [vmem:[%s471 + $0x74] sm:$0xf]
        %v530 = vld [vmem:[%s471 + $0x78] sm:$0xf]
        %v531 = vld [vmem:[%s471 + $0x7c] sm:$0xf]
        %v532 = vld [vmem:[%s471 + $0x80] sm:$0xf]
        %v533 = vld [vmem:[%s471 + $0x84] sm:$0xf]
        %v534 = vld [vmem:[%s471 + $0x88] sm:$0xf]
        %v535 = vld [vmem:[%s471 + $0x8c] sm:$0xf]
        %v536 = vld [vmem:[%s471 + $0x90] sm:$0xf]
        %v537 = vld [vmem:[%s471 + $0x94] sm:$0xf]
        %v538 = vld [vmem:[%s471 + $0x98] sm:$0xf]
        %v539 = vld [vmem:[%s471 + $0x9c] sm:$0xf]
        %v540 = vld [vmem:[%s471 + $0xa0] sm:$0xf]
        %v541 = vld [vmem:[%s471 + $0xa4] sm:$0xf]
        %v542 = vld [vmem:[%s471 + $0xa8] sm:$0xf]
        %v543 = vld [vmem:[%s471 + $0xac] sm:$0xf]
        %v544 = vld [vmem:[%s471 + $0xb0] sm:$0xf]
        %v545 = vld [vmem:[%s471 + $0xb4] sm:$0xf]
        %v546 = vld [vmem:[%s471 + $0xb8] sm:$0xf]
        %v547 = vld [vmem:[%s471 + $0xbc] sm:$0xf]
        %v548 = vld [vmem:[%s471 + $0xc0] sm:$0xf]
        %v549 = vld [vmem:[%s471 + $0xc4] sm:$0xf]
        %v550 = vld [vmem:[%s471 + $0xc8] sm:$0xf]
        %v551 = vld [vmem:[%s471 + $0xcc] sm:$0xf]
        %v552 = vld [vmem:[%s471 + $0xd0] sm:$0xf]
        %v553 = vld [vmem:[%s471 + $0xd4] sm:$0xf]
        %v554 = vld [vmem:[%s471 + $0xd8] sm:$0xf]
        %v555 = vld [vmem:[%s471 + $0xdc] sm:$0xf]
        %v556 = vld [vmem:[%s471 + $0xe0] sm:$0xf]
        %v557 = vld [vmem:[%s471 + $0xe4] sm:$0xf]
        %v558 = vld [vmem:[%s471 + $0xe8] sm:$0xf]
        %v559 = vld [vmem:[%s471 + $0xec] sm:$0xf]
        %v560 = vld [vmem:[%s471 + $0xf0] sm:$0xf]
        %v561 = vld [vmem:[%s471 + $0xf4] sm:$0xf]
        %v562 = vld [vmem:[%s471 + $0xf8] sm:$0xf]
        %v563 = vld [vmem:[%s471 + $0xfc] sm:$0xf]
        %v564 = vld [vmem:[%s471 + $0x100] sm:$0xf]
        %v565 = vld [vmem:[%s471 + $0x104] sm:$0xf]
        %v566 = vld [vmem:[%s471 + $0x108] sm:$0xf]
        %v567 = vld [vmem:[%s471 + $0x10c] sm:$0xf]
        %v568 = vld [vmem:[%s471 + $0x110] sm:$0xf]
        %v569 = vld [vmem:[%s471 + $0x114] sm:$0xf]
        %v570 = vld [vmem:[%s471 + $0x118] sm:$0xf]
        %v571 = vld [vmem:[%s471 + $0x11c] sm:$0xf]
        %v572 = vld [vmem:[%s1] sm:$0xf]
        %v573 = vld [vmem:[%s1 + $0x4] sm:$0xf]
        %v574 = vld [vmem:[%s1 + $0x8] sm:$0xf]
        %v575 = vld [vmem:[%s1 + $0xc] sm:$0x1]
        %v648 = vunpack.c.l.b16 %v500
        %v649 = vunpack.c.l.b16 %v501
        %v650 = vunpack.c.l.b16 %v502
        %v651 = vunpack.c.l.b16 %v503
        %v652 = vunpack.c.l.b16 %v504
        %v653 = vunpack.c.l.b16 %v505
        %v654 = vunpack.c.l.b16 %v506
        %v655 = vunpack.c.l.b16 %v507
        %v656 = vunpack.c.l.b16 %v508
        %v657 = vunpack.c.l.b16 %v509
        %v658 = vunpack.c.l.b16 %v510
        %v659 = vunpack.c.l.b16 %v511
        %v660 = vunpack.c.l.b16 %v512
        %v661 = vunpack.c.l.b16 %v513
        %v662 = vunpack.c.l.b16 %v514
        %v663 = vunpack.c.l.b16 %v515
        %v664 = vunpack.c.l.b16 %v516
        %v665 = vunpack.c.l.b16 %v517
        %v666 = vunpack.c.l.b16 %v518
        %v667 = vunpack.c.l.b16 %v519
        %v668 = vunpack.c.l.b16 %v520
        %v669 = vunpack.c.l.b16 %v521
        %v670 = vunpack.c.l.b16 %v522
        %v671 = vunpack.c.l.b16 %v523
        %v672 = vunpack.c.l.b16 %v524
        %v673 = vunpack.c.l.b16 %v525
        %v674 = vunpack.c.l.b16 %v526
        %v675 = vunpack.c.l.b16 %v527
        %v676 = vunpack.c.l.b16 %v528
        %v677 = vunpack.c.l.b16 %v529
        %v678 = vunpack.c.l.b16 %v530
        %v679 = vunpack.c.l.b16 %v531
        %v680 = vunpack.c.l.b16 %v532
        %v681 = vunpack.c.l.b16 %v533
        %v682 = vunpack.c.l.b16 %v534
        %v683 = vunpack.c.l.b16 %v535
        %v684 = vunpack.c.l.b16 %v536
        %v685 = vunpack.c.l.b16 %v537
        %v686 = vunpack.c.l.b16 %v538
        %v687 = vunpack.c.l.b16 %v539
        %v688 = vunpack.c.l.b16 %v540
        %v689 = vunpack.c.l.b16 %v541
        %v690 = vunpack.c.l.b16 %v542
        %v691 = vunpack.c.l.b16 %v543
        %v692 = vunpack.c.l.b16 %v544
        %v693 = vunpack.c.l.b16 %v545
        %v694 = vunpack.c.l.b16 %v546
        %v695 = vunpack.c.l.b16 %v547
        %v696 = vunpack.c.l.b16 %v548
        %v697 = vunpack.c.l.b16 %v549
        %v698 = vunpack.c.l.b16 %v550
        %v699 = vunpack.c.l.b16 %v551
        %v700 = vunpack.c.l.b16 %v552
        %v701 = vunpack.c.l.b16 %v553
        %v702 = vunpack.c.l.b16 %v554
        %v703 = vunpack.c.l.b16 %v555
        %v704 = vunpack.c.l.b16 %v556
        %v705 = vunpack.c.l.b16 %v557
        %v706 = vunpack.c.l.b16 %v558
        %v707 = vunpack.c.l.b16 %v559
        %v708 = vunpack.c.l.b16 %v560
        %v709 = vunpack.c.l.b16 %v561
        %v710 = vunpack.c.l.b16 %v562
        %v711 = vunpack.c.l.b16 %v563
        %v712 = vunpack.c.l.b16 %v564
        %v713 = vunpack.c.l.b16 %v565
        %v714 = vunpack.c.l.b16 %v566
        %v715 = vunpack.c.l.b16 %v567
        %v716 = vunpack.c.l.b16 %v568
        %v717 = vunpack.c.l.b16 %v569
        %v718 = vunpack.c.l.b16 %v570
        %v719 = vunpack.c.l.b16 %v571
        %v720 = vpack.c.b16 %v649, %v648
        %v721 = vpack.c.b16 %v651, %v650
        %v722 = vpack.c.b16 %v653, %v652
        %v723 = vpack.c.b16 %v655, %v654
        %v724 = vpack.c.b16 %v657, %v656
        %v725 = vpack.c.b16 %v659, %v658
        %v726 = vpack.c.b16 %v661, %v660
        %v727 = vpack.c.b16 %v663, %v662
        %v728 = vpack.c.b16 %v665, %v664
        %v729 = vpack.c.b16 %v667, %v666
        %v730 = vpack.c.b16 %v669, %v668
        %v731 = vpack.c.b16 %v671, %v670
        %v732 = vpack.c.b16 %v673, %v672
        %v733 = vpack.c.b16 %v675, %v674
        %v734 = vpack.c.b16 %v677, %v676
        %v735 = vpack.c.b16 %v679, %v678
        %v736 = vpack.c.b16 %v681, %v680
        %v737 = vpack.c.b16 %v683, %v682
        %v738 = vpack.c.b16 %v685, %v684
        %v739 = vpack.c.b16 %v687, %v686
        %v740 = vpack.c.b16 %v689, %v688
        %v741 = vpack.c.b16 %v691, %v690
        %v742 = vpack.c.b16 %v693, %v692
        %v743 = vpack.c.b16 %v695, %v694
        %v744 = vpack.c.b16 %v697, %v696
        %v745 = vpack.c.b16 %v699, %v698
        %v746 = vpack.c.b16 %v701, %v700
        %v747 = vpack.c.b16 %v703, %v702
        %v748 = vpack.c.b16 %v705, %v704
        %v749 = vpack.c.b16 %v707, %v706
        %v750 = vpack.c.b16 %v709, %v708
        %v751 = vpack.c.b16 %v711, %v710
        %v752 = vpack.c.b16 %v713, %v712
        %v753 = vpack.c.b16 %v715, %v714
        %v754 = vpack.c.b16 %v717, %v716
        %v755 = vpack.c.b16 %v719, %v718
        %v760 = vunpack.c.l.b16 %v572
        %v761 = vunpack.c.l.b16 %v573
        %v762 = vunpack.c.l.b16 %v574
        %v763 = vunpack.c.l.b16 %v575
        %v764 = vpack.c.b16 %v761, %v760
        %v765 = vpack.c.b16 %v763, %v762
        %vm767 = vcmask 203776
        %v769 = vsel %vm767, %v720, 0
        %v772 = vsel %vm767, %v721, 0
        %v775 = vsel %vm767, %v722, 0
        %v778 = vsel %vm767, %v723, 0
        %v781 = vsel %vm767, %v724, 0
        %v784 = vsel %vm767, %v725, 0
        %v787 = vsel %vm767, %v726, 0
        %v790 = vsel %vm767, %v727, 0
        %v793 = vsel %vm767, %v728, 0
        %v796 = vsel %vm767, %v729, 0
        %v799 = vsel %vm767, %v730, 0
        %v802 = vsel %vm767, %v731, 0
        %v805 = vsel %vm767, %v732, 0
        %v808 = vsel %vm767, %v733, 0
        %v811 = vsel %vm767, %v734, 0
        %v814 = vsel %vm767, %v735, 0
        %v817 = vsel %vm767, %v736, 0
        %v820 = vsel %vm767, %v737, 0
        %v823 = vsel %vm767, %v738, 0
        %v826 = vsel %vm767, %v739, 0
        %v829 = vsel %vm767, %v740, 0
        %v832 = vsel %vm767, %v741, 0
        %v835 = vsel %vm767, %v742, 0
        %v838 = vsel %vm767, %v743, 0
        %v841 = vsel %vm767, %v744, 0
        %v844 = vsel %vm767, %v745, 0
        %v847 = vsel %vm767, %v746, 0
        %v850 = vsel %vm767, %v747, 0
        %v853 = vsel %vm767, %v748, 0
        %v856 = vsel %vm767, %v749, 0
        %v859 = vsel %vm767, %v750, 0
        %v862 = vsel %vm767, %v751, 0
        %v865 = vsel %vm767, %v752, 0
        %v868 = vsel %vm767, %v753, 0
        %v871 = vsel %vm767, %v754, 0
        %v874 = vsel %vm767, %v755, 0
        %vm876 = vcmask 1043456
        %vm877 = vcmask 1044480
        %v878 = vsel %vm876, 4294967295, 65535
        %v879 = vsel %vm877, %v878, 0
        %v881 = vand.u32 %v765, %v879
        %883 = vmatprep.subr.bf16.mxu0 0
        %884 = vmatpush1.bf16.msra.mxu0 %v764
        %885 = vmatprep.subr.bf16.mxu0 0
        %886 = vmatpush1.bf16.msra.mxu0 %v881
        %887 = vmatprep.subr.bf16.mxu0 0
        %888 = vmatpush1.bf16.msra.mxu0 0
        %889 = vmatprep.subr.bf16.mxu0 0
        %890 = vmatpush1.bf16.msra.mxu0 0
        %891 = vmatprep.subr.bf16.mxu0 0
        %892 = vmatpush1.bf16.msra.mxu0 0
        %893 = vmatprep.subr.bf16.mxu0 0
        %894 = vmatpush1.bf16.msra.mxu0 0
        %895 = vmatprep.subr.bf16.mxu0 0
        %896 = vmatpush1.bf16.msra.mxu0 0
        %897 = vmatprep.subr.bf16.mxu0 0
        %898 = vmatpush1.bf16.msra.mxu0 0
        %899 = vmatprep.subr.bf16.mxu0 0
        %900 = vmatpush1.bf16.msra.mxu0 0
        %901 = vmatprep.subr.bf16.mxu0 0
        %902 = vmatpush1.bf16.msra.mxu0 0
        %903 = vmatprep.subr.bf16.mxu0 0
        %904 = vmatpush1.bf16.msra.mxu0 0
        %905 = vmatprep.subr.bf16.mxu0 0
        %906 = vmatpush1.bf16.msra.mxu0 0
        %907 = vmatprep.subr.bf16.mxu0 0
        %908 = vmatpush1.bf16.msra.mxu0 0
        %909 = vmatprep.subr.bf16.mxu0 0
        %910 = vmatpush1.bf16.msra.mxu0 0
        %911 = vmatprep.subr.bf16.mxu0 0
        %912 = vmatpush1.bf16.msra.mxu0 0
        %913 = vmatprep.subr.bf16.mxu0 0
        %914 = vmatpush1.bf16.msra.mxu0 0
        %915 = vmatprep.mubr.bf16.mxu0 0
        %916 = vmatmul.mubr.bf16.gmra.mrb[0].mxu0 %v769
        %v917 = vpop.f32.mrb[0].mxu0
        %v918 = vadd.f32 0.0, %v917
        %v919 = vpop.f32.mrb[0].mxu0
        %v920 = vpop.f32.mrb[0].mxu0
        %v921 = vadd.f32 0.0, %v920
        %v922 = vpop.f32.mrb[0].mxu0
        %923 = vmatprep.mubr.bf16.mxu0 0
        %924 = vmatmul.mubr.bf16.gmra.mrb[0].mxu0 %v772
        %v925 = vpop.f32.mrb[0].mxu0
        %v926 = vadd.f32 0.0, %v925
        %v927 = vpop.f32.mrb[0].mxu0
        %v928 = vpop.f32.mrb[0].mxu0
        %v929 = vadd.f32 0.0, %v928
        %v930 = vpop.f32.mrb[0].mxu0
        %931 = vmatprep.mubr.bf16.mxu0 0
        %932 = vmatmul.mubr.bf16.gmra.mrb[0].mxu0 %v775
        %v933 = vpop.f32.mrb[0].mxu0
        %v934 = vadd.f32 0.0, %v933
        %v935 = vpop.f32.mrb[0].mxu0
        %v936 = vpop.f32.mrb[0].mxu0
        %v937 = vadd.f32 0.0, %v936
        %v938 = vpop.f32.mrb[0].mxu0
        %939 = vmatprep.mubr.bf16.mxu0 0
        %940 = vmatmul.mubr.bf16.gmra.mrb[0].mxu0 %v778
        %v941 = vpop.f32.mrb[0].mxu0
        %v942 = vadd.f32 0.0, %v941
        %v943 = vpop.f32.mrb[0].mxu0
        %v944 = vpop.f32.mrb[0].mxu0
        %v945 = vadd.f32 0.0, %v944
        %v946 = vpop.f32.mrb[0].mxu0
        %947 = vmatprep.mubr.bf16.mxu0 0
        %948 = vmatmul.mubr.bf16.gmra.mrb[0].mxu0 %v781
        %v949 = vpop.f32.mrb[0].mxu0
        %v950 = vadd.f32 0.0, %v949
        %v951 = vpop.f32.mrb[0].mxu0
        %v952 = vpop.f32.mrb[0].mxu0
        %v953 = vadd.f32 0.0, %v952
        %v954 = vpop.f32.mrb[0].mxu0
        %955 = vmatprep.mubr.bf16.mxu0 0
        %956 = vmatmul.mubr.bf16.gmra.mrb[0].mxu0 %v784
        %v957 = vpop.f32.mrb[0].mxu0
        %v958 = vadd.f32 0.0, %v957
        %v959 = vpop.f32.mrb[0].mxu0
        %v960 = vpop.f32.mrb[0].mxu0
        %v961 = vadd.f32 0.0, %v960
        %v962 = vpop.f32.mrb[0].mxu0
        %963 = vmatprep.mubr.bf16.mxu0 0
        %964 = vmatmul.mubr.bf16.gmra.mrb[0].mxu0 %v787
        %v965 = vpop.f32.mrb[0].mxu0
        %v966 = vadd.f32 0.0, %v965
        %v967 = vpop.f32.mrb[0].mxu0
        %v968 = vpop.f32.mrb[0].mxu0
        %v969 = vadd.f32 0.0, %v968
        %v970 = vpop.f32.mrb[0].mxu0
        %971 = vmatprep.mubr.bf16.mxu0 0
        %972 = vmatmul.mubr.bf16.gmra.mrb[0].mxu0 %v790
        %v973 = vpop.f32.mrb[0].mxu0
        %v974 = vadd.f32 0.0, %v973
        %v975 = vpop.f32.mrb[0].mxu0
        %v976 = vpop.f32.mrb[0].mxu0
        %v977 = vadd.f32 0.0, %v976
        %v978 = vpop.f32.mrb[0].mxu0
        %979 = vmatprep.mubr.bf16.mxu0 0
        %980 = vmatmul.mubr.bf16.gmra.mrb[0].mxu0 %v793
        %v981 = vpop.f32.mrb[0].mxu0
        %v982 = vadd.f32 0.0, %v981
        %v983 = vpop.f32.mrb[0].mxu0
        %v984 = vpop.f32.mrb[0].mxu0
        %v985 = vadd.f32 0.0, %v984
        %v986 = vpop.f32.mrb[0].mxu0
        %987 = vmatprep.mubr.bf16.mxu0 0
        %988 = vmatmul.mubr.bf16.gmra.mrb[0].mxu0 %v796
        %v989 = vpop.f32.mrb[0].mxu0
        %v990 = vadd.f32 0.0, %v989
        %v991 = vpop.f32.mrb[0].mxu0
        %v992 = vpop.f32.mrb[0].mxu0
        %v993 = vadd.f32 0.0, %v992
        %v994 = vpop.f32.mrb[0].mxu0
        %995 = vmatprep.mubr.bf16.mxu0 0
        %996 = vmatmul.mubr.bf16.gmra.mrb[0].mxu0 %v799
        %v997 = vpop.f32.mrb[0].mxu0
        %v998 = vadd.f32 0.0, %v997
        %v999 = vpop.f32.mrb[0].mxu0
        %v1000 = vpop.f32.mrb[0].mxu0
        %v1001 = vadd.f32 0.0, %v1000
        %v1002 = vpop.f32.mrb[0].mxu0
        %1003 = vmatprep.mubr.bf16.mxu0 0
        %1004 = vmatmul.mubr.bf16.gmra.mrb[0].mxu0 %v802
        %v1005 = vpop.f32.mrb[0].mxu0
        %v1006 = vadd.f32 0.0, %v1005
        %v1007 = vpop.f32.mrb[0].mxu0
        %v1008 = vpop.f32.mrb[0].mxu0
        %v1009 = vadd.f32 0.0, %v1008
        %v1010 = vpop.f32.mrb[0].mxu0
        %1011 = vmatprep.mubr.bf16.mxu0 0
        %1012 = vmatmul.mubr.bf16.gmra.mrb[0].mxu0 %v805
        %v1013 = vpop.f32.mrb[0].mxu0
        %v1014 = vadd.f32 0.0, %v1013
        %v1015 = vpop.f32.mrb[0].mxu0
        %v1016 = vpop.f32.mrb[0].mxu0
        %v1017 = vadd.f32 0.0, %v1016
        %v1018 = vpop.f32.mrb[0].mxu0
        %1019 = vmatprep.mubr.bf16.mxu0 0
        %1020 = vmatmul.mubr.bf16.gmra.mrb[0].mxu0 %v808
        %v1021 = vpop.f32.mrb[0].mxu0
        %v1022 = vadd.f32 0.0, %v1021
        %v1023 = vpop.f32.mrb[0].mxu0
        %v1024 = vpop.f32.mrb[0].mxu0
        %v1025 = vadd.f32 0.0, %v1024
        %v1026 = vpop.f32.mrb[0].mxu0
        %1027 = vmatprep.mubr.bf16.mxu0 0
        %1028 = vmatmul.mubr.bf16.gmra.mrb[0].mxu0 %v811
        %v1029 = vpop.f32.mrb[0].mxu0
        %v1030 = vadd.f32 0.0, %v1029
        %v1031 = vpop.f32.mrb[0].mxu0
        %v1032 = vpop.f32.mrb[0].mxu0
        %v1033 = vadd.f32 0.0, %v1032
        %v1034 = vpop.f32.mrb[0].mxu0
        %1035 = vmatprep.mubr.bf16.mxu0 0
        %1036 = vmatmul.mubr.bf16.gmra.mrb[0].mxu0 %v814
        %v1037 = vpop.f32.mrb[0].mxu0
        %v1038 = vadd.f32 0.0, %v1037
        %v1039 = vpop.f32.mrb[0].mxu0
        %v1040 = vpop.f32.mrb[0].mxu0
        %v1041 = vadd.f32 0.0, %v1040
        %v1042 = vpop.f32.mrb[0].mxu0
        %1043 = vmatprep.mubr.bf16.mxu0 0
        %1044 = vmatmul.mubr.bf16.gmra.mrb[0].mxu0 %v817
        %v1045 = vpop.f32.mrb[0].mxu0
        %v1046 = vadd.f32 0.0, %v1045
        %v1047 = vpop.f32.mrb[0].mxu0
        %v1048 = vpop.f32.mrb[0].mxu0
        %v1049 = vadd.f32 0.0, %v1048
        %v1050 = vpop.f32.mrb[0].mxu0
        %1051 = vmatprep.mubr.bf16.mxu0 0
        %1052 = vmatmul.mubr.bf16.gmra.mrb[0].mxu0 %v820
        %v1053 = vpop.f32.mrb[0].mxu0
        %v1054 = vadd.f32 0.0, %v1053
        %v1055 = vpop.f32.mrb[0].mxu0
        %v1056 = vpop.f32.mrb[0].mxu0
        %v1057 = vadd.f32 0.0, %v1056
        %v1058 = vpop.f32.mrb[0].mxu0
        %1059 = vmatprep.mubr.bf16.mxu0 0
        %1060 = vmatmul.mubr.bf16.gmra.mrb[0].mxu0 %v823
        %v1061 = vpop.f32.mrb[0].mxu0
        %v1062 = vadd.f32 0.0, %v1061
        %v1063 = vpop.f32.mrb[0].mxu0
        %v1064 = vpop.f32.mrb[0].mxu0
        %v1065 = vadd.f32 0.0, %v1064
        %v1066 = vpop.f32.mrb[0].mxu0
        %1067 = vmatprep.mubr.bf16.mxu0 0
        %1068 = vmatmul.mubr.bf16.gmra.mrb[0].mxu0 %v826
        %v1069 = vpop.f32.mrb[0].mxu0
        %v1070 = vadd.f32 0.0, %v1069
        %v1071 = vpop.f32.mrb[0].mxu0
        %v1072 = vpop.f32.mrb[0].mxu0
        %v1073 = vadd.f32 0.0, %v1072
        %v1074 = vpop.f32.mrb[0].mxu0
        %1075 = vmatprep.mubr.bf16.mxu0 0
        %1076 = vmatmul.mubr.bf16.gmra.mrb[0].mxu0 %v829
        %v1077 = vpop.f32.mrb[0].mxu0
        %v1078 = vadd.f32 0.0, %v1077
        %v1079 = vpop.f32.mrb[0].mxu0
        %v1080 = vpop.f32.mrb[0].mxu0
        %v1081 = vadd.f32 0.0, %v1080
        %v1082 = vpop.f32.mrb[0].mxu0
        %1083 = vmatprep.mubr.bf16.mxu0 0
        %1084 = vmatmul.mubr.bf16.gmra.mrb[0].mxu0 %v832
        %v1085 = vpop.f32.mrb[0].mxu0
        %v1086 = vadd.f32 0.0, %v1085
        %v1087 = vpop.f32.mrb[0].mxu0
        %v1088 = vpop.f32.mrb[0].mxu0
        %v1089 = vadd.f32 0.0, %v1088
        %v1090 = vpop.f32.mrb[0].mxu0
        %1091 = vmatprep.mubr.bf16.mxu0 0
        %1092 = vmatmul.mubr.bf16.gmra.mrb[0].mxu0 %v835
        %v1093 = vpop.f32.mrb[0].mxu0
        %v1094 = vadd.f32 0.0, %v1093
        %v1095 = vpop.f32.mrb[0].mxu0
        %v1096 = vpop.f32.mrb[0].mxu0
        %v1097 = vadd.f32 0.0, %v1096
        %v1098 = vpop.f32.mrb[0].mxu0
        %1099 = vmatprep.mubr.bf16.mxu0 0
        %1100 = vmatmul.mubr.bf16.gmra.mrb[0].mxu0 %v838
        %v1101 = vpop.f32.mrb[0].mxu0
        %v1102 = vadd.f32 0.0, %v1101
        %v1103 = vpop.f32.mrb[0].mxu0
        %v1104 = vpop.f32.mrb[0].mxu0
        %v1105 = vadd.f32 0.0, %v1104
        %v1106 = vpop.f32.mrb[0].mxu0
        %1107 = vmatprep.mubr.bf16.mxu0 0
        %1108 = vmatmul.mubr.bf16.gmra.mrb[0].mxu0 %v841
        %v1109 = vpop.f32.mrb[0].mxu0
        %v1110 = vadd.f32 0.0, %v1109
        %v1111 = vpop.f32.mrb[0].mxu0
        %v1112 = vpop.f32.mrb[0].mxu0
        %v1113 = vadd.f32 0.0, %v1112
        %v1114 = vpop.f32.mrb[0].mxu0
        %1115 = vmatprep.mubr.bf16.mxu0 0
        %1116 = vmatmul.mubr.bf16.gmra.mrb[0].mxu0 %v844
        %v1117 = vpop.f32.mrb[0].mxu0
        %v1118 = vadd.f32 0.0, %v1117
        %v1119 = vpop.f32.mrb[0].mxu0
        %v1120 = vpop.f32.mrb[0].mxu0
        %v1121 = vadd.f32 0.0, %v1120
        %v1122 = vpop.f32.mrb[0].mxu0
        %1123 = vmatprep.mubr.bf16.mxu0 0
        %1124 = vmatmul.mubr.bf16.gmra.mrb[0].mxu0 %v847
        %v1125 = vpop.f32.mrb[0].mxu0
        %v1126 = vadd.f32 0.0, %v1125
        %v1127 = vpop.f32.mrb[0].mxu0
        %v1128 = vpop.f32.mrb[0].mxu0
        %v1129 = vadd.f32 0.0, %v1128
        %v1130 = vpop.f32.mrb[0].mxu0
        %1131 = vmatprep.mubr.bf16.mxu0 0
        %1132 = vmatmul.mubr.bf16.gmra.mrb[0].mxu0 %v850
        %v1133 = vpop.f32.mrb[0].mxu0
        %v1134 = vadd.f32 0.0, %v1133
        %v1135 = vpop.f32.mrb[0].mxu0
        %v1136 = vpop.f32.mrb[0].mxu0
        %v1137 = vadd.f32 0.0, %v1136
        %v1138 = vpop.f32.mrb[0].mxu0
        %1139 = vmatprep.mubr.bf16.mxu0 0
        %1140 = vmatmul.mubr.bf16.gmra.mrb[0].mxu0 %v853
        %v1141 = vpop.f32.mrb[0].mxu0
        %v1142 = vadd.f32 0.0, %v1141
        %v1143 = vpop.f32.mrb[0].mxu0
        %v1144 = vpop.f32.mrb[0].mxu0
        %v1145 = vadd.f32 0.0, %v1144
        %v1146 = vpop.f32.mrb[0].mxu0
        %1147 = vmatprep.mubr.bf16.mxu0 0
        %1148 = vmatmul.mubr.bf16.gmra.mrb[0].mxu0 %v856
        %v1149 = vpop.f32.mrb[0].mxu0
        %v1150 = vadd.f32 0.0, %v1149
        %v1151 = vpop.f32.mrb[0].mxu0
        %v1152 = vpop.f32.mrb[0].mxu0
        %v1153 = vadd.f32 0.0, %v1152
        %v1154 = vpop.f32.mrb[0].mxu0
        %1155 = vmatprep.mubr.bf16.mxu0 0
        %1156 = vmatmul.mubr.bf16.gmra.mrb[0].mxu0 %v859
        %v1157 = vpop.f32.mrb[0].mxu0
        %v1158 = vadd.f32 0.0, %v1157
        %v1159 = vpop.f32.mrb[0].mxu0
        %v1160 = vpop.f32.mrb[0].mxu0
        %v1161 = vadd.f32 0.0, %v1160
        %v1162 = vpop.f32.mrb[0].mxu0
        %1163 = vmatprep.mubr.bf16.mxu0 0
        %1164 = vmatmul.mubr.bf16.gmra.mrb[0].mxu0 %v862
        %v1165 = vpop.f32.mrb[0].mxu0
        %v1166 = vadd.f32 0.0, %v1165
        %v1167 = vpop.f32.mrb[0].mxu0
        %v1168 = vpop.f32.mrb[0].mxu0
        %v1169 = vadd.f32 0.0, %v1168
        %v1170 = vpop.f32.mrb[0].mxu0
        %1171 = vmatprep.mubr.bf16.mxu0 0
        %1172 = vmatmul.mubr.bf16.gmra.mrb[0].mxu0 %v865
        %v1173 = vpop.f32.mrb[0].mxu0
        %v1174 = vadd.f32 0.0, %v1173
        %v1175 = vpop.f32.mrb[0].mxu0
        %v1176 = vpop.f32.mrb[0].mxu0
        %v1177 = vadd.f32 0.0, %v1176
        %v1178 = vpop.f32.mrb[0].mxu0
        %1179 = vmatprep.mubr.bf16.mxu0 0
        %1180 = vmatmul.mubr.bf16.gmra.mrb[0].mxu0 %v868
        %v1181 = vpop.f32.mrb[0].mxu0
        %v1182 = vadd.f32 0.0, %v1181
        %v1183 = vpop.f32.mrb[0].mxu0
        %v1184 = vpop.f32.mrb[0].mxu0
        %v1185 = vadd.f32 0.0, %v1184
        %v1186 = vpop.f32.mrb[0].mxu0
        %1187 = vmatprep.mubr.bf16.mxu0 0
        %1188 = vmatmul.mubr.bf16.gmra.mrb[0].mxu0 %v871
        %v1189 = vpop.f32.mrb[0].mxu0
        %v1190 = vadd.f32 0.0, %v1189
        %v1191 = vpop.f32.mrb[0].mxu0
        %v1192 = vpop.f32.mrb[0].mxu0
        %v1193 = vadd.f32 0.0, %v1192
        %v1194 = vpop.f32.mrb[0].mxu0
        %1195 = vmatprep.mubr.bf16.mxu0 0
        %1196 = vmatmul.mubr.bf16.gmra.mrb[0].mxu0 %v874
        %v1197 = vpop.f32.mrb[0].mxu0
        %v1198 = vadd.f32 0.0, %v1197
        %v1199 = vpop.f32.mrb[0].mxu0
        %v1200 = vpop.f32.mrb[0].mxu0
        %v1201 = vadd.f32 0.0, %v1200
        %v1202 = vpop.f32.mrb[0].mxu0
        %1203 = vdwg.mxu0
        %vm1204 = vcmask 261120
        %v1205 = vsel %vm1204, %v918, -inf
        %v1206 = vsel %vm1204, %v990, -inf
        %v1207 = vmax.f32 %v1205, %v1206
        %v1208 = vsel %vm1204, %v1062, -inf
        %v1209 = vmax.f32 %v1207, %v1208
        %v1210 = vsel %vm1204, %v1134, -inf
        %v1211 = vmax.f32 %v1209, %v1210
        %v1212 = vsel %vm1204, %v921, -inf
        %v1213 = vsel %vm1204, %v993, -inf
        %v1214 = vmax.f32 %v1212, %v1213
        %v1215 = vsel %vm1204, %v1065, -inf
        %v1216 = vmax.f32 %v1214, %v1215
        %v1217 = vsel %vm1204, %v1137, -inf
        %v1218 = vmax.f32 %v1216, %v1217
        %v1219 = vsel %vm1204, %v926, -inf
        %v1220 = vsel %vm1204, %v998, -inf
        %v1221 = vmax.f32 %v1219, %v1220
        %v1222 = vsel %vm1204, %v1070, -inf
        %v1223 = vmax.f32 %v1221, %v1222
        %v1224 = vsel %vm1204, %v1142, -inf
        %v1225 = vmax.f32 %v1223, %v1224
        %v1226 = vsel %vm1204, %v929, -inf
        %v1227 = vsel %vm1204, %v1001, -inf
        %v1228 = vmax.f32 %v1226, %v1227
        %v1229 = vsel %vm1204, %v1073, -inf
        %v1230 = vmax.f32 %v1228, %v1229
        %v1231 = vsel %vm1204, %v1145, -inf
        %v1232 = vmax.f32 %v1230, %v1231
        %v1233 = vsel %vm1204, %v934, -inf
        %v1234 = vsel %vm1204, %v1006, -inf
        %v1235 = vmax.f32 %v1233, %v1234
        %v1236 = vsel %vm1204, %v1078, -inf
        %v1237 = vmax.f32 %v1235, %v1236
        %v1238 = vsel %vm1204, %v1150, -inf
        %v1239 = vmax.f32 %v1237, %v1238
        %v1240 = vsel %vm1204, %v937, -inf
        %v1241 = vsel %vm1204, %v1009, -inf
        %v1242 = vmax.f32 %v1240, %v1241
        %v1243 = vsel %vm1204, %v1081, -inf
        %v1244 = vmax.f32 %v1242, %v1243
        %v1245 = vsel %vm1204, %v1153, -inf
        %v1246 = vmax.f32 %v1244, %v1245
        %v1247 = vsel %vm1204, %v942, -inf
        %v1248 = vsel %vm1204, %v1014, -inf
        %v1249 = vmax.f32 %v1247, %v1248
        %v1250 = vsel %vm1204, %v1086, -inf
        %v1251 = vmax.f32 %v1249, %v1250
        %v1252 = vsel %vm1204, %v1158, -inf
        %v1253 = vmax.f32 %v1251, %v1252
        %v1254 = vsel %vm1204, %v945, -inf
        %v1255 = vsel %vm1204, %v1017, -inf
        %v1256 = vmax.f32 %v1254, %v1255
        %v1257 = vsel %vm1204, %v1089, -inf
        %v1258 = vmax.f32 %v1256, %v1257
        %v1259 = vsel %vm1204, %v1161, -inf
        %v1260 = vmax.f32 %v1258, %v1259
        %v1261 = vsel %vm1204, %v950, -inf
        %v1262 = vsel %vm1204, %v1022, -inf
        %v1263 = vmax.f32 %v1261, %v1262
        %v1264 = vsel %vm1204, %v1094, -inf
        %v1265 = vmax.f32 %v1263, %v1264
        %v1266 = vsel %vm1204, %v1166, -inf
        %v1267 = vmax.f32 %v1265, %v1266
        %v1268 = vsel %vm1204, %v953, -inf
        %v1269 = vsel %vm1204, %v1025, -inf
        %v1270 = vmax.f32 %v1268, %v1269
        %v1271 = vsel %vm1204, %v1097, -inf
        %v1272 = vmax.f32 %v1270, %v1271
        %v1273 = vsel %vm1204, %v1169, -inf
        %v1274 = vmax.f32 %v1272, %v1273
        %v1275 = vsel %vm1204, %v958, -inf
        %v1276 = vsel %vm1204, %v1030, -inf
        %v1277 = vmax.f32 %v1275, %v1276
        %v1278 = vsel %vm1204, %v1102, -inf
        %v1279 = vmax.f32 %v1277, %v1278
        %v1280 = vsel %vm1204, %v1174, -inf
        %v1281 = vmax.f32 %v1279, %v1280
        %v1282 = vsel %vm1204, %v961, -inf
        %v1283 = vsel %vm1204, %v1033, -inf
        %v1284 = vmax.f32 %v1282, %v1283
        %v1285 = vsel %vm1204, %v1105, -inf
        %v1286 = vmax.f32 %v1284, %v1285
        %v1287 = vsel %vm1204, %v1177, -inf
        %v1288 = vmax.f32 %v1286, %v1287
        %v1289 = vsel %vm1204, %v966, -inf
        %v1290 = vsel %vm1204, %v1038, -inf
        %v1291 = vmax.f32 %v1289, %v1290
        %v1292 = vsel %vm1204, %v1110, -inf
        %v1293 = vmax.f32 %v1291, %v1292
        %v1294 = vsel %vm1204, %v1182, -inf
        %v1295 = vmax.f32 %v1293, %v1294
        %v1296 = vsel %vm1204, %v969, -inf
        %v1297 = vsel %vm1204, %v1041, -inf
        %v1298 = vmax.f32 %v1296, %v1297
        %v1299 = vsel %vm1204, %v1113, -inf
        %v1300 = vmax.f32 %v1298, %v1299
        %v1301 = vsel %vm1204, %v1185, -inf
        %v1302 = vmax.f32 %v1300, %v1301
        %v1303 = vsel %vm1204, %v974, -inf
        %v1304 = vsel %vm1204, %v1046, -inf
        %v1305 = vmax.f32 %v1303, %v1304
        %v1306 = vsel %vm1204, %v1118, -inf
        %v1307 = vmax.f32 %v1305, %v1306
        %v1308 = vsel %vm1204, %v1190, -inf
        %v1309 = vmax.f32 %v1307, %v1308
        %v1310 = vsel %vm1204, %v977, -inf
        %v1311 = vsel %vm1204, %v1049, -inf
        %v1312 = vmax.f32 %v1310, %v1311
        %v1313 = vsel %vm1204, %v1121, -inf
        %v1314 = vmax.f32 %v1312, %v1313
        %v1315 = vsel %vm1204, %v1193, -inf
        %v1316 = vmax.f32 %v1314, %v1315
        %v1317 = vsel %vm1204, %v982, -inf
        %v1318 = vsel %vm1204, %v1054, -inf
        %v1319 = vmax.f32 %v1317, %v1318
        %v1320 = vsel %vm1204, %v1126, -inf
        %v1321 = vmax.f32 %v1319, %v1320
        %v1322 = vsel %vm1204, %v1198, -inf
        %v1323 = vmax.f32 %v1321, %v1322
        %v1324 = vsel %vm1204, %v985, -inf
        %v1325 = vsel %vm1204, %v1057, -inf
        %v1326 = vmax.f32 %v1324, %v1325
        %v1327 = vsel %vm1204, %v1129, -inf
        %v1328 = vmax.f32 %v1326, %v1327
        %v1329 = vsel %vm1204, %v1201, -inf
        %v1330 = vmax.f32 %v1328, %v1329
        %v1331 = vld [vmem:[%s2] sm:$0x1]
        %v1333 = vlaneseq
        %v1334 = vshrl.u32 %v1333, 7
        %v1335 = vsub.s32 0, %v1334
        %v1336 = vrot.slane %v1331, %v1335
        %v1338 = vadd.f32 %v1211, %v1336
        %v1339 = vadd.f32 %v1218, %v1336
        %v1340 = vadd.f32 %v1225, %v1336
        %v1341 = vadd.f32 %v1232, %v1336
        %v1342 = vadd.f32 %v1239, %v1336
        %v1343 = vadd.f32 %v1246, %v1336
        %v1344 = vadd.f32 %v1253, %v1336
        %v1345 = vadd.f32 %v1260, %v1336
        %v1346 = vadd.f32 %v1267, %v1336
        %v1347 = vadd.f32 %v1274, %v1336
        %v1348 = vadd.f32 %v1281, %v1336
        %v1349 = vadd.f32 %v1288, %v1336
        %v1350 = vadd.f32 %v1295, %v1336
        %v1351 = vadd.f32 %v1302, %v1336
        %v1352 = vadd.f32 %v1309, %v1336
        %v1353 = vadd.f32 %v1316, %v1336
        %v1354 = vadd.f32 %v1323, %v1336
        %v1355 = vadd.f32 %v1330, %v1336
        %v1356 = vmax.f32 %v1338, 0.0
        %v1357 = vmax.f32 %v1339, 0.0
        %v1358 = vmax.f32 %v1340, 0.0
        %v1359 = vmax.f32 %v1341, 0.0
        %v1360 = vmax.f32 %v1342, 0.0
        %v1361 = vmax.f32 %v1343, 0.0
        %v1362 = vmax.f32 %v1344, 0.0
        %v1363 = vmax.f32 %v1345, 0.0
        %v1364 = vmax.f32 %v1346, 0.0
        %v1365 = vmax.f32 %v1347, 0.0
        %v1366 = vmax.f32 %v1348, 0.0
        %v1367 = vmax.f32 %v1349, 0.0
        %v1368 = vmax.f32 %v1350, 0.0
        %v1369 = vmax.f32 %v1351, 0.0
        %v1370 = vmax.f32 %v1352, 0.0
        %v1371 = vmax.f32 %v1353, 0.0
        %v1372 = vmax.f32 %v1354, 0.0
        %v1373 = vmax.f32 %v1355, 0.0
        %v1374 = vpack.c.bf16 %v1357, %v1356
        %v1375 = vpack.c.bf16 %v1359, %v1358
        %v1376 = vpack.c.bf16 %v1361, %v1360
        %v1377 = vpack.c.bf16 %v1363, %v1362
        %v1378 = vpack.c.bf16 %v1365, %v1364
        %v1379 = vpack.c.bf16 %v1367, %v1366
        %v1380 = vpack.c.bf16 %v1369, %v1368
        %v1381 = vpack.c.bf16 %v1371, %v1370
        %v1382 = vpack.c.bf16 %v1373, %v1372
        %v1392 = vunpack.c.l.b16 %v1374
        %v1393 = vunpack.c.h.b16 %v1374
        %v1394 = vunpack.c.l.b16 %v1375
        %v1395 = vunpack.c.h.b16 %v1375
        %v1396 = vunpack.c.l.b16 %v1376
        %v1397 = vunpack.c.h.b16 %v1376
        %v1398 = vunpack.c.l.b16 %v1377
        %v1399 = vunpack.c.h.b16 %v1377
        %v1400 = vunpack.c.l.b16 %v1378
        %v1401 = vunpack.c.h.b16 %v1378
        %v1402 = vunpack.c.l.b16 %v1379
        %v1403 = vunpack.c.h.b16 %v1379
        %v1404 = vunpack.c.l.b16 %v1380
        %v1405 = vunpack.c.h.b16 %v1380
        %v1406 = vunpack.c.l.b16 %v1381
        %v1407 = vunpack.c.h.b16 %v1381
        %v1408 = vunpack.c.l.b16 %v1382
        %v1409 = vunpack.c.h.b16 %v1382
        %v1410 = vpack.c.b16 %v1392, %v1392
        %v1411 = vpack.c.b16 %v1393, %v1393
        %v1412 = vpack.c.b16 %v1394, %v1394
        %v1413 = vpack.c.b16 %v1395, %v1395
        %v1414 = vpack.c.b16 %v1396, %v1396
        %v1415 = vpack.c.b16 %v1397, %v1397
        %v1416 = vpack.c.b16 %v1398, %v1398
        %v1417 = vpack.c.b16 %v1399, %v1399
        %v1418 = vpack.c.b16 %v1400, %v1400
        %v1419 = vpack.c.b16 %v1401, %v1401
        %v1420 = vpack.c.b16 %v1402, %v1402
        %v1421 = vpack.c.b16 %v1403, %v1403
        %v1422 = vpack.c.b16 %v1404, %v1404
        %v1423 = vpack.c.b16 %v1405, %v1405
        %v1424 = vpack.c.b16 %v1406, %v1406
        %v1425 = vpack.c.b16 %v1407, %v1407
        %v1426 = vpack.c.b16 %v1408, %v1408
        %v1427 = vpack.c.b16 %v1409, %v1409
        %vm1446 = vcmask 257024
        %1447 = vst.msk [vmem:[%s497] sm:$0xf] %vm1446, %v1410
        %1448 = vst.msk [vmem:[%s497 + $0x4] sm:$0xf] %vm1446, %v1411
        %1449 = vst.msk [vmem:[%s497 + $0x8] sm:$0xf] %vm1446, %v1412
        %1450 = vst.msk [vmem:[%s497 + $0xc] sm:$0xf] %vm1446, %v1413
        %1451 = vst.msk [vmem:[%s497 + $0x10] sm:$0xf] %vm1446, %v1414
        %1452 = vst.msk [vmem:[%s497 + $0x14] sm:$0xf] %vm1446, %v1415
        %1453 = vst.msk [vmem:[%s497 + $0x18] sm:$0xf] %vm1446, %v1416
        %1454 = vst.msk [vmem:[%s497 + $0x1c] sm:$0xf] %vm1446, %v1417
        %1455 = vst.msk [vmem:[%s497 + $0x20] sm:$0xf] %vm1446, %v1418
        %1456 = vst.msk [vmem:[%s497 + $0x24] sm:$0xf] %vm1446, %v1419
        %1457 = vst.msk [vmem:[%s497 + $0x28] sm:$0xf] %vm1446, %v1420
        %1458 = vst.msk [vmem:[%s497 + $0x2c] sm:$0xf] %vm1446, %v1421
        %1459 = vst.msk [vmem:[%s497 + $0x30] sm:$0xf] %vm1446, %v1422
        %1460 = vst.msk [vmem:[%s497 + $0x34] sm:$0xf] %vm1446, %v1423
        %1461 = vst.msk [vmem:[%s497 + $0x38] sm:$0xf] %vm1446, %v1424
        %1462 = vst.msk [vmem:[%s497 + $0x3c] sm:$0xf] %vm1446, %v1425
        %1463 = vst.msk [vmem:[%s497 + $0x40] sm:$0xf] %vm1446, %v1426
        %1464 = vst.msk [vmem:[%s497 + $0x44] sm:$0xf] %vm1446, %v1427
        %s1465 = smul.u32 18, %s14
        %p1466 = scmp.lt.s32.totalorder %s1465, 35
        %s1467 = scalar_select %p1466, %s1465, 35
        %s1468 = smul.addr %s1467, 4
        %s1469 = scalar_lea.vmem %s3, %s1468
        // Predicated region
        $region74: #{lenet_forward.3} parent=68 // pred_check
          %p1470 = pneg %p100
        $region75: #{lenet_forward.3} parent=68 // pred_check_branch
          %1472 = sbr.rel (%p1470) target = $region77
        $region76: #{lenet_forward.3} parent=68 // pred_region
          %s1473 = smul.u32 18, %s14
        $region77: #{lenet_forward.3} parent=68 // pred_fallthru
          _
      $region69: #{lenet_forward.3} parent=5 // pred_fallthru
        _
      %p1474 = scmp.le.s32.totalorder 2, %s9
      // Predicated region
      $region78: #{lenet_forward.3} parent=5 // pred_check
        %p1475 = pneg %p1474
      $region79: #{lenet_forward.3} parent=5 // pred_check_branch
        %1477 = sbr.rel (%p1475) target = $region81
      $region80: #{lenet_forward.3} parent=5 // pred_region
        %s1478 = ssub.s32 %s9, 2
        // Predicated region
        $region82: #{lenet_forward.3} parent=80 // pred_check
          %p1479 = pneg %p106
        $region83: #{lenet_forward.3} parent=80 // pred_check_branch
          %1481 = sbr.rel (%p1479) target = $region85
        $region84: #{lenet_forward.3} parent=80 // pred_region
          %s1482 = smul.u32 18, %s15
          %p1483 = scmp.lt.s32.totalorder %s1482, 35
          %s1484 = scalar_select %p1483, %s1482, 35
          %s1485 = smul.addr %s1484, 4
          %s1486 = scalar_lea.vmem %s3, %s1485
        $region85: #{lenet_forward.3} parent=80 // pred_fallthru
          _
      $region81: #{lenet_forward.3} parent=5 // pred_fallthru
        _
    $region6: #{lenet_forward.3} parent=1 // loop_footer
      %s13 = sadd.s32 1, %s9
    $region7: #{lenet_forward.3} parent=1 // loop_footer_branch
      %8 = sbr.rel target = $region3
    $region8: #{lenet_forward.3} parent=1 // loop_exit
      _

// kernel: lenet_forward.4
$region0: #{lenet_forward.4}
  #allocation0 [shape = 'u32[]', space=smem, size = 0x4, offset = 0x4, fixed_abs, tag = 'smem constant byte address 0x4 - core index']
  #allocation1 [shape = 'u32[144,128]{1,0:T(1,128)}', space=vmem, size = 0x12000, scoped, tag = 'internal scratch']
  %s0 = inlined_call_operand.vmem [shape: bf16[4,32,800], index: 0, kind: input, shape index: {}]
  %s1 = inlined_call_operand.vmem [shape: bf16[800,64], index: 1, kind: input, shape index: {}]
  %s2 = inlined_call_operand.vmem [shape: f32[1,64], index: 2, kind: input, shape index: {}]
  %s3 = inlined_call_operand.vmem [shape: bf16[32,64], index: 3, kind: output, shape index: {}]
  %s4 = sld [smem:[#allocation0]]
  $region71: #{lenet_forward.4} parent=0
    _
  %s6 = ssub.s32 1, %s4
  %s7 = scalar_select 0, %s6, %s4
  $region1: #{lenet_forward.4} parent=0
    #allocation2 [shape = 'u8[229376]{0}', space=vmem, size = 0x38000, scoped, tag = 'input window, operand 0']
    loop: start=0, step=1, limit=4
    $region2: #{lenet_forward.4} parent=1 // loop_pre_header
      _
    $region3: #{lenet_forward.4} parent=1 // loop_header
      %s9 = sphi 0, %s13
      %p10 = scmp.ge.s32.totalorder %s9, 4
      %s19 = sphi 0, %s21
      %s22 = sphi 0, %s19
      %s23 = sphi 0, %s22
      %s39 = sphi 0, %s23
      %s43 = sphi 0, %s43
      %s45 = sphi 0, %s43
      %s46 = sphi 0, %s45
      %s60 = sphi 0, %s46
      %s64 = sphi 0, %s64
      %s66 = sphi 0, %s64
      %s67 = sphi 0, %s66
      %s81 = sphi 0, %s67
      %s87 = sphi 0, %s89
      %s90 = sphi 0, %s87
      %s91 = sphi 0, %s90
      %s107 = sphi 0, %s91
    $region4: #{lenet_forward.4} parent=1 // loop_header_branch
      %12 = sbr.rel (%p10) target = $region8
    $region5: #{lenet_forward.4} parent=1 // loop_body
      %s14 = ssub.s32 %s9, 1
      %s15 = ssub.s32 %s9, 2
      %s16 = sadd.s32 %s9, 1
      %s17 = ssub.s32 %s9, %s16
      %p18 = scmp.eq.s32.totalorder %s17, 0
      %s20 = sadd.s32 %s19, 1
      %s21 = scalar_select %p18, %s19, %s20
      %p24 = pneg %p18
      %p25 = scmp.eq.s32.totalorder %s9, 1
      %p26 = por %p24, %p25
      %p27 = scmp.ne.s32.totalorder %s19, %s22
      %p28 = scmp.eq.s32.totalorder %s9, 0
      %p29 = por %p27, %p28
      %p30 = scmp.ne.s32.totalorder %s19, %s22
      %p31 = scmp.eq.s32.totalorder %s14, 1
      %p32 = por %p30, %p31
      %p33 = scmp.ne.s32.totalorder %s22, %s23
      %p34 = scmp.eq.s32.totalorder %s14, 0
      %p35 = por %p33, %p34
      %p36 = scmp.ne.s32.totalorder %s22, %s23
      %p37 = scmp.eq.s32.totalorder %s15, 1
      %p38 = por %p36, %p37
      %p40 = scmp.ne.s32.totalorder %s23, %s39
      %p41 = scmp.eq.s32.totalorder %s15, 0
      %p42 = por %p40, %p41
      %s44 = sadd.s32 %s43, 1
      %p47 = scmp.eq.s32.totalorder %s9, 1
      %p48 = scmp.ne.s32.totalorder %s43, %s45
      %p49 = scmp.eq.s32.totalorder %s9, 0
      %p50 = por %p48, %p49
      %p51 = scmp.ne.s32.totalorder %s43, %s45
      %p52 = scmp.eq.s32.totalorder %s14, 1
      %p53 = por %p51, %p52
      %p54 = scmp.ne.s32.totalorder %s45, %s46
      %p55 = scmp.eq.s32.totalorder %s14, 0
      %p56 = por %p54, %p55
      %p57 = scmp.ne.s32.totalorder %s45, %s46
      %p58 = scmp.eq.s32.totalorder %s15, 1
      %p59 = por %p57, %p58
      %p61 = scmp.ne.s32.totalorder %s46, %s60
      %p62 = scmp.eq.s32.totalorder %s15, 0
      %p63 = por %p61, %p62
      %s65 = sadd.s32 %s64, 1
      %p68 = scmp.eq.s32.totalorder %s9, 1
      %p69 = scmp.ne.s32.totalorder %s64, %s66
      %p70 = scmp.eq.s32.totalorder %s9, 0
      %p71 = por %p69, %p70
      %p72 = scmp.ne.s32.totalorder %s64, %s66
      %p73 = scmp.eq.s32.totalorder %s14, 1
      %p74 = por %p72, %p73
      %p75 = scmp.ne.s32.totalorder %s66, %s67
      %p76 = scmp.eq.s32.totalorder %s14, 0
      %p77 = por %p75, %p76
      %p78 = scmp.ne.s32.totalorder %s66, %s67
      %p79 = scmp.eq.s32.totalorder %s15, 1
      %p80 = por %p78, %p79
      %p82 = scmp.ne.s32.totalorder %s67, %s81
      %p83 = scmp.eq.s32.totalorder %s15, 0
      %p84 = por %p82, %p83
      %s85 = ssub.s32 %s9, %s16
      %p86 = scmp.eq.s32.totalorder %s85, 0
      %s88 = sadd.s32 %s87, 1
      %s89 = scalar_select %p86, %s87, %s88
      %p92 = pneg %p86
      %p93 = scmp.eq.s32.totalorder %s9, 1
      %p94 = por %p92, %p93
      %p95 = scmp.ne.s32.totalorder %s87, %s90
      %p96 = scmp.eq.s32.totalorder %s9, 0
      %p97 = por %p95, %p96
      %p98 = scmp.ne.s32.totalorder %s87, %s90
      %p99 = scmp.eq.s32.totalorder %s14, 1
      %p100 = por %p98, %p99
      %p101 = scmp.ne.s32.totalorder %s90, %s91
      %p102 = scmp.eq.s32.totalorder %s14, 0
      %p103 = por %p101, %p102
      %p104 = scmp.ne.s32.totalorder %s90, %s91
      %p105 = scmp.eq.s32.totalorder %s15, 1
      %p106 = por %p104, %p105
      %p108 = scmp.ne.s32.totalorder %s91, %s107
      %p109 = scmp.eq.s32.totalorder %s15, 0
      %p110 = por %p108, %p109
      %p111 = scmp.le.s32.totalorder 1, %s9
      %p112 = scmp.lt.s32.totalorder %s9, 3
      %p113 = pnand %p111, %p112
      %p114 = pneg %p113
      // Predicated region
      $region9: #{lenet_forward.4} parent=5 // pred_check
        _
      $region10: #{lenet_forward.4} parent=5 // pred_check_branch
        %116 = sbr.rel (%p113) target = $region12
      $region11: #{lenet_forward.4} parent=5 // pred_region
        %s117 = ssub.s32 %s9, 1
        // Predicated region
        $region13: #{lenet_forward.4} parent=11 // pred_check
          %p118 = pneg %p56
        $region14: #{lenet_forward.4} parent=11 // pred_check_branch
          %120 = sbr.rel (%p118) target = $region16
        $region15: #{lenet_forward.4} parent=11 // pred_region
          _
        $region16: #{lenet_forward.4} parent=11 // pred_fallthru
          _
        // Predicated region
        $region17: #{lenet_forward.4} parent=11 // pred_check
          %p121 = pneg %p77
        $region18: #{lenet_forward.4} parent=11 // pred_check_branch
          %123 = sbr.rel (%p121) target = $region20
        $region19: #{lenet_forward.4} parent=11 // pred_region
          _
        $region20: #{lenet_forward.4} parent=11 // pred_fallthru
          _
      $region12: #{lenet_forward.4} parent=5 // pred_fallthru
        _
      %p124 = scmp.lt.s32.totalorder %s9, 2
      // Predicated region
      $region21: #{lenet_forward.4} parent=5 // pred_check
        %p125 = pneg %p124
      $region22: #{lenet_forward.4} parent=5 // pred_check_branch
        %127 = sbr.rel (%p125) target = $region24
      $region23: #{lenet_forward.4} parent=5 // pred_region
        // Predicated region
        $region25: #{lenet_forward.4} parent=23 // pred_check
          %p128 = pneg %p29
        $region26: #{lenet_forward.4} parent=23 // pred_check_branch
          %130 = sbr.rel (%p128) target = $region28
        $region27: #{lenet_forward.4} parent=23 // pred_region
          %s131 = sand.u32 %s19, 1
          %s132 = sand.u32 %s19, 1
          %s133 = smul.addr %s132, 224
          %s134 = scalar_lea.vmem [#allocation2], %s133
          %s135 = smul.u32 2, %s9
          %s136 = smul.addr %s135, 7
          %s137 = smul.addr %s136, 4
          %s138 = scalar_lea.vmem %s0, %s137
          // Predicated region
          $region29: #{lenet_forward.4} parent=27 // pred_check
            _
          $region30: #{lenet_forward.4} parent=27 // pred_check_branch
            %140 = sbr.rel (0) target = $region32
          $region31: #{lenet_forward.4} parent=27 // pred_region
            // Predicated region
            $region33: #{lenet_forward.4} parent=31 // pred_check
              _
            $region34: #{lenet_forward.4} parent=31 // pred_check_branch
              %142 = sbr.rel (0) target = $region36
            $region35: #{lenet_forward.4} parent=31 // pred_region
              %s143 = scalar_lea.vmem %s138, 24
              %s144 = scalar_lea.vmem %s134, 24 [#allocation2]
              loop: start=0, step=1, limit=1
              $region37: #{lenet_forward.4} parent=35 // loop_pre_header
                _
              $region38: #{lenet_forward.4} parent=35 // loop_header
                %s146 = sphi 0, %s150
                %p147 = scmp.ge.s32.totalorder %s146, 1
                %s151 = sphi %s138, %s138
                %s152 = sphi %s134, %s134
              $region39: #{lenet_forward.4} parent=35 // loop_header_branch
                %149 = sbr.rel (%p147) target = $region43
              $region40: #{lenet_forward.4} parent=35 // loop_body
                %v153 = vld [vmem:[%s151] sm:$0xff]
                %154 = vst [vmem:[%s152] sm:$0xff] %v153
                %v155 = vld [vmem:[%s151 + $0x8] sm:$0xff]
                %156 = vst [vmem:[%s152 + $0x8] sm:$0xff] %v155
                %v157 = vld [vmem:[%s151 + $0x10] sm:$0xff]
                %158 = vst [vmem:[%s152 + $0x10] sm:$0xff] %v157
                %v159 = vld [vmem:[%s151 + $0x1c] sm:$0xff]
                %160 = vst [vmem:[%s152 + $0x1c] sm:$0xff] %v159
                %v161 = vld [vmem:[%s151 + $0x24] sm:$0xff]
                %162 = vst [vmem:[%s152 + $0x24] sm:$0xff] %v161
                %v163 = vld [vmem:[%s151 + $0x2c] sm:$0xff]
                %164 = vst [vmem:[%s152 + $0x2c] sm:$0xff] %v163
                %v165 = vld [vmem:[%s151 + $0x70] sm:$0xff]
                %166 = vst [vmem:[%s152 + $0x38] sm:$0xff] %v165
                %v167 = vld [vmem:[%s151 + $0x78] sm:$0xff]
                %168 = vst [vmem:[%s152 + $0x40] sm:$0xff] %v167
                %v169 = vld [vmem:[%s151 + $0x80] sm:$0xff]
                %170 = vst [vmem:[%s152 + $0x48] sm:$0xff] %v169
                %v171 = vld [vmem:[%s151 + $0x8c] sm:$0xff]
                %172 = vst [vmem:[%s152 + $0x54] sm:$0xff] %v171
                %v173 = vld [vmem:[%s151 + $0x94] sm:$0xff]
                %174 = vst [vmem:[%s152 + $0x5c] sm:$0xff] %v173
                %v175 = vld [vmem:[%s151 + $0x9c] sm:$0xff]
                %176 = vst [vmem:[%s152 + $0x64] sm:$0xff] %v175
                %v177 = vld [vmem:[%s151 + $0xe0] sm:$0xff]
                %178 = vst [vmem:[%s152 + $0x70] sm:$0xff] %v177
                %v179 = vld [vmem:[%s151 + $0xe8] sm:$0xff]
                %180 = vst [vmem:[%s152 + $0x78] sm:$0xff] %v179
                %v181 = vld [vmem:[%s151 + $0xf0] sm:$0xff]
                %182 = vst [vmem:[%s152 + $0x80] sm:$0xff] %v181
                %v183 = vld [vmem:[%s151 + $0xfc] sm:$0xff]
                %184 = vst [vmem:[%s152 + $0x8c] sm:$0xff] %v183
                %v185 = vld [vmem:[%s151 + $0x104] sm:$0xff]
                %186 = vst [vmem:[%s152 + $0x94] sm:$0xff] %v185
                %v187 = vld [vmem:[%s151 + $0x10c] sm:$0xff]
                %188 = vst [vmem:[%s152 + $0x9c] sm:$0xff] %v187
                %v189 = vld [vmem:[%s151 + $0x150] sm:$0xff]
                %190 = vst [vmem:[%s152 + $0xa8] sm:$0xff] %v189
                %v191 = vld [vmem:[%s151 + $0x158] sm:$0xff]
                %192 = vst [vmem:[%s152 + $0xb0] sm:$0xff] %v191
                %v193 = vld [vmem:[%s151 + $0x160] sm:$0xff]
                %194 = vst [vmem:[%s152 + $0xb8] sm:$0xff] %v193
                %v195 = vld [vmem:[%s151 + $0x16c] sm:$0xff]
                %196 = vst [vmem:[%s152 + $0xc4] sm:$0xff] %v195
                %v197 = vld [vmem:[%s151 + $0x174] sm:$0xff]
                %198 = vst [vmem:[%s152 + $0xcc] sm:$0xff] %v197
                %v199 = vld [vmem:[%s151 + $0x17c] sm:$0xff]
                %200 = vst [vmem:[%s152 + $0xd4] sm:$0xff] %v199
              $region41: #{lenet_forward.4} parent=35 // loop_footer
                %s150 = sadd.s32 1, %s146
              $region42: #{lenet_forward.4} parent=35 // loop_footer_branch
                %145 = sbr.rel target = $region38
              $region43: #{lenet_forward.4} parent=35 // loop_exit
                _
              loop: start=0, step=1, limit=1
              $region44: #{lenet_forward.4} parent=35 // loop_pre_header
                _
              $region45: #{lenet_forward.4} parent=35 // loop_header
                %s203 = sphi 0, %s207
                %p204 = scmp.ge.s32.totalorder %s203, 1
                %s208 = sphi %s143, %s143
                %s209 = sphi %s144, %s144
              $region46: #{lenet_forward.4} parent=35 // loop_header_branch
                %206 = sbr.rel (%p204) target = $region50
              $region47: #{lenet_forward.4} parent=35 // loop_body
                %v210 = vld [vmem:[%s208] sm:$0xf]
                %211 = vst [vmem:[%s209] sm:$0xf] %v210
                %v212 = vld [vmem:[%s208 + $0x1c] sm:$0xf]
                %213 = vst [vmem:[%s209 + $0x1c] sm:$0xf] %v212
                %v214 = vld [vmem:[%s208 + $0x70] sm:$0xf]
                %215 = vst [vmem:[%s209 + $0x38] sm:$0xf] %v214
                %v216 = vld [vmem:[%s208 + $0x8c] sm:$0xf]
                %217 = vst [vmem:[%s209 + $0x54] sm:$0xf] %v216
                %v218 = vld [vmem:[%s208 + $0xe0] sm:$0xf]
                %219 = vst [vmem:[%s209 + $0x70] sm:$0xf] %v218
                %v220 = vld [vmem:[%s208 + $0xfc] sm:$0xf]
                %221 = vst [vmem:[%s209 + $0x8c] sm:$0xf] %v220
                %v222 = vld [vmem:[%s208 + $0x150] sm:$0xf]
                %223 = vst [vmem:[%s209 + $0xa8] sm:$0xf] %v222
                %v224 = vld [vmem:[%s208 + $0x16c] sm:$0xf]
                %225 = vst [vmem:[%s209 + $0xc4] sm:$0xf] %v224
              $region48: #{lenet_forward.4} parent=35 // loop_footer
                %s207 = sadd.s32 1, %s203
              $region49: #{lenet_forward.4} parent=35 // loop_footer_branch
                %202 = sbr.rel target = $region45
              $region50: #{lenet_forward.4} parent=35 // loop_exit
                _
            $region36: #{lenet_forward.4} parent=31 // pred_fallthru
              _
          $region32: #{lenet_forward.4} parent=27 // pred_fallthru
            _
          %226 = vnop
        $region28: #{lenet_forward.4} parent=23 // pred_fallthru
          _
      $region24: #{lenet_forward.4} parent=5 // pred_fallthru
        _
      %p227 = scmp.le.s32.totalorder 1, %s9
      %p228 = scmp.lt.s32.totalorder %s9, 3
      %p229 = pnand %p227, %p228
      %p230 = pneg %p229
      // Predicated region
      $region51: #{lenet_forward.4} parent=5 // pred_check
        _
      $region52: #{lenet_forward.4} parent=5 // pred_check_branch
        %232 = sbr.rel (%p229) target = $region54
      $region53: #{lenet_forward.4} parent=5 // pred_region
        %s233 = ssub.s32 %s9, 1
        %s234 = sand.u32 %s22, 1
        %s235 = sand.u32 %s22, 1
        %s236 = smul.addr %s235, 224
        %s237 = scalar_lea.vmem [#allocation2], %s236
        // Predicated region
        $region55: #{lenet_forward.4} parent=53 // pred_check
          %p238 = pneg %p35
        $region56: #{lenet_forward.4} parent=53 // pred_check_branch
          %240 = sbr.rel (%p238) target = $region58
        $region57: #{lenet_forward.4} parent=53 // pred_region
          _
        $region58: #{lenet_forward.4} parent=53 // pred_fallthru
          _
        %s241 = sand.u32 %s22, 1
        %s242 = sand.u32 %s22, 1
        %s243 = smul.addr %s242, 224
        %s244 = scalar_lea.vmem [#allocation2], %s243
        %p245 = pneg %p35
        %p246 = pneg %p32
        %p247 = pneg %p56
        %p248 = pneg %p53
        %p249 = pneg %p77
        %p250 = pneg %p74
        %p251 = pneg %p103
        %p252 = pneg %p100
        %s253 = smul.u32 2, %s14
        %p254 = scmp.lt.s32.totalorder %s253, 3
        %s255 = scalar_select %p254, %s253, 3
        %s256 = smul.addr %s255, 4
        %s257 = scalar_lea.vmem %s3, %s256
        %s258 = smul.u32 2, %s14
        %s259 = smul.u32 2, %s14
        %p260 = scmp.lt.s32.totalorder %s259, 3
        %s261 = scalar_select %p260, %s259, 3
        %s262 = smul.addr %s261, 4
        %s263 = scalar_lea.vmem %s3, %s262
        %s264 = smul.u32 2, %s14
        %v266 = vld [vmem:[%s237] sm:$0xff]
        %v267 = vld [vmem:[%s237 + $0x8] sm:$0xff]
        %v268 = vld [vmem:[%s237 + $0x10] sm:$0xff]
        %v269 = vld [vmem:[%s237 + $0x18] sm:$0xf]
        %v270 = vld [vmem:[%s237 + $0x1c] sm:$0xff]
        %v271 = vld [vmem:[%s237 + $0x24] sm:$0xff]
        %v272 = vld [vmem:[%s237 + $0x2c] sm:$0xff]
        %v273 = vld [vmem:[%s237 + $0x34] sm:$0xf]
        %v274 = vld [vmem:[%s237 + $0x38] sm:$0xff]
        %v275 = vld [vmem:[%s237 + $0x40] sm:$0xff]
        %v276 = vld [vmem:[%s237 + $0x48] sm:$0xff]
        %v277 = vld [vmem:[%s237 + $0x50] sm:$0xf]
        %v278 = vld [vmem:[%s237 + $0x54] sm:$0xff]
        %v279 = vld [vmem:[%s237 + $0x5c] sm:$0xff]
        %v280 = vld [vmem:[%s237 + $0x64] sm:$0xff]
        %v281 = vld [vmem:[%s237 + $0x6c] sm:$0xf]
        %v282 = vld [vmem:[%s237 + $0x70] sm:$0xff]
        %v283 = vld [vmem:[%s237 + $0x78] sm:$0xff]
        %v284 = vld [vmem:[%s237 + $0x80] sm:$0xff]
        %v285 = vld [vmem:[%s237 + $0x88] sm:$0xf]
        %v286 = vld [vmem:[%s237 + $0x8c] sm:$0xff]
        %v287 = vld [vmem:[%s237 + $0x94] sm:$0xff]
        %v288 = vld [vmem:[%s237 + $0x9c] sm:$0xff]
        %v289 = vld [vmem:[%s237 + $0xa4] sm:$0xf]
        %v290 = vld [vmem:[%s237 + $0xa8] sm:$0xff]
        %v291 = vld [vmem:[%s237 + $0xb0] sm:$0xff]
        %v292 = vld [vmem:[%s237 + $0xb8] sm:$0xff]
        %v293 = vld [vmem:[%s237 + $0xc0] sm:$0xf]
        %v294 = vld [vmem:[%s237 + $0xc4] sm:$0xff]
        %v295 = vld [vmem:[%s237 + $0xcc] sm:$0xff]
        %v296 = vld [vmem:[%s237 + $0xd4] sm:$0xff]
        %v297 = vld [vmem:[%s237 + $0xdc] sm:$0xf]
        %v298 = vld [vmem:[%s1] sm:$0xf]
        %v299 = vld [vmem:[%s1 + $0x4] sm:$0xf]
        %v300 = vld [vmem:[%s1 + $0x8] sm:$0xf]
        %v301 = vld [vmem:[%s1 + $0xc] sm:$0xf]
        %v302 = vld [vmem:[%s1 + $0x10] sm:$0xf]
        %v303 = vld [vmem:[%s1 + $0x14] sm:$0xf]
        %v304 = vld [vmem:[%s1 + $0x18] sm:$0xf]
        %v305 = vld [vmem:[%s1 + $0x1c] sm:$0xf]
        %v306 = vld [vmem:[%s1 + $0x20] sm:$0xf]
        %v307 = vld [vmem:[%s1 + $0x24] sm:$0xf]
        %v308 = vld [vmem:[%s1 + $0x28] sm:$0xf]
        %v309 = vld [vmem:[%s1 + $0x2c] sm:$0xf]
        %v310 = vld [vmem:[%s1 + $0x30] sm:$0xf]
        %v311 = vld [vmem:[%s1 + $0x34] sm:$0xf]
        %v312 = vld [vmem:[%s1 + $0x38] sm:$0xf]
        %v313 = vld [vmem:[%s1 + $0x3c] sm:$0xf]
        %v314 = vld [vmem:[%s1 + $0x40] sm:$0xf]
        %v315 = vld [vmem:[%s1 + $0x44] sm:$0xf]
        %v316 = vld [vmem:[%s1 + $0x48] sm:$0xf]
        %v317 = vld [vmem:[%s1 + $0x4c] sm:$0xf]
        %v318 = vld [vmem:[%s1 + $0x50] sm:$0xf]
        %v319 = vld [vmem:[%s1 + $0x54] sm:$0xf]
        %v320 = vld [vmem:[%s1 + $0x58] sm:$0xf]
        %v321 = vld [vmem:[%s1 + $0x5c] sm:$0xf]
        %v322 = vld [vmem:[%s1 + $0x60] sm:$0xf]
        %v323 = vld [vmem:[%s1 + $0x64] sm:$0xf]
        %v324 = vld [vmem:[%s1 + $0x68] sm:$0xf]
        %v325 = vld [vmem:[%s1 + $0x6c] sm:$0xf]
        %v326 = vld [vmem:[%s1 + $0x70] sm:$0xf]
        %v327 = vld [vmem:[%s1 + $0x74] sm:$0xf]
        %v328 = vld [vmem:[%s1 + $0x78] sm:$0xf]
        %v329 = vld [vmem:[%s1 + $0x7c] sm:$0xf]
        %v330 = vld [vmem:[%s1 + $0x80] sm:$0xf]
        %v331 = vld [vmem:[%s1 + $0x84] sm:$0xf]
        %v332 = vld [vmem:[%s1 + $0x88] sm:$0xf]
        %v333 = vld [vmem:[%s1 + $0x8c] sm:$0xf]
        %v334 = vld [vmem:[%s1 + $0x90] sm:$0xf]
        %v335 = vld [vmem:[%s1 + $0x94] sm:$0xf]
        %v336 = vld [vmem:[%s1 + $0x98] sm:$0xf]
        %v337 = vld [vmem:[%s1 + $0x9c] sm:$0xf]
        %v338 = vld [vmem:[%s1 + $0xa0] sm:$0xf]
        %v339 = vld [vmem:[%s1 + $0xa4] sm:$0xf]
        %v340 = vld [vmem:[%s1 + $0xa8] sm:$0xf]
        %v341 = vld [vmem:[%s1 + $0xac] sm:$0xf]
        %v342 = vld [vmem:[%s1 + $0xb0] sm:$0xf]
        %v343 = vld [vmem:[%s1 + $0xb4] sm:$0xf]
        %v344 = vld [vmem:[%s1 + $0xb8] sm:$0xf]
        %v345 = vld [vmem:[%s1 + $0xbc] sm:$0xf]
        %v346 = vld [vmem:[%s1 + $0xc0] sm:$0xf]
        %v347 = vld [vmem:[%s1 + $0xc4] sm:$0xf]
        %v348 = vld [vmem:[%s1 + $0xc8] sm:$0xf]
        %v349 = vld [vmem:[%s1 + $0xcc] sm:$0xf]
        %v350 = vld [vmem:[%s1 + $0xd0] sm:$0xf]
        %v351 = vld [vmem:[%s1 + $0xd4] sm:$0xf]
        %v352 = vld [vmem:[%s1 + $0xd8] sm:$0xf]
        %v353 = vld [vmem:[%s1 + $0xdc] sm:$0xf]
        %v354 = vld [vmem:[%s1 + $0xe0] sm:$0xf]
        %v355 = vld [vmem:[%s1 + $0xe4] sm:$0xf]
        %v356 = vld [vmem:[%s1 + $0xe8] sm:$0xf]
        %v357 = vld [vmem:[%s1 + $0xec] sm:$0xf]
        %v358 = vld [vmem:[%s1 + $0xf0] sm:$0xf]
        %v359 = vld [vmem:[%s1 + $0xf4] sm:$0xf]
        %v360 = vld [vmem:[%s1 + $0xf8] sm:$0xf]
        %v361 = vld [vmem:[%s1 + $0xfc] sm:$0xf]
        %v362 = vld [vmem:[%s1 + $0x100] sm:$0xf]
        %v363 = vld [vmem:[%s1 + $0x104] sm:$0xf]
        %v364 = vld [vmem:[%s1 + $0x108] sm:$0xf]
        %v365 = vld [vmem:[%s1 + $0x10c] sm:$0xf]
        %v366 = vld [vmem:[%s1 + $0x110] sm:$0xf]
        %v367 = vld [vmem:[%s1 + $0x114] sm:$0xf]
        %v368 = vld [vmem:[%s1 + $0x118] sm:$0xf]
        %v369 = vld [vmem:[%s1 + $0x11c] sm:$0xf]
        %v370 = vld [vmem:[%s1 + $0x120] sm:$0xf]
        %v371 = vld [vmem:[%s1 + $0x124] sm:$0xf]
        %v372 = vld [vmem:[%s1 + $0x128] sm:$0xf]
        %v373 = vld [vmem:[%s1 + $0x12c] sm:$0xf]
        %v374 = vld [vmem:[%s1 + $0x130] sm:$0xf]
        %v375 = vld [vmem:[%s1 + $0x134] sm:$0xf]
        %v376 = vld [vmem:[%s1 + $0x138] sm:$0xf]
        %v377 = vld [vmem:[%s1 + $0x13c] sm:$0xf]
        %v378 = vld [vmem:[%s1 + $0x140] sm:$0xf]
        %v379 = vld [vmem:[%s1 + $0x144] sm:$0xf]
        %v380 = vld [vmem:[%s1 + $0x148] sm:$0xf]
        %v381 = vld [vmem:[%s1 + $0x14c] sm:$0xf]
        %v382 = vld [vmem:[%s1 + $0x150] sm:$0xf]
        %v383 = vld [vmem:[%s1 + $0x154] sm:$0xf]
        %v384 = vld [vmem:[%s1 + $0x158] sm:$0xf]
        %v385 = vld [vmem:[%s1 + $0x15c] sm:$0xf]
        %v386 = vld [vmem:[%s1 + $0x160] sm:$0xf]
        %v387 = vld [vmem:[%s1 + $0x164] sm:$0xf]
        %v388 = vld [vmem:[%s1 + $0x168] sm:$0xf]
        %v389 = vld [vmem:[%s1 + $0x16c] sm:$0xf]
        %v390 = vld [vmem:[%s1 + $0x170] sm:$0xf]
        %v391 = vld [vmem:[%s1 + $0x174] sm:$0xf]
        %v392 = vld [vmem:[%s1 + $0x178] sm:$0xf]
        %v393 = vld [vmem:[%s1 + $0x17c] sm:$0xf]
        %v394 = vld [vmem:[%s1 + $0x180] sm:$0xf]
        %v395 = vld [vmem:[%s1 + $0x184] sm:$0xf]
        %v396 = vld [vmem:[%s1 + $0x188] sm:$0xf]
        %v397 = vld [vmem:[%s1 + $0x18c] sm:$0xf]
        %v430 = vunpack.c.l.b16 %v266
        %v431 = vunpack.c.h.b16 %v266
        %v432 = vunpack.c.l.b16 %v267
        %v433 = vunpack.c.h.b16 %v267
        %v434 = vunpack.c.l.b16 %v268
        %v435 = vunpack.c.h.b16 %v268
        %v436 = vunpack.c.l.b16 %v269
        %v437 = vunpack.c.l.b16 %v270
        %v438 = vunpack.c.h.b16 %v270
        %v439 = vunpack.c.l.b16 %v271
        %v440 = vunpack.c.h.b16 %v271
        %v441 = vunpack.c.l.b16 %v272
        %v442 = vunpack.c.h.b16 %v272
        %v443 = vunpack.c.l.b16 %v273
        %v444 = vunpack.c.l.b16 %v274
        %v445 = vunpack.c.h.b16 %v274
        %v446 = vunpack.c.l.b16 %v275
        %v447 = vunpack.c.h.b16 %v275
        %v448 = vunpack.c.l.b16 %v276
        %v449 = vunpack.c.h.b16 %v276
        %v450 = vunpack.c.l.b16 %v277
        %v451 = vunpack.c.l.b16 %v278
        %v452 = vunpack.c.h.b16 %v278
        %v453 = vunpack.c.l.b16 %v279
        %v454 = vunpack.c.h.b16 %v279
        %v455 = vunpack.c.l.b16 %v280
        %v456 = vunpack.c.h.b16 %v280
        %v457 = vunpack.c.l.b16 %v281
        %v458 = vunpack.c.l.b16 %v282
        %v459 = vunpack.c.h.b16 %v282
        %v460 = vunpack.c.l.b16 %v283
        %v461 = vunpack.c.h.b16 %v283
        %v462 = vunpack.c.l.b16 %v284
        %v463 = vunpack.c.h.b16 %v284
        %v464 = vunpack.c.l.b16 %v285
        %v465 = vunpack.c.l.b16 %v286
        %v466 = vunpack.c.h.b16 %v286
        %v467 = vunpack.c.l.b16 %v287
        %v468 = vunpack.c.h.b16 %v287
        %v469 = vunpack.c.l.b16 %v288
        %v470 = vunpack.c.h.b16 %v288
        %v471 = vunpack.c.l.b16 %v289
        %v472 = vunpack.c.l.b16 %v290
        %v473 = vunpack.c.h.b16 %v290
        %v474 = vunpack.c.l.b16 %v291
        %v475 = vunpack.c.h.b16 %v291
        %v476 = vunpack.c.l.b16 %v292
        %v477 = vunpack.c.h.b16 %v292
        %v478 = vunpack.c.l.b16 %v293
        %v479 = vunpack.c.l.b16 %v294
        %v480 = vunpack.c.h.b16 %v294
        %v481 = vunpack.c.l.b16 %v295
        %v482 = vunpack.c.h.b16 %v295
        %v483 = vunpack.c.l.b16 %v296
        %v484 = vunpack.c.h.b16 %v296
        %v485 = vunpack.c.l.b16 %v297
        %v486 = vpack.c.b16 %v437, %v430
        %v487 = vpack.c.b16 %v438, %v431
        %v488 = vpack.c.b16 %v439, %v432
        %v489 = vpack.c.b16 %v440, %v433
        %v490 = vpack.c.b16 %v441, %v434
        %v491 = vpack.c.b16 %v442, %v435
        %v492 = vpack.c.b16 %v443, %v436
        %v493 = vpack.c.b16 %v451, %v444
        %v494 = vpack.c.b16 %v452, %v445
        %v495 = vpack.c.b16 %v453, %v446
        %v496 = vpack.c.b16 %v454, %v447
        %v497 = vpack.c.b16 %v455, %v448
        %v498 = vpack.c.b16 %v456, %v449
        %v499 = vpack.c.b16 %v457, %v450
        %v500 = vpack.c.b16 %v465, %v458
        %v501 = vpack.c.b16 %v466, %v459
        %v502 = vpack.c.b16 %v467, %v460
        %v503 = vpack.c.b16 %v468, %v461
        %v504 = vpack.c.b16 %v469, %v462
        %v505 = vpack.c.b16 %v470, %v463
        %v506 = vpack.c.b16 %v471, %v464
        %v507 = vpack.c.b16 %v479, %v472
        %v508 = vpack.c.b16 %v480, %v473
        %v509 = vpack.c.b16 %v481, %v474
        %v510 = vpack.c.b16 %v482, %v475
        %v511 = vpack.c.b16 %v483, %v476
        %v512 = vpack.c.b16 %v484, %v477
        %v513 = vpack.c.b16 %v485, %v478
        %v638 = vunpack.c.l.b16 %v298
        %v639 = vunpack.c.l.b16 %v299
        %v640 = vunpack.c.l.b16 %v300
        %v641 = vunpack.c.l.b16 %v301
        %v642 = vunpack.c.l.b16 %v302
        %v643 = vunpack.c.l.b16 %v303
        %v644 = vunpack.c.l.b16 %v304
        %v645 = vunpack.c.l.b16 %v305
        %v646 = vunpack.c.l.b16 %v306
        %v647 = vunpack.c.l.b16 %v307
        %v648 = vunpack.c.l.b16 %v308
        %v649 = vunpack.c.l.b16 %v309
        %v650 = vunpack.c.l.b16 %v310
        %v651 = vunpack.c.l.b16 %v311
        %v652 = vunpack.c.l.b16 %v312
        %v653 = vunpack.c.l.b16 %v313
        %v654 = vunpack.c.l.b16 %v314
        %v655 = vunpack.c.l.b16 %v315
        %v656 = vunpack.c.l.b16 %v316
        %v657 = vunpack.c.l.b16 %v317
        %v658 = vunpack.c.l.b16 %v318
        %v659 = vunpack.c.l.b16 %v319
        %v660 = vunpack.c.l.b16 %v320
        %v661 = vunpack.c.l.b16 %v321
        %v662 = vunpack.c.l.b16 %v322
        %v663 = vunpack.c.l.b16 %v323
        %v664 = vunpack.c.l.b16 %v324
        %v665 = vunpack.c.l.b16 %v325
        %v666 = vunpack.c.l.b16 %v326
        %v667 = vunpack.c.l.b16 %v327
        %v668 = vunpack.c.l.b16 %v328
        %v669 = vunpack.c.l.b16 %v329
        %v670 = vunpack.c.l.b16 %v330
        %v671 = vunpack.c.l.b16 %v331
        %v672 = vunpack.c.l.b16 %v332
        %v673 = vunpack.c.l.b16 %v333
        %v674 = vunpack.c.l.b16 %v334
        %v675 = vunpack.c.l.b16 %v335
        %v676 = vunpack.c.l.b16 %v336
        %v677 = vunpack.c.l.b16 %v337
        %v678 = vunpack.c.l.b16 %v338
        %v679 = vunpack.c.l.b16 %v339
        %v680 = vunpack.c.l.b16 %v340
        %v681 = vunpack.c.l.b16 %v341
        %v682 = vunpack.c.l.b16 %v342
        %v683 = vunpack.c.l.b16 %v343
        %v684 = vunpack.c.l.b16 %v344
        %v685 = vunpack.c.l.b16 %v345
        %v686 = vunpack.c.l.b16 %v346
        %v687 = vunpack.c.l.b16 %v347
        %v688 = vunpack.c.l.b16 %v348
        %v689 = vunpack.c.l.b16 %v349
        %v690 = vunpack.c.l.b16 %v350
        %v691 = vunpack.c.l.b16 %v351
        %v692 = vunpack.c.l.b16 %v352
        %v693 = vunpack.c.l.b16 %v353
        %v694 = vunpack.c.l.b16 %v354
        %v695 = vunpack.c.l.b16 %v355
        %v696 = vunpack.c.l.b16 %v356
        %v697 = vunpack.c.l.b16 %v357
        %v698 = vunpack.c.l.b16 %v358
        %v699 = vunpack.c.l.b16 %v359
        %v700 = vunpack.c.l.b16 %v360
        %v701 = vunpack.c.l.b16 %v361
        %v702 = vunpack.c.l.b16 %v362
        %v703 = vunpack.c.l.b16 %v363
        %v704 = vunpack.c.l.b16 %v364
        %v705 = vunpack.c.l.b16 %v365
        %v706 = vunpack.c.l.b16 %v366
        %v707 = vunpack.c.l.b16 %v367
        %v708 = vunpack.c.l.b16 %v368
        %v709 = vunpack.c.l.b16 %v369
        %v710 = vunpack.c.l.b16 %v370
        %v711 = vunpack.c.l.b16 %v371
        %v712 = vunpack.c.l.b16 %v372
        %v713 = vunpack.c.l.b16 %v373
        %v714 = vunpack.c.l.b16 %v374
        %v715 = vunpack.c.l.b16 %v375
        %v716 = vunpack.c.l.b16 %v376
        %v717 = vunpack.c.l.b16 %v377
        %v718 = vunpack.c.l.b16 %v378
        %v719 = vunpack.c.l.b16 %v379
        %v720 = vunpack.c.l.b16 %v380
        %v721 = vunpack.c.l.b16 %v381
        %v722 = vunpack.c.l.b16 %v382
        %v723 = vunpack.c.l.b16 %v383
        %v724 = vunpack.c.l.b16 %v384
        %v725 = vunpack.c.l.b16 %v385
        %v726 = vunpack.c.l.b16 %v386
        %v727 = vunpack.c.l.b16 %v387
        %v728 = vunpack.c.l.b16 %v388
        %v729 = vunpack.c.l.b16 %v389
        %v730 = vunpack.c.l.b16 %v390
        %v731 = vunpack.c.l.b16 %v391
        %v732 = vunpack.c.l.b16 %v392
        %v733 = vunpack.c.l.b16 %v393
        %v734 = vunpack.c.l.b16 %v394
        %v735 = vunpack.c.l.b16 %v395
        %v736 = vunpack.c.l.b16 %v396
        %v737 = vunpack.c.l.b16 %v397
        %v738 = vpack.c.b16 %v639, %v638
        %v739 = vpack.c.b16 %v641, %v640
        %v740 = vpack.c.b16 %v643, %v642
        %v741 = vpack.c.b16 %v645, %v644
        %v742 = vpack.c.b16 %v647, %v646
        %v743 = vpack.c.b16 %v649, %v648
        %v744 = vpack.c.b16 %v651, %v650
        %v745 = vpack.c.b16 %v653, %v652
        %v746 = vpack.c.b16 %v655, %v654
        %v747 = vpack.c.b16 %v657, %v656
        %v748 = vpack.c.b16 %v659, %v658
        %v749 = vpack.c.b16 %v661, %v660
        %v750 = vpack.c.b16 %v663, %v662
        %v751 = vpack.c.b16 %v665, %v664
        %v752 = vpack.c.b16 %v667, %v666
        %v753 = vpack.c.b16 %v669, %v668
        %v754 = vpack.c.b16 %v671, %v670
        %v755 = vpack.c.b16 %v673, %v672
        %v756 = vpack.c.b16 %v675, %v674
        %v757 = vpack.c.b16 %v677, %v676
        %v758 = vpack.c.b16 %v679, %v678
        %v759 = vpack.c.b16 %v681, %v680
        %v760 = vpack.c.b16 %v683, %v682
        %v761 = vpack.c.b16 %v685, %v684
        %v762 = vpack.c.b16 %v687, %v686
        %v763 = vpack.c.b16 %v689, %v688
        %v764 = vpack.c.b16 %v691, %v690
        %v765 = vpack.c.b16 %v693, %v692
        %v766 = vpack.c.b16 %v695, %v694
        %v767 = vpack.c.b16 %v697, %v696
        %v768 = vpack.c.b16 %v699, %v698
        %v769 = vpack.c.b16 %v701, %v700
        %v770 = vpack.c.b16 %v703, %v702
        %v771 = vpack.c.b16 %v705, %v704
        %v772 = vpack.c.b16 %v707, %v706
        %v773 = vpack.c.b16 %v709, %v708
        %v774 = vpack.c.b16 %v711, %v710
        %v775 = vpack.c.b16 %v713, %v712
        %v776 = vpack.c.b16 %v715, %v714
        %v777 = vpack.c.b16 %v717, %v716
        %v778 = vpack.c.b16 %v719, %v718
        %v779 = vpack.c.b16 %v721, %v720
        %v780 = vpack.c.b16 %v723, %v722
        %v781 = vpack.c.b16 %v725, %v724
        %v782 = vpack.c.b16 %v727, %v726
        %v783 = vpack.c.b16 %v729, %v728
        %v784 = vpack.c.b16 %v731, %v730
        %v785 = vpack.c.b16 %v733, %v732
        %v786 = vpack.c.b16 %v735, %v734
        %v787 = vpack.c.b16 %v737, %v736
        %vm838 = vcmask 261120
        %v840 = vsel %vm838, %v492, 0
        %v843 = vsel %vm838, %v499, 0
        %v846 = vsel %vm838, %v506, 0
        %v849 = vsel %vm838, %v513, 0
        %851 = vmatprep.subr.bf16.mxu0 0
        %852 = vmatpush1.bf16.msra.mxu0 %v738
        %853 = vmatprep.subr.bf16.mxu0 0
        %854 = vmatpush1.bf16.msra.mxu0 %v739
        %855 = vmatprep.subr.bf16.mxu0 0
        %856 = vmatpush1.bf16.msra.mxu0 %v740
        %857 = vmatprep.subr.bf16.mxu0 0
        %858 = vmatpush1.bf16.msra.mxu0 %v741
        %859 = vmatprep.subr.bf16.mxu0 0
        %860 = vmatpush1.bf16.msra.mxu0 %v742
        %861 = vmatprep.subr.bf16.mxu0 0
        %862 = vmatpush1.bf16.msra.mxu0 %v743
        %863 = vmatprep.subr.bf16.mxu0 0
        %864 = vmatpush1.bf16.msra.mxu0 %v744
        %865 = vmatprep.subr.bf16.mxu0 0
        %866 = vmatpush1.bf16.msra.mxu0 %v745
        %867 = vmatprep.subr.bf16.mxu0 0
        %868 = vmatpush1.bf16.msra.mxu0 %v746
        %869 = vmatprep.subr.bf16.mxu0 0
        %870 = vmatpush1.bf16.msra.mxu0 %v747
        %871 = vmatprep.subr.bf16.mxu0 0
        %872 = vmatpush1.bf16.msra.mxu0 %v748
        %873 = vmatprep.subr.bf16.mxu0 0
        %874 = vmatpush1.bf16.msra.mxu0 %v749
        %875 = vmatprep.subr.bf16.mxu0 0
        %876 = vmatpush1.bf16.msra.mxu0 %v750
        %877 = vmatprep.subr.bf16.mxu0 0
        %878 = vmatpush1.bf16.msra.mxu0 %v751
        %879 = vmatprep.subr.bf16.mxu0 0
        %880 = vmatpush1.bf16.msra.mxu0 %v752
        %881 = vmatprep.subr.bf16.mxu0 0
        %882 = vmatpush1.bf16.msra.mxu0 %v753
        %883 = vmatprep.mubr.bf16.mxu0 %v487
        %884 = vmatmul.mubr.bf16.gmra.mrb[0].mxu0 %v486
        %v885 = vpop.f32.mrb[0].mxu0
        %v886 = vadd.f32 0.0, %v885
        %v887 = vpop.f32.mrb[0].mxu0
        %v888 = vpop.f32.mrb[0].mxu0
        %v889 = vadd.f32 0.0, %v888
        %v890 = vpop.f32.mrb[0].mxu0
        %891 = vmatprep.mubr.bf16.mxu0 %v494
        %892 = vmatmul.mubr.bf16.gmra.mrb[0].mxu0 %v493
        %v893 = vpop.f32.mrb[0].mxu0
        %v894 = vadd.f32 0.0, %v893
        %v895 = vpop.f32.mrb[0].mxu0
        %v896 = vpop.f32.mrb[0].mxu0
        %v897 = vadd.f32 0.0, %v896
        %v898 = vpop.f32.mrb[0].mxu0
        %899 = vmatprep.mubr.bf16.mxu0 %v501
        %900 = vmatmul.mubr.bf16.gmra.mrb[0].mxu0 %v500
        %v901 = vpop.f32.mrb[0].mxu0
        %v902 = vadd.f32 0.0, %v901
        %v903 = vpop.f32.mrb[0].mxu0
        %v904 = vpop.f32.mrb[0].mxu0
        %v905 = vadd.f32 0.0, %v904
        %v906 = vpop.f32.mrb[0].mxu0
        %907 = vmatprep.mubr.bf16.mxu0 %v508
        %908 = vmatmul.mubr.bf16.gmra.mrb[0].mxu0 %v507
        %v909 = vpop.f32.mrb[0].mxu0
        %v910 = vadd.f32 0.0, %v909
        %v911 = vpop.f32.mrb[0].mxu0
        %v912 = vpop.f32.mrb[0].mxu0
        %v913 = vadd.f32 0.0, %v912
        %v914 = vpop.f32.mrb[0].mxu0
        %915 = vdwg.mxu0
        %916 = vmatprep.subr.bf16.mxu0 0
        %917 = vmatpush1.bf16.msra.mxu0 %v754
        %918 = vmatprep.subr.bf16.mxu0 0
        %919 = vmatpush1.bf16.msra.mxu0 %v755
        %920 = vmatprep.subr.bf16.mxu0 0
        %921 = vmatpush1.bf16.msra.mxu0 %v756
        %922 = vmatprep.subr.bf16.mxu0 0
        %923 = vmatpush1.bf16.msra.mxu0 %v757
        %924 = vmatprep.subr.bf16.mxu0 0
        %925 = vmatpush1.bf16.msra.mxu0 %v758
        %926 = vmatprep.subr.bf16.mxu0 0
        %927 = vmatpush1.bf16.msra.mxu0 %v759
        %928 = vmatprep.subr.bf16.mxu0 0
        %929 = vmatpush1.bf16.msra.mxu0 %v760
        %930 = vmatprep.subr.bf16.mxu0 0
        %931 = vmatpush1.bf16.msra.mxu0 %v761
        %932 = vmatprep.subr.bf16.mxu0 0
        %933 = vmatpush1.bf16.msra.mxu0 %v762
        %934 = vmatprep.subr.bf16.mxu0 0
        %935 = vmatpush1.bf16.msra.mxu0 %v763
        %936 = vmatprep.subr.bf16.mxu0 0
        %937 = vmatpush1.bf16.msra.mxu0 %v764
        %938 = vmatprep.subr.bf16.mxu0 0
        %939 = vmatpush1.bf16.msra.mxu0 %v765
        %940 = vmatprep.subr.bf16.mxu0 0
        %941 = vmatpush1.bf16.msra.mxu0 %v766
        %942 = vmatprep.subr.bf16.mxu0 0
        %943 = vmatpush1.bf16.msra.mxu0 %v767
        %944 = vmatprep.subr.bf16.mxu0 0
        %945 = vmatpush1.bf16.msra.mxu0 %v768
        %946 = vmatprep.subr.bf16.mxu0 0
        %947 = vmatpush1.bf16.msra.mxu0 %v769
        %948 = vmatprep.mubr.bf16.mxu0 %v489
        %949 = vmatmul.mubr.bf16.gmra.mrb[0].mxu0 %v488
        %v950 = vpop.f32.mrb[0].mxu0
        %v951 = vadd.f32 %v886, %v950
        %v952 = vpop.f32.mrb[0].mxu0
        %v953 = vpop.f32.mrb[0].mxu0
        %v954 = vadd.f32 %v889, %v953
        %v955 = vpop.f32.mrb[0].mxu0
        %956 = vmatprep.mubr.bf16.mxu0 %v496
        %957 = vmatmul.mubr.bf16.gmra.mrb[0].mxu0 %v495
        %v958 = vpop.f32.mrb[0].mxu0
        %v959 = vadd.f32 %v894, %v958
        %v960 = vpop.f32.mrb[0].mxu0
        %v961 = vpop.f32.mrb[0].mxu0
        %v962 = vadd.f32 %v897, %v961
        %v963 = vpop.f32.mrb[0].mxu0
        %964 = vmatprep.mubr.bf16.mxu0 %v503
        %965 = vmatmul.mubr.bf16.gmra.mrb[0].mxu0 %v502
        %v966 = vpop.f32.mrb[0].mxu0
        %v967 = vadd.f32 %v902, %v966
        %v968 = vpop.f32.mrb[0].mxu0
        %v969 = vpop.f32.mrb[0].mxu0
        %v970 = vadd.f32 %v905, %v969
        %v971 = vpop.f32.mrb[0].mxu0
        %972 = vmatprep.mubr.bf16.mxu0 %v510
        %973 = vmatmul.mubr.bf16.gmra.mrb[0].mxu0 %v509
        %v974 = vpop.f32.mrb[0].mxu0
        %v975 = vadd.f32 %v910, %v974
        %v976 = vpop.f32.mrb[0].mxu0
        %v977 = vpop.f32.mrb[0].mxu0
        %v978 = vadd.f32 %v913, %v977
        %v979 = vpop.f32.mrb[0].mxu0
        %980 = vdwg.mxu0
        %981 = vmatprep.subr.bf16.mxu0 0
        %982 = vmatpush1.bf16.msra.mxu0 %v770
        %983 = vmatprep.subr.bf16.mxu0 0
        %984 = vmatpush1.bf16.msra.mxu0 %v771
        %985 = vmatprep.subr.bf16.mxu0 0
        %986 = vmatpush1.bf16.msra.mxu0 %v772
        %987 = vmatprep.subr.bf16.mxu0 0
        %988 = vmatpush1.bf16.msra.mxu0 %v773
        %989 = vmatprep.subr.bf16.mxu0 0
        %990 = vmatpush1.bf16.msra.mxu0 %v774
        %991 = vmatprep.subr.bf16.mxu0 0
        %992 = vmatpush1.bf16.msra.mxu0 %v775
        %993 = vmatprep.subr.bf16.mxu0 0
        %994 = vmatpush1.bf16.msra.mxu0 %v776
        %995 = vmatprep.subr.bf16.mxu0 0
        %996 = vmatpush1.bf16.msra.mxu0 %v777
        %997 = vmatprep.subr.bf16.mxu0 0
        %998 = vmatpush1.bf16.msra.mxu0 %v778
        %999 = vmatprep.subr.bf16.mxu0 0
        %1000 = vmatpush1.bf16.msra.mxu0 %v779
        %1001 = vmatprep.subr.bf16.mxu0 0
        %1002 = vmatpush1.bf16.msra.mxu0 %v780
        %1003 = vmatprep.subr.bf16.mxu0 0
        %1004 = vmatpush1.bf16.msra.mxu0 %v781
        %1005 = vmatprep.subr.bf16.mxu0 0
        %1006 = vmatpush1.bf16.msra.mxu0 %v782
        %1007 = vmatprep.subr.bf16.mxu0 0
        %1008 = vmatpush1.bf16.msra.mxu0 %v783
        %1009 = vmatprep.subr.bf16.mxu0 0
        %1010 = vmatpush1.bf16.msra.mxu0 %v784
        %1011 = vmatprep.subr.bf16.mxu0 0
        %1012 = vmatpush1.bf16.msra.mxu0 %v785
        %1013 = vmatprep.mubr.bf16.mxu0 %v491
        %1014 = vmatmul.mubr.bf16.gmra.mrb[0].mxu0 %v490
        %v1015 = vpop.f32.mrb[0].mxu0
        %v1016 = vadd.f32 %v951, %v1015
        %v1017 = vpop.f32.mrb[0].mxu0
        %v1018 = vpop.f32.mrb[0].mxu0
        %v1019 = vadd.f32 %v954, %v1018
        %v1020 = vpop.f32.mrb[0].mxu0
        %1021 = vmatprep.mubr.bf16.mxu0 %v498
        %1022 = vmatmul.mubr.bf16.gmra.mrb[0].mxu0 %v497
        %v1023 = vpop.f32.mrb[0].mxu0
        %v1024 = vadd.f32 %v959, %v1023
        %v1025 = vpop.f32.mrb[0].mxu0
        %v1026 = vpop.f32.mrb[0].mxu0
        %v1027 = vadd.f32 %v962, %v1026
        %v1028 = vpop.f32.mrb[0].mxu0
        %1029 = vmatprep.mubr.bf16.mxu0 %v505
        %1030 = vmatmul.mubr.bf16.gmra.mrb[0].mxu0 %v504
        %v1031 = vpop.f32.mrb[0].mxu0
        %v1032 = vadd.f32 %v967, %v1031
        %v1033 = vpop.f32.mrb[0].mxu0
        %v1034 = vpop.f32.mrb[0].mxu0
        %v1035 = vadd.f32 %v970, %v1034
        %v1036 = vpop.f32.mrb[0].mxu0
        %1037 = vmatprep.mubr.bf16.mxu0 %v512
        %1038 = vmatmul.mubr.bf16.gmra.mrb[0].mxu0 %v511
        %v1039 = vpop.f32.mrb[0].mxu0
        %v1040 = vadd.f32 %v975, %v1039
        %v1041 = vpop.f32.mrb[0].mxu0
        %v1042 = vpop.f32.mrb[0].mxu0
        %v1043 = vadd.f32 %v978, %v1042
        %v1044 = vpop.f32.mrb[0].mxu0
        %1045 = vdwg.mxu0
        %1046 = vmatprep.subr.bf16.mxu0 0
        %1047 = vmatpush1.bf16.msra.mxu0 %v786
        %1048 = vmatprep.subr.bf16.mxu0 0
        %1049 = vmatpush1.bf16.msra.mxu0 %v787
        %1050 = vmatprep.subr.bf16.mxu0 0
        %1051 = vmatpush1.bf16.msra.mxu0 0
        %1052 = vmatprep.subr.bf16.mxu0 0
        %1053 = vmatpush1.bf16.msra.mxu0 0
        %1054 = vmatprep.subr.bf16.mxu0 0
        %1055 = vmatpush1.bf16.msra.mxu0 0
        %1056 = vmatprep.subr.bf16.mxu0 0
        %1057 = vmatpush1.bf16.msra.mxu0 0
        %1058 = vmatprep.subr.bf16.mxu0 0
        %1059 = vmatpush1.bf16.msra.mxu0 0
        %1060 = vmatprep.subr.bf16.mxu0 0
        %1061 = vmatpush1.bf16.msra.mxu0 0
        %1062 = vmatprep.subr.bf16.mxu0 0
        %1063 = vmatpush1.bf16.msra.mxu0 0
        %1064 = vmatprep.subr.bf16.mxu0 0
        %1065 = vmatpush1.bf16.msra.mxu0 0
        %1066 = vmatprep.subr.bf16.mxu0 0
        %1067 = vmatpush1.bf16.msra.mxu0 0
        %1068 = vmatprep.subr.bf16.mxu0 0
        %1069 = vmatpush1.bf16.msra.mxu0 0
        %1070 = vmatprep.subr.bf16.mxu0 0
        %1071 = vmatpush1.bf16.msra.mxu0 0
        %1072 = vmatprep.subr.bf16.mxu0 0
        %1073 = vmatpush1.bf16.msra.mxu0 0
        %1074 = vmatprep.subr.bf16.mxu0 0
        %1075 = vmatpush1.bf16.msra.mxu0 0
        %1076 = vmatprep.subr.bf16.mxu0 0
        %1077 = vmatpush1.bf16.msra.mxu0 0
        %1078 = vmatprep.mubr.bf16.mxu0 0
        %1079 = vmatmul.mubr.bf16.gmra.mrb[0].mxu0 %v840
        %v1080 = vpop.f32.mrb[0].mxu0
        %v1081 = vadd.f32 %v1016, %v1080
        %v1082 = vpop.f32.mrb[0].mxu0
        %v1083 = vpop.f32.mrb[0].mxu0
        %v1084 = vadd.f32 %v1019, %v1083
        %v1085 = vpop.f32.mrb[0].mxu0
        %1086 = vmatprep.mubr.bf16.mxu0 0
        %1087 = vmatmul.mubr.bf16.gmra.mrb[0].mxu0 %v843
        %v1088 = vpop.f32.mrb[0].mxu0
        %v1089 = vadd.f32 %v1024, %v1088
        %v1090 = vpop.f32.mrb[0].mxu0
        %v1091 = vpop.f32.mrb[0].mxu0
        %v1092 = vadd.f32 %v1027, %v1091
        %v1093 = vpop.f32.mrb[0].mxu0
        %1094 = vmatprep.mubr.bf16.mxu0 0
        %1095 = vmatmul.mubr.bf16.gmra.mrb[0].mxu0 %v846
        %v1096 = vpop.f32.mrb[0].mxu0
        %v1097 = vadd.f32 %v1032, %v1096
        %v1098 = vpop.f32.mrb[0].mxu0
        %v1099 = vpop.f32.mrb[0].mxu0
        %v1100 = vadd.f32 %v1035, %v1099
        %v1101 = vpop.f32.mrb[0].mxu0
        %1102 = vmatprep.mubr.bf16.mxu0 0
        %1103 = vmatmul.mubr.bf16.gmra.mrb[0].mxu0 %v849
        %v1104 = vpop.f32.mrb[0].mxu0
        %v1105 = vadd.f32 %v1040, %v1104
        %v1106 = vpop.f32.mrb[0].mxu0
        %v1107 = vpop.f32.mrb[0].mxu0
        %v1108 = vadd.f32 %v1043, %v1107
        %v1109 = vpop.f32.mrb[0].mxu0
        %1110 = vdwg.mxu0
        %vm1111 = vcmask 523264
        %v1112 = vsel %vm1111, %v1081, -inf
        %v1113 = vsel %vm1111, %v1089, -inf
        %v1114 = vsel %vm1111, %v1097, -inf
        %v1115 = vmax.f32 %v1112, %v1114
        %v1116 = vsel %vm1111, %v1105, -inf
        %v1117 = vmax.f32 %v1113, %v1116
        %v1118 = vmax.f32 %v1115, %v1117
        %v1119 = vsel %vm1111, %v1084, -inf
        %v1120 = vsel %vm1111, %v1092, -inf
        %v1121 = vsel %vm1111, %v1100, -inf
        %v1122 = vmax.f32 %v1119, %v1121
        %v1123 = vsel %vm1111, %v1108, -inf
        %v1124 = vmax.f32 %v1120, %v1123
        %v1125 = vmax.f32 %v1122, %v1124
        %v1126 = vld [vmem:[%s2] sm:$0x1]
        %v1128 = vlaneseq
        %v1129 = vshrl.u32 %v1128, 7
        %v1130 = vsub.s32 0, %v1129
        %v1131 = vrot.slane %v1126, %v1130
        %v1133 = vadd.f32 %v1118, %v1131
        %v1134 = vadd.f32 %v1125, %v1131
        %v1135 = vmax.f32 %v1133, 0.0
        %v1136 = vmax.f32 %v1134, 0.0
        %v1137 = vpack.c.bf16 %v1136, %v1135
        %v1139 = vunpack.c.l.b16 %v1137
        %v1140 = vunpack.c.h.b16 %v1137
        %v1141 = vpack.c.b16 %v1139, %v1139
        %v1142 = vpack.c.b16 %v1140, %v1140
        %vm1145 = vcmask 519168
        %1146 = vst.msk [vmem:[%s263] sm:$0xf] %vm1145, %v1141
        %1147 = vst.msk [vmem:[%s263 + $0x4] sm:$0xf] %vm1145, %v1142
        %s1148 = smul.u32 2, %s14
        %p1149 = scmp.lt.s32.totalorder %s1148, 3
        %s1150 = scalar_select %p1149, %s1148, 3
        %s1151 = smul.addr %s1150, 4
        %s1152 = scalar_lea.vmem %s3, %s1151
        // Predicated region
        $region59: #{lenet_forward.4} parent=53 // pred_check
          %p1153 = pneg %p100
        $region60: #{lenet_forward.4} parent=53 // pred_check_branch
          %1155 = sbr.rel (%p1153) target = $region62
        $region61: #{lenet_forward.4} parent=53 // pred_region
          %s1156 = smul.u32 2, %s14
        $region62: #{lenet_forward.4} parent=53 // pred_fallthru
          _
      $region54: #{lenet_forward.4} parent=5 // pred_fallthru
        _
      %p1157 = scmp.le.s32.totalorder 2, %s9
      // Predicated region
      $region63: #{lenet_forward.4} parent=5 // pred_check
        %p1158 = pneg %p1157
      $region64: #{lenet_forward.4} parent=5 // pred_check_branch
        %1160 = sbr.rel (%p1158) target = $region66
      $region65: #{lenet_forward.4} parent=5 // pred_region
        %s1161 = ssub.s32 %s9, 2
        // Predicated region
        $region67: #{lenet_forward.4} parent=65 // pred_check
          %p1162 = pneg %p106
        $region68: #{lenet_forward.4} parent=65 // pred_check_branch
          %1164 = sbr.rel (%p1162) target = $region70
        $region69: #{lenet_forward.4} parent=65 // pred_region
          %s1165 = smul.u32 2, %s15
          %p1166 = scmp.lt.s32.totalorder %s1165, 3
          %s1167 = scalar_select %p1166, %s1165, 3
          %s1168 = smul.addr %s1167, 4
          %s1169 = scalar_lea.vmem %s3, %s1168
        $region70: #{lenet_forward.4} parent=65 // pred_fallthru
          _
      $region66: #{lenet_forward.4} parent=5 // pred_fallthru
        _
    $region6: #{lenet_forward.4} parent=1 // loop_footer
      %s13 = sadd.s32 1, %s9
    $region7: #{lenet_forward.4} parent=1 // loop_footer_branch
      %8 = sbr.rel target = $region3
    $region8: #{lenet_forward.4} parent=1 // loop_exit
      _

// kernel: lenet_forward.5
$region0: #{lenet_forward.5}
  #allocation0 [shape = 'u32[]', space=smem, size = 0x4, offset = 0x4, fixed_abs, tag = 'smem constant byte address 0x4 - core index']
  #allocation1 [shape = 'u32[144,128]{1,0:T(1,128)}', space=vmem, size = 0x12000, scoped, tag = 'internal scratch']
  %s0 = inlined_call_operand.vmem [shape: bf16[16,1024], index: 0, kind: input, shape index: {}]
  %s1 = inlined_call_operand.vmem [shape: bf16[1024,512], index: 1, kind: input, shape index: {}]
  %s2 = inlined_call_operand.vmem [shape: f32[1,512], index: 2, kind: input, shape index: {}]
  %s3 = inlined_call_operand.vmem [shape: bf16[512,128], index: 3, kind: input, shape index: {}]
  %s4 = inlined_call_operand.vmem [shape: f32[1,128], index: 4, kind: input, shape index: {}]
  %s5 = inlined_call_operand.vmem [shape: f32[16,128], index: 5, kind: output, shape index: {}]
  %s6 = sld [smem:[#allocation0]]
  $region30: #{lenet_forward.5} parent=0
    _
  %s8 = ssub.s32 1, %s6
  %s9 = scalar_select 0, %s8, %s6
  // Predicated region
  $region2: #{lenet_forward.5} parent=0 // pred_check
    _
  $region3: #{lenet_forward.5} parent=0 // pred_check_branch
    %11 = sbr.rel (0) target = $region5
  $region4: #{lenet_forward.5} parent=0 // pred_region
    _
  $region5: #{lenet_forward.5} parent=0 // pred_fallthru
    _
  // Predicated region
  $region6: #{lenet_forward.5} parent=0 // pred_check
    _
  $region7: #{lenet_forward.5} parent=0 // pred_check_branch
    %13 = sbr.rel (0) target = $region9
  $region8: #{lenet_forward.5} parent=0 // pred_region
    _
  $region9: #{lenet_forward.5} parent=0 // pred_fallthru
    _
  // Predicated region
  $region10: #{lenet_forward.5} parent=0 // pred_check
    _
  $region11: #{lenet_forward.5} parent=0 // pred_check_branch
    %15 = sbr.rel (0) target = $region13
  $region12: #{lenet_forward.5} parent=0 // pred_region
    _
  $region13: #{lenet_forward.5} parent=0 // pred_fallthru
    _
  // Predicated region
  $region14: #{lenet_forward.5} parent=0 // pred_check
    _
  $region15: #{lenet_forward.5} parent=0 // pred_check_branch
    %17 = sbr.rel (0) target = $region17
  $region16: #{lenet_forward.5} parent=0 // pred_region
    _
  $region17: #{lenet_forward.5} parent=0 // pred_fallthru
    _
  // Predicated region
  $region18: #{lenet_forward.5} parent=0 // pred_check
    _
  $region19: #{lenet_forward.5} parent=0 // pred_check_branch
    %19 = sbr.rel (0) target = $region21
  $region20: #{lenet_forward.5} parent=0 // pred_region
    _
  $region21: #{lenet_forward.5} parent=0 // pred_fallthru
    _
  %v21 = vld [vmem:[%s0] sm:$0xff]
  %v22 = vld [vmem:[%s0 + $0x8] sm:$0xff]
  %v23 = vld [vmem:[%s0 + $0x10] sm:$0xff]
  %v24 = vld [vmem:[%s0 + $0x18] sm:$0xff]
  %v25 = vld [vmem:[%s0 + $0x20] sm:$0xff]
  %v26 = vld [vmem:[%s0 + $0x28] sm:$0xff]
  %v27 = vld [vmem:[%s0 + $0x30] sm:$0xff]
  %v28 = vld [vmem:[%s0 + $0x38] sm:$0xff]
  %v29 = vld [vmem:[%s1] sm:$0xff]
  %v30 = vld [vmem:[%s1 + $0x8] sm:$0xff]
  %v31 = vld [vmem:[%s1 + $0x10] sm:$0xff]
  %v32 = vld [vmem:[%s1 + $0x18] sm:$0xff]
  %v33 = vld [vmem:[%s1 + $0x20] sm:$0xff]
  %v34 = vld [vmem:[%s1 + $0x28] sm:$0xff]
  %v35 = vld [vmem:[%s1 + $0x30] sm:$0xff]
  %v36 = vld [vmem:[%s1 + $0x38] sm:$0xff]
  %v37 = vld [vmem:[%s1 + $0x40] sm:$0xff]
  %v38 = vld [vmem:[%s1 + $0x48] sm:$0xff]
  %v39 = vld [vmem:[%s1 + $0x50] sm:$0xff]
  %v40 = vld [vmem:[%s1 + $0x58] sm:$0xff]
  %v41 = vld [vmem:[%s1 + $0x60] sm:$0xff]
  %v42 = vld [vmem:[%s1 + $0x68] sm:$0xff]
  %v43 = vld [vmem:[%s1 + $0x70] sm:$0xff]
  %v44 = vld [vmem:[%s1 + $0x78] sm:$0xff]
  %v45 = vld [vmem:[%s1 + $0x80] sm:$0xff]
  %v46 = vld [vmem:[%s1 + $0x88] sm:$0xff]
  %v47 = vld [vmem:[%s1 + $0x90] sm:$0xff]
  %v48 = vld [vmem:[%s1 + $0x98] sm:$0xff]
  %v49 = vld [vmem:[%s1 + $0xa0] sm:$0xff]
  %v50 = vld [vmem:[%s1 + $0xa8] sm:$0xff]
  %v51 = vld [vmem:[%s1 + $0xb0] sm:$0xff]
  %v52 = vld [vmem:[%s1 + $0xb8] sm:$0xff]
  %v53 = vld [vmem:[%s1 + $0xc0] sm:$0xff]
  %v54 = vld [vmem:[%s1 + $0xc8] sm:$0xff]
  %v55 = vld [vmem:[%s1 + $0xd0] sm:$0xff]
  %v56 = vld [vmem:[%s1 + $0xd8] sm:$0xff]
  %v57 = vld [vmem:[%s1 + $0xe0] sm:$0xff]
  %v58 = vld [vmem:[%s1 + $0xe8] sm:$0xff]
  %v59 = vld [vmem:[%s1 + $0xf0] sm:$0xff]
  %v60 = vld [vmem:[%s1 + $0xf8] sm:$0xff]
  %v61 = vld [vmem:[%s1 + $0x100] sm:$0xff]
  %v62 = vld [vmem:[%s1 + $0x108] sm:$0xff]
  %v63 = vld [vmem:[%s1 + $0x110] sm:$0xff]
  %v64 = vld [vmem:[%s1 + $0x118] sm:$0xff]
  %v65 = vld [vmem:[%s1 + $0x120] sm:$0xff]
  %v66 = vld [vmem:[%s1 + $0x128] sm:$0xff]
  %v67 = vld [vmem:[%s1 + $0x130] sm:$0xff]
  %v68 = vld [vmem:[%s1 + $0x138] sm:$0xff]
  %v69 = vld [vmem:[%s1 + $0x140] sm:$0xff]
  %v70 = vld [vmem:[%s1 + $0x148] sm:$0xff]
  %v71 = vld [vmem:[%s1 + $0x150] sm:$0xff]
  %v72 = vld [vmem:[%s1 + $0x158] sm:$0xff]
  %v73 = vld [vmem:[%s1 + $0x160] sm:$0xff]
  %v74 = vld [vmem:[%s1 + $0x168] sm:$0xff]
  %v75 = vld [vmem:[%s1 + $0x170] sm:$0xff]
  %v76 = vld [vmem:[%s1 + $0x178] sm:$0xff]
  %v77 = vld [vmem:[%s1 + $0x180] sm:$0xff]
  %v78 = vld [vmem:[%s1 + $0x188] sm:$0xff]
  %v79 = vld [vmem:[%s1 + $0x190] sm:$0xff]
  %v80 = vld [vmem:[%s1 + $0x198] sm:$0xff]
  %v81 = vld [vmem:[%s1 + $0x1a0] sm:$0xff]
  %v82 = vld [vmem:[%s1 + $0x1a8] sm:$0xff]
  %v83 = vld [vmem:[%s1 + $0x1b0] sm:$0xff]
  %v84 = vld [vmem:[%s1 + $0x1b8] sm:$0xff]
  %v85 = vld [vmem:[%s1 + $0x1c0] sm:$0xff]
  %v86 = vld [vmem:[%s1 + $0x1c8] sm:$0xff]
  %v87 = vld [vmem:[%s1 + $0x1d0] sm:$0xff]
  %v88 = vld [vmem:[%s1 + $0x1d8] sm:$0xff]
  %v89 = vld [vmem:[%s1 + $0x1e0] sm:$0xff]
  %v90 = vld [vmem:[%s1 + $0x1e8] sm:$0xff]
  %v91 = vld [vmem:[%s1 + $0x1f0] sm:$0xff]
  %v92 = vld [vmem:[%s1 + $0x1f8] sm:$0xff]
  %v93 = vld [vmem:[%s1 + $0x200] sm:$0xff]
  %v94 = vld [vmem:[%s1 + $0x208] sm:$0xff]
  %v95 = vld [vmem:[%s1 + $0x210] sm:$0xff]
  %v96 = vld [vmem:[%s1 + $0x218] sm:$0xff]
  %v97 = vld [vmem:[%s1 + $0x220] sm:$0xff]
  %v98 = vld [vmem:[%s1 + $0x228] sm:$0xff]
  %v99 = vld [vmem:[%s1 + $0x230] sm:$0xff]
  %v100 = vld [vmem:[%s1 + $0x238] sm:$0xff]
  %v101 = vld [vmem:[%s1 + $0x240] sm:$0xff]
  %v102 = vld [vmem:[%s1 + $0x248] sm:$0xff]
  %v103 = vld [vmem:[%s1 + $0x250] sm:$0xff]
  %v104 = vld [vmem:[%s1 + $0x258] sm:$0xff]
  %v105 = vld [vmem:[%s1 + $0x260] sm:$0xff]
  %v106 = vld [vmem:[%s1 + $0x268] sm:$0xff]
  %v107 = vld [vmem:[%s1 + $0x270] sm:$0xff]
  %v108 = vld [vmem:[%s1 + $0x278] sm:$0xff]
  %v109 = vld [vmem:[%s1 + $0x280] sm:$0xff]
  %v110 = vld [vmem:[%s1 + $0x288] sm:$0xff]
  %v111 = vld [vmem:[%s1 + $0x290] sm:$0xff]
  %v112 = vld [vmem:[%s1 + $0x298] sm:$0xff]
  %v113 = vld [vmem:[%s1 + $0x2a0] sm:$0xff]
  %v114 = vld [vmem:[%s1 + $0x2a8] sm:$0xff]
  %v115 = vld [vmem:[%s1 + $0x2b0] sm:$0xff]
  %v116 = vld [vmem:[%s1 + $0x2b8] sm:$0xff]
  %v117 = vld [vmem:[%s1 + $0x2c0] sm:$0xff]
  %v118 = vld [vmem:[%s1 + $0x2c8] sm:$0xff]
  %v119 = vld [vmem:[%s1 + $0x2d0] sm:$0xff]
  %v120 = vld [vmem:[%s1 + $0x2d8] sm:$0xff]
  %v121 = vld [vmem:[%s1 + $0x2e0] sm:$0xff]
  %v122 = vld [vmem:[%s1 + $0x2e8] sm:$0xff]
  %v123 = vld [vmem:[%s1 + $0x2f0] sm:$0xff]
  %v124 = vld [vmem:[%s1 + $0x2f8] sm:$0xff]
  %v125 = vld [vmem:[%s1 + $0x300] sm:$0xff]
  %v126 = vld [vmem:[%s1 + $0x308] sm:$0xff]
  %v127 = vld [vmem:[%s1 + $0x310] sm:$0xff]
  %v128 = vld [vmem:[%s1 + $0x318] sm:$0xff]
  %v129 = vld [vmem:[%s1 + $0x320] sm:$0xff]
  %v130 = vld [vmem:[%s1 + $0x328] sm:$0xff]
  %v131 = vld [vmem:[%s1 + $0x330] sm:$0xff]
  %v132 = vld [vmem:[%s1 + $0x338] sm:$0xff]
  %v133 = vld [vmem:[%s1 + $0x340] sm:$0xff]
  %v134 = vld [vmem:[%s1 + $0x348] sm:$0xff]
  %v135 = vld [vmem:[%s1 + $0x350] sm:$0xff]
  %v136 = vld [vmem:[%s1 + $0x358] sm:$0xff]
  %v137 = vld [vmem:[%s1 + $0x360] sm:$0xff]
  %v138 = vld [vmem:[%s1 + $0x368] sm:$0xff]
  %v139 = vld [vmem:[%s1 + $0x370] sm:$0xff]
  %v140 = vld [vmem:[%s1 + $0x378] sm:$0xff]
  %v141 = vld [vmem:[%s1 + $0x380] sm:$0xff]
  %v142 = vld [vmem:[%s1 + $0x388] sm:$0xff]
  %v143 = vld [vmem:[%s1 + $0x390] sm:$0xff]
  %v144 = vld [vmem:[%s1 + $0x398] sm:$0xff]
  %v145 = vld [vmem:[%s1 + $0x3a0] sm:$0xff]
  %v146 = vld [vmem:[%s1 + $0x3a8] sm:$0xff]
  %v147 = vld [vmem:[%s1 + $0x3b0] sm:$0xff]
  %v148 = vld [vmem:[%s1 + $0x3b8] sm:$0xff]
  %v149 = vld [vmem:[%s1 + $0x3c0] sm:$0xff]
  %v150 = vld [vmem:[%s1 + $0x3c8] sm:$0xff]
  %v151 = vld [vmem:[%s1 + $0x3d0] sm:$0xff]
  %v152 = vld [vmem:[%s1 + $0x3d8] sm:$0xff]
  %v153 = vld [vmem:[%s1 + $0x3e0] sm:$0xff]
  %v154 = vld [vmem:[%s1 + $0x3e8] sm:$0xff]
  %v155 = vld [vmem:[%s1 + $0x3f0] sm:$0xff]
  %v156 = vld [vmem:[%s1 + $0x3f8] sm:$0xff]
  %v157 = vld [vmem:[%s1 + $0x400] sm:$0xff]
  %v158 = vld [vmem:[%s1 + $0x408] sm:$0xff]
  %v159 = vld [vmem:[%s1 + $0x410] sm:$0xff]
  %v160 = vld [vmem:[%s1 + $0x418] sm:$0xff]
  %v161 = vld [vmem:[%s1 + $0x420] sm:$0xff]
  %v162 = vld [vmem:[%s1 + $0x428] sm:$0xff]
  %v163 = vld [vmem:[%s1 + $0x430] sm:$0xff]
  %v164 = vld [vmem:[%s1 + $0x438] sm:$0xff]
  %v165 = vld [vmem:[%s1 + $0x440] sm:$0xff]
  %v166 = vld [vmem:[%s1 + $0x448] sm:$0xff]
  %v167 = vld [vmem:[%s1 + $0x450] sm:$0xff]
  %v168 = vld [vmem:[%s1 + $0x458] sm:$0xff]
  %v169 = vld [vmem:[%s1 + $0x460] sm:$0xff]
  %v170 = vld [vmem:[%s1 + $0x468] sm:$0xff]
  %v171 = vld [vmem:[%s1 + $0x470] sm:$0xff]
  %v172 = vld [vmem:[%s1 + $0x478] sm:$0xff]
  %v173 = vld [vmem:[%s1 + $0x480] sm:$0xff]
  %v174 = vld [vmem:[%s1 + $0x488] sm:$0xff]
  %v175 = vld [vmem:[%s1 + $0x490] sm:$0xff]
  %v176 = vld [vmem:[%s1 + $0x498] sm:$0xff]
  %v177 = vld [vmem:[%s1 + $0x4a0] sm:$0xff]
  %v178 = vld [vmem:[%s1 + $0x4a8] sm:$0xff]
  %v179 = vld [vmem:[%s1 + $0x4b0] sm:$0xff]
  %v180 = vld [vmem:[%s1 + $0x4b8] sm:$0xff]
  %v181 = vld [vmem:[%s1 + $0x4c0] sm:$0xff]
  %v182 = vld [vmem:[%s1 + $0x4c8] sm:$0xff]
  %v183 = vld [vmem:[%s1 + $0x4d0] sm:$0xff]
  %v184 = vld [vmem:[%s1 + $0x4d8] sm:$0xff]
  %v185 = vld [vmem:[%s1 + $0x4e0] sm:$0xff]
  %v186 = vld [vmem:[%s1 + $0x4e8] sm:$0xff]
  %v187 = vld [vmem:[%s1 + $0x4f0] sm:$0xff]
  %v188 = vld [vmem:[%s1 + $0x4f8] sm:$0xff]
  %v189 = vld [vmem:[%s1 + $0x500] sm:$0xff]
  %v190 = vld [vmem:[%s1 + $0x508] sm:$0xff]
  %v191 = vld [vmem:[%s1 + $0x510] sm:$0xff]
  %v192 = vld [vmem:[%s1 + $0x518] sm:$0xff]
  %v193 = vld [vmem:[%s1 + $0x520] sm:$0xff]
  %v194 = vld [vmem:[%s1 + $0x528] sm:$0xff]
  %v195 = vld [vmem:[%s1 + $0x530] sm:$0xff]
  %v196 = vld [vmem:[%s1 + $0x538] sm:$0xff]
  %v197 = vld [vmem:[%s1 + $0x540] sm:$0xff]
  %v198 = vld [vmem:[%s1 + $0x548] sm:$0xff]
  %v199 = vld [vmem:[%s1 + $0x550] sm:$0xff]
  %v200 = vld [vmem:[%s1 + $0x558] sm:$0xff]
  %v201 = vld [vmem:[%s1 + $0x560] sm:$0xff]
  %v202 = vld [vmem:[%s1 + $0x568] sm:$0xff]
  %v203 = vld [vmem:[%s1 + $0x570] sm:$0xff]
  %v204 = vld [vmem:[%s1 + $0x578] sm:$0xff]
  %v205 = vld [vmem:[%s1 + $0x580] sm:$0xff]
  %v206 = vld [vmem:[%s1 + $0x588] sm:$0xff]
  %v207 = vld [vmem:[%s1 + $0x590] sm:$0xff]
  %v208 = vld [vmem:[%s1 + $0x598] sm:$0xff]
  %v209 = vld [vmem:[%s1 + $0x5a0] sm:$0xff]
  %v210 = vld [vmem:[%s1 + $0x5a8] sm:$0xff]
  %v211 = vld [vmem:[%s1 + $0x5b0] sm:$0xff]
  %v212 = vld [vmem:[%s1 + $0x5b8] sm:$0xff]
  %v213 = vld [vmem:[%s1 + $0x5c0] sm:$0xff]
  %v214 = vld [vmem:[%s1 + $0x5c8] sm:$0xff]
  %v215 = vld [vmem:[%s1 + $0x5d0] sm:$0xff]
  %v216 = vld [vmem:[%s1 + $0x5d8] sm:$0xff]
  %v217 = vld [vmem:[%s1 + $0x5e0] sm:$0xff]
  %v218 = vld [vmem:[%s1 + $0x5e8] sm:$0xff]
  %v219 = vld [vmem:[%s1 + $0x5f0] sm:$0xff]
  %v220 = vld [vmem:[%s1 + $0x5f8] sm:$0xff]
  %v221 = vld [vmem:[%s1 + $0x600] sm:$0xff]
  %v222 = vld [vmem:[%s1 + $0x608] sm:$0xff]
  %v223 = vld [vmem:[%s1 + $0x610] sm:$0xff]
  %v224 = vld [vmem:[%s1 + $0x618] sm:$0xff]
  %v225 = vld [vmem:[%s1 + $0x620] sm:$0xff]
  %v226 = vld [vmem:[%s1 + $0x628] sm:$0xff]
  %v227 = vld [vmem:[%s1 + $0x630] sm:$0xff]
  %v228 = vld [vmem:[%s1 + $0x638] sm:$0xff]
  %v229 = vld [vmem:[%s1 + $0x640] sm:$0xff]
  %v230 = vld [vmem:[%s1 + $0x648] sm:$0xff]
  %v231 = vld [vmem:[%s1 + $0x650] sm:$0xff]
  %v232 = vld [vmem:[%s1 + $0x658] sm:$0xff]
  %v233 = vld [vmem:[%s1 + $0x660] sm:$0xff]
  %v234 = vld [vmem:[%s1 + $0x668] sm:$0xff]
  %v235 = vld [vmem:[%s1 + $0x670] sm:$0xff]
  %v236 = vld [vmem:[%s1 + $0x678] sm:$0xff]
  %v237 = vld [vmem:[%s1 + $0x680] sm:$0xff]
  %v238 = vld [vmem:[%s1 + $0x688] sm:$0xff]
  %v239 = vld [vmem:[%s1 + $0x690] sm:$0xff]
  %v240 = vld [vmem:[%s1 + $0x698] sm:$0xff]
  %v241 = vld [vmem:[%s1 + $0x6a0] sm:$0xff]
  %v242 = vld [vmem:[%s1 + $0x6a8] sm:$0xff]
  %v243 = vld [vmem:[%s1 + $0x6b0] sm:$0xff]
  %v244 = vld [vmem:[%s1 + $0x6b8] sm:$0xff]
  %v245 = vld [vmem:[%s1 + $0x6c0] sm:$0xff]
  %v246 = vld [vmem:[%s1 + $0x6c8] sm:$0xff]
  %v247 = vld [vmem:[%s1 + $0x6d0] sm:$0xff]
  %v248 = vld [vmem:[%s1 + $0x6d8] sm:$0xff]
  %v249 = vld [vmem:[%s1 + $0x6e0] sm:$0xff]
  %v250 = vld [vmem:[%s1 + $0x6e8] sm:$0xff]
  %v251 = vld [vmem:[%s1 + $0x6f0] sm:$0xff]
  %v252 = vld [vmem:[%s1 + $0x6f8] sm:$0xff]
  %v253 = vld [vmem:[%s1 + $0x700] sm:$0xff]
  %v254 = vld [vmem:[%s1 + $0x708] sm:$0xff]
  %v255 = vld [vmem:[%s1 + $0x710] sm:$0xff]
  %v256 = vld [vmem:[%s1 + $0x718] sm:$0xff]
  %v257 = vld [vmem:[%s1 + $0x720] sm:$0xff]
  %v258 = vld [vmem:[%s1 + $0x728] sm:$0xff]
  %v259 = vld [vmem:[%s1 + $0x730] sm:$0xff]
  %v260 = vld [vmem:[%s1 + $0x738] sm:$0xff]
  %v261 = vld [vmem:[%s1 + $0x740] sm:$0xff]
  %v262 = vld [vmem:[%s1 + $0x748] sm:$0xff]
  %v263 = vld [vmem:[%s1 + $0x750] sm:$0xff]
  %v264 = vld [vmem:[%s1 + $0x758] sm:$0xff]
  %v265 = vld [vmem:[%s1 + $0x760] sm:$0xff]
  %v266 = vld [vmem:[%s1 + $0x768] sm:$0xff]
  %v267 = vld [vmem:[%s1 + $0x770] sm:$0xff]
  %v268 = vld [vmem:[%s1 + $0x778] sm:$0xff]
  %v269 = vld [vmem:[%s1 + $0x780] sm:$0xff]
  %v270 = vld [vmem:[%s1 + $0x788] sm:$0xff]
  %v271 = vld [vmem:[%s1 + $0x790] sm:$0xff]
  %v272 = vld [vmem:[%s1 + $0x798] sm:$0xff]
  %v273 = vld [vmem:[%s1 + $0x7a0] sm:$0xff]
  %v274 = vld [vmem:[%s1 + $0x7a8] sm:$0xff]
  %v275 = vld [vmem:[%s1 + $0x7b0] sm:$0xff]
  %v276 = vld [vmem:[%s1 + $0x7b8] sm:$0xff]
  %v277 = vld [vmem:[%s1 + $0x7c0] sm:$0xff]
  %v278 = vld [vmem:[%s1 + $0x7c8] sm:$0xff]
  %v279 = vld [vmem:[%s1 + $0x7d0] sm:$0xff]
  %v280 = vld [vmem:[%s1 + $0x7d8] sm:$0xff]
  %v281 = vld [vmem:[%s1 + $0x7e0] sm:$0xff]
  %v282 = vld [vmem:[%s1 + $0x7e8] sm:$0xff]
  %v283 = vld [vmem:[%s1 + $0x7f0] sm:$0xff]
  %v284 = vld [vmem:[%s1 + $0x7f8] sm:$0xff]
  %v285 = vld [vmem:[%s2] sm:$0xf]
  %v287 = vlaneseq
  %v288 = vshrl.u32 %v287, 7
  %v289 = vsub.s32 0, %v288
  %v290 = vrot.slane %v285, %v289
  %v291 = vlaneseq
  %v292 = vshrl.u32 %v291, 7
  %v293 = vsub.s32 1, %v292
  %v294 = vrot.slane %v285, %v293
  %v295 = vlaneseq
  %v296 = vshrl.u32 %v295, 7
  %v297 = vsub.s32 2, %v296
  %v298 = vrot.slane %v285, %v297
  %v299 = vlaneseq
  %v300 = vshrl.u32 %v299, 7
  %v301 = vsub.s32 3, %v300
  %v302 = vrot.slane %v285, %v301
  %v315 = vunpack.c.l.b16 %v21
  %v316 = vunpack.c.h.b16 %v21
  %v317 = vunpack.c.l.b16 %v22
  %v318 = vunpack.c.h.b16 %v22
  %v319 = vunpack.c.l.b16 %v23
  %v320 = vunpack.c.h.b16 %v23
  %v321 = vunpack.c.l.b16 %v24
  %v322 = vunpack.c.h.b16 %v24
  %v323 = vunpack.c.l.b16 %v25
  %v324 = vunpack.c.h.b16 %v25
  %v325 = vunpack.c.l.b16 %v26
  %v326 = vunpack.c.h.b16 %v26
  %v327 = vunpack.c.l.b16 %v27
  %v328 = vunpack.c.h.b16 %v27
  %v329 = vunpack.c.l.b16 %v28
  %v330 = vunpack.c.h.b16 %v28
  %v331 = vpack.c.b16 %v323, %v315
  %v332 = vpack.c.b16 %v324, %v316
  %v333 = vpack.c.b16 %v325, %v317
  %v334 = vpack.c.b16 %v326, %v318
  %v335 = vpack.c.b16 %v327, %v319
  %v336 = vpack.c.b16 %v328, %v320
  %v337 = vpack.c.b16 %v329, %v321
  %v338 = vpack.c.b16 %v330, %v322
  %v603 = vunpack.c.l.b16 %v29
  %v604 = vunpack.c.h.b16 %v29
  %v605 = vunpack.c.l.b16 %v30
  %v606 = vunpack.c.h.b16 %v30
  %v607 = vunpack.c.l.b16 %v31
  %v608 = vunpack.c.h.b16 %v31
  %v609 = vunpack.c.l.b16 %v32
  %v610 = vunpack.c.h.b16 %v32
  %v611 = vunpack.c.l.b16 %v33
  %v612 = vunpack.c.h.b16 %v33
  %v613 = vunpack.c.l.b16 %v34
  %v614 = vunpack.c.h.b16 %v34
  %v615 = vunpack.c.l.b16 %v35
  %v616 = vunpack.c.h.b16 %v35
  %v617 = vunpack.c.l.b16 %v36
  %v618 = vunpack.c.h.b16 %v36
  %v619 = vunpack.c.l.b16 %v37
  %v620 = vunpack.c.h.b16 %v37
  %v621 = vunpack.c.l.b16 %v38
  %v622 = vunpack.c.h.b16 %v38
  %v623 = vunpack.c.l.b16 %v39
  %v624 = vunpack.c.h.b16 %v39
  %v625 = vunpack.c.l.b16 %v40
  %v626 = vunpack.c.h.b16 %v40
  %v627 = vunpack.c.l.b16 %v41
  %v628 = vunpack.c.h.b16 %v41
  %v629 = vunpack.c.l.b16 %v42
  %v630 = vunpack.c.h.b16 %v42
  %v631 = vunpack.c.l.b16 %v43
  %v632 = vunpack.c.h.b16 %v43
  %v633 = vunpack.c.l.b16 %v44
  %v634 = vunpack.c.h.b16 %v44
  %v635 = vunpack.c.l.b16 %v45
  %v636 = vunpack.c.h.b16 %v45
  %v637 = vunpack.c.l.b16 %v46
  %v638 = vunpack.c.h.b16 %v46
  %v639 = vunpack.c.l.b16 %v47
  %v640 = vunpack.c.h.b16 %v47
  %v641 = vunpack.c.l.b16 %v48
  %v642 = vunpack.c.h.b16 %v48
  %v643 = vunpack.c.l.b16 %v49
  %v644 = vunpack.c.h.b16 %v49
  %v645 = vunpack.c.l.b16 %v50
  %v646 = vunpack.c.h.b16 %v50
  %v647 = vunpack.c.l.b16 %v51
  %v648 = vunpack.c.h.b16 %v51
  %v649 = vunpack.c.l.b16 %v52
  %v650 = vunpack.c.h.b16 %v52
  %v651 = vunpack.c.l.b16 %v53
  %v652 = vunpack.c.h.b16 %v53
  %v653 = vunpack.c.l.b16 %v54
  %v654 = vunpack.c.h.b16 %v54
  %v655 = vunpack.c.l.b16 %v55
  %v656 = vunpack.c.h.b16 %v55
  %v657 = vunpack.c.l.b16 %v56
  %v658 = vunpack.c.h.b16 %v56
  %v659 = vunpack.c.l.b16 %v57
  %v660 = vunpack.c.h.b16 %v57
  %v661 = vunpack.c.l.b16 %v58
  %v662 = vunpack.c.h.b16 %v58
  %v663 = vunpack.c.l.b16 %v59
  %v664 = vunpack.c.h.b16 %v59
  %v665 = vunpack.c.l.b16 %v60
  %v666 = vunpack.c.h.b16 %v60
  %v667 = vunpack.c.l.b16 %v61
  %v668 = vunpack.c.h.b16 %v61
  %v669 = vunpack.c.l.b16 %v62
  %v670 = vunpack.c.h.b16 %v62
  %v671 = vunpack.c.l.b16 %v63
  %v672 = vunpack.c.h.b16 %v63
  %v673 = vunpack.c.l.b16 %v64
  %v674 = vunpack.c.h.b16 %v64
  %v675 = vunpack.c.l.b16 %v65
  %v676 = vunpack.c.h.b16 %v65
  %v677 = vunpack.c.l.b16 %v66
  %v678 = vunpack.c.h.b16 %v66
  %v679 = vunpack.c.l.b16 %v67
  %v680 = vunpack.c.h.b16 %v67
  %v681 = vunpack.c.l.b16 %v68
  %v682 = vunpack.c.h.b16 %v68
  %v683 = vunpack.c.l.b16 %v69
  %v684 = vunpack.c.h.b16 %v69
  %v685 = vunpack.c.l.b16 %v70
  %v686 = vunpack.c.h.b16 %v70
  %v687 = vunpack.c.l.b16 %v71
  %v688 = vunpack.c.h.b16 %v71
  %v689 = vunpack.c.l.b16 %v72
  %v690 = vunpack.c.h.b16 %v72
  %v691 = vunpack.c.l.b16 %v73
  %v692 = vunpack.c.h.b16 %v73
  %v693 = vunpack.c.l.b16 %v74
  %v694 = vunpack.c.h.b16 %v74
  %v695 = vunpack.c.l.b16 %v75
  %v696 = vunpack.c.h.b16 %v75
  %v697 = vunpack.c.l.b16 %v76
  %v698 = vunpack.c.h.b16 %v76
  %v699 = vunpack.c.l.b16 %v77
  %v700 = vunpack.c.h.b16 %v77
  %v701 = vunpack.c.l.b16 %v78
  %v702 = vunpack.c.h.b16 %v78
  %v703 = vunpack.c.l.b16 %v79
  %v704 = vunpack.c.h.b16 %v79
  %v705 = vunpack.c.l.b16 %v80
  %v706 = vunpack.c.h.b16 %v80
  %v707 = vunpack.c.l.b16 %v81
  %v708 = vunpack.c.h.b16 %v81
  %v709 = vunpack.c.l.b16 %v82
  %v710 = vunpack.c.h.b16 %v82
  %v711 = vunpack.c.l.b16 %v83
  %v712 = vunpack.c.h.b16 %v83
  %v713 = vunpack.c.l.b16 %v84
  %v714 = vunpack.c.h.b16 %v84
  %v715 = vunpack.c.l.b16 %v85
  %v716 = vunpack.c.h.b16 %v85
  %v717 = vunpack.c.l.b16 %v86
  %v718 = vunpack.c.h.b16 %v86
  %v719 = vunpack.c.l.b16 %v87
  %v720 = vunpack.c.h.b16 %v87
  %v721 = vunpack.c.l.b16 %v88
  %v722 = vunpack.c.h.b16 %v88
  %v723 = vunpack.c.l.b16 %v89
  %v724 = vunpack.c.h.b16 %v89
  %v725 = vunpack.c.l.b16 %v90
  %v726 = vunpack.c.h.b16 %v90
  %v727 = vunpack.c.l.b16 %v91
  %v728 = vunpack.c.h.b16 %v91
  %v729 = vunpack.c.l.b16 %v92
  %v730 = vunpack.c.h.b16 %v92
  %v731 = vunpack.c.l.b16 %v93
  %v732 = vunpack.c.h.b16 %v93
  %v733 = vunpack.c.l.b16 %v94
  %v734 = vunpack.c.h.b16 %v94
  %v735 = vunpack.c.l.b16 %v95
  %v736 = vunpack.c.h.b16 %v95
  %v737 = vunpack.c.l.b16 %v96
  %v738 = vunpack.c.h.b16 %v96
  %v739 = vunpack.c.l.b16 %v97
  %v740 = vunpack.c.h.b16 %v97
  %v741 = vunpack.c.l.b16 %v98
  %v742 = vunpack.c.h.b16 %v98
  %v743 = vunpack.c.l.b16 %v99
  %v744 = vunpack.c.h.b16 %v99
  %v745 = vunpack.c.l.b16 %v100
  %v746 = vunpack.c.h.b16 %v100
  %v747 = vunpack.c.l.b16 %v101
  %v748 = vunpack.c.h.b16 %v101
  %v749 = vunpack.c.l.b16 %v102
  %v750 = vunpack.c.h.b16 %v102
  %v751 = vunpack.c.l.b16 %v103
  %v752 = vunpack.c.h.b16 %v103
  %v753 = vunpack.c.l.b16 %v104
  %v754 = vunpack.c.h.b16 %v104
  %v755 = vunpack.c.l.b16 %v105
  %v756 = vunpack.c.h.b16 %v105
  %v757 = vunpack.c.l.b16 %v106
  %v758 = vunpack.c.h.b16 %v106
  %v759 = vunpack.c.l.b16 %v107
  %v760 = vunpack.c.h.b16 %v107
  %v761 = vunpack.c.l.b16 %v108
  %v762 = vunpack.c.h.b16 %v108
  %v763 = vunpack.c.l.b16 %v109
  %v764 = vunpack.c.h.b16 %v109
  %v765 = vunpack.c.l.b16 %v110
  %v766 = vunpack.c.h.b16 %v110
  %v767 = vunpack.c.l.b16 %v111
  %v768 = vunpack.c.h.b16 %v111
  %v769 = vunpack.c.l.b16 %v112
  %v770 = vunpack.c.h.b16 %v112
  %v771 = vunpack.c.l.b16 %v113
  %v772 = vunpack.c.h.b16 %v113
  %v773 = vunpack.c.l.b16 %v114
  %v774 = vunpack.c.h.b16 %v114
  %v775 = vunpack.c.l.b16 %v115
  %v776 = vunpack.c.h.b16 %v115
  %v777 = vunpack.c.l.b16 %v116
  %v778 = vunpack.c.h.b16 %v116
  %v779 = vunpack.c.l.b16 %v117
  %v780 = vunpack.c.h.b16 %v117
  %v781 = vunpack.c.l.b16 %v118
  %v782 = vunpack.c.h.b16 %v118
  %v783 = vunpack.c.l.b16 %v119
  %v784 = vunpack.c.h.b16 %v119
  %v785 = vunpack.c.l.b16 %v120
  %v786 = vunpack.c.h.b16 %v120
  %v787 = vunpack.c.l.b16 %v121
  %v788 = vunpack.c.h.b16 %v121
  %v789 = vunpack.c.l.b16 %v122
  %v790 = vunpack.c.h.b16 %v122
  %v791 = vunpack.c.l.b16 %v123
  %v792 = vunpack.c.h.b16 %v123
  %v793 = vunpack.c.l.b16 %v124
  %v794 = vunpack.c.h.b16 %v124
  %v795 = vunpack.c.l.b16 %v125
  %v796 = vunpack.c.h.b16 %v125
  %v797 = vunpack.c.l.b16 %v126
  %v798 = vunpack.c.h.b16 %v126
  %v799 = vunpack.c.l.b16 %v127
  %v800 = vunpack.c.h.b16 %v127
  %v801 = vunpack.c.l.b16 %v128
  %v802 = vunpack.c.h.b16 %v128
  %v803 = vunpack.c.l.b16 %v129
  %v804 = vunpack.c.h.b16 %v129
  %v805 = vunpack.c.l.b16 %v130
  %v806 = vunpack.c.h.b16 %v130
  %v807 = vunpack.c.l.b16 %v131
  %v808 = vunpack.c.h.b16 %v131
  %v809 = vunpack.c.l.b16 %v132
  %v810 = vunpack.c.h.b16 %v132
  %v811 = vunpack.c.l.b16 %v133
  %v812 = vunpack.c.h.b16 %v133
  %v813 = vunpack.c.l.b16 %v134
  %v814 = vunpack.c.h.b16 %v134
  %v815 = vunpack.c.l.b16 %v135
  %v816 = vunpack.c.h.b16 %v135
  %v817 = vunpack.c.l.b16 %v136
  %v818 = vunpack.c.h.b16 %v136
  %v819 = vunpack.c.l.b16 %v137
  %v820 = vunpack.c.h.b16 %v137
  %v821 = vunpack.c.l.b16 %v138
  %v822 = vunpack.c.h.b16 %v138
  %v823 = vunpack.c.l.b16 %v139
  %v824 = vunpack.c.h.b16 %v139
  %v825 = vunpack.c.l.b16 %v140
  %v826 = vunpack.c.h.b16 %v140
  %v827 = vunpack.c.l.b16 %v141
  %v828 = vunpack.c.h.b16 %v141
  %v829 = vunpack.c.l.b16 %v142
  %v830 = vunpack.c.h.b16 %v142
  %v831 = vunpack.c.l.b16 %v143
  %v832 = vunpack.c.h.b16 %v143
  %v833 = vunpack.c.l.b16 %v144
  %v834 = vunpack.c.h.b16 %v144
  %v835 = vunpack.c.l.b16 %v145
  %v836 = vunpack.c.h.b16 %v145
  %v837 = vunpack.c.l.b16 %v146
  %v838 = vunpack.c.h.b16 %v146
  %v839 = vunpack.c.l.b16 %v147
  %v840 = vunpack.c.h.b16 %v147
  %v841 = vunpack.c.l.b16 %v148
  %v842 = vunpack.c.h.b16 %v148
  %v843 = vunpack.c.l.b16 %v149
  %v844 = vunpack.c.h.b16 %v149
  %v845 = vunpack.c.l.b16 %v150
  %v846 = vunpack.c.h.b16 %v150
  %v847 = vunpack.c.l.b16 %v151
  %v848 = vunpack.c.h.b16 %v151
  %v849 = vunpack.c.l.b16 %v152
  %v850 = vunpack.c.h.b16 %v152
  %v851 = vunpack.c.l.b16 %v153
  %v852 = vunpack.c.h.b16 %v153
  %v853 = vunpack.c.l.b16 %v154
  %v854 = vunpack.c.h.b16 %v154
  %v855 = vunpack.c.l.b16 %v155
  %v856 = vunpack.c.h.b16 %v155
  %v857 = vunpack.c.l.b16 %v156
  %v858 = vunpack.c.h.b16 %v156
  %v859 = vunpack.c.l.b16 %v157
  %v860 = vunpack.c.h.b16 %v157
  %v861 = vunpack.c.l.b16 %v158
  %v862 = vunpack.c.h.b16 %v158
  %v863 = vunpack.c.l.b16 %v159
  %v864 = vunpack.c.h.b16 %v159
  %v865 = vunpack.c.l.b16 %v160
  %v866 = vunpack.c.h.b16 %v160
  %v867 = vunpack.c.l.b16 %v161
  %v868 = vunpack.c.h.b16 %v161
  %v869 = vunpack.c.l.b16 %v162
  %v870 = vunpack.c.h.b16 %v162
  %v871 = vunpack.c.l.b16 %v163
  %v872 = vunpack.c.h.b16 %v163
  %v873 = vunpack.c.l.b16 %v164
  %v874 = vunpack.c.h.b16 %v164
  %v875 = vunpack.c.l.b16 %v165
  %v876 = vunpack.c.h.b16 %v165
  %v877 = vunpack.c.l.b16 %v166
  %v878 = vunpack.c.h.b16 %v166
  %v879 = vunpack.c.l.b16 %v167
  %v880 = vunpack.c.h.b16 %v167
  %v881 = vunpack.c.l.b16 %v168
  %v882 = vunpack.c.h.b16 %v168
  %v883 = vunpack.c.l.b16 %v169
  %v884 = vunpack.c.h.b16 %v169
  %v885 = vunpack.c.l.b16 %v170
  %v886 = vunpack.c.h.b16 %v170
  %v887 = vunpack.c.l.b16 %v171
  %v888 = vunpack.c.h.b16 %v171
  %v889 = vunpack.c.l.b16 %v172
  %v890 = vunpack.c.h.b16 %v172
  %v891 = vunpack.c.l.b16 %v173
  %v892 = vunpack.c.h.b16 %v173
  %v893 = vunpack.c.l.b16 %v174
  %v894 = vunpack.c.h.b16 %v174
  %v895 = vunpack.c.l.b16 %v175
  %v896 = vunpack.c.h.b16 %v175
  %v897 = vunpack.c.l.b16 %v176
  %v898 = vunpack.c.h.b16 %v176
  %v899 = vunpack.c.l.b16 %v177
  %v900 = vunpack.c.h.b16 %v177
  %v901 = vunpack.c.l.b16 %v178
  %v902 = vunpack.c.h.b16 %v178
  %v903 = vunpack.c.l.b16 %v179
  %v904 = vunpack.c.h.b16 %v179
  %v905 = vunpack.c.l.b16 %v180
  %v906 = vunpack.c.h.b16 %v180
  %v907 = vunpack.c.l.b16 %v181
  %v908 = vunpack.c.h.b16 %v181
  %v909 = vunpack.c.l.b16 %v182
  %v910 = vunpack.c.h.b16 %v182
  %v911 = vunpack.c.l.b16 %v183
  %v912 = vunpack.c.h.b16 %v183
  %v913 = vunpack.c.l.b16 %v184
  %v914 = vunpack.c.h.b16 %v184
  %v915 = vunpack.c.l.b16 %v185
  %v916 = vunpack.c.h.b16 %v185
  %v917 = vunpack.c.l.b16 %v186
  %v918 = vunpack.c.h.b16 %v186
  %v919 = vunpack.c.l.b16 %v187
  %v920 = vunpack.c.h.b16 %v187
  %v921 = vunpack.c.l.b16 %v188
  %v922 = vunpack.c.h.b16 %v188
  %v923 = vunpack.c.l.b16 %v189
  %v924 = vunpack.c.h.b16 %v189
  %v925 = vunpack.c.l.b16 %v190
  %v926 = vunpack.c.h.b16 %v190
  %v927 = vunpack.c.l.b16 %v191
  %v928 = vunpack.c.h.b16 %v191
  %v929 = vunpack.c.l.b16 %v192
  %v930 = vunpack.c.h.b16 %v192
  %v931 = vunpack.c.l.b16 %v193
  %v932 = vunpack.c.h.b16 %v193
  %v933 = vunpack.c.l.b16 %v194
  %v934 = vunpack.c.h.b16 %v194
  %v935 = vunpack.c.l.b16 %v195
  %v936 = vunpack.c.h.b16 %v195
  %v937 = vunpack.c.l.b16 %v196
  %v938 = vunpack.c.h.b16 %v196
  %v939 = vunpack.c.l.b16 %v197
  %v940 = vunpack.c.h.b16 %v197
  %v941 = vunpack.c.l.b16 %v198
  %v942 = vunpack.c.h.b16 %v198
  %v943 = vunpack.c.l.b16 %v199
  %v944 = vunpack.c.h.b16 %v199
  %v945 = vunpack.c.l.b16 %v200
  %v946 = vunpack.c.h.b16 %v200
  %v947 = vunpack.c.l.b16 %v201
  %v948 = vunpack.c.h.b16 %v201
  %v949 = vunpack.c.l.b16 %v202
  %v950 = vunpack.c.h.b16 %v202
  %v951 = vunpack.c.l.b16 %v203
  %v952 = vunpack.c.h.b16 %v203
  %v953 = vunpack.c.l.b16 %v204
  %v954 = vunpack.c.h.b16 %v204
  %v955 = vunpack.c.l.b16 %v205
  %v956 = vunpack.c.h.b16 %v205
  %v957 = vunpack.c.l.b16 %v206
  %v958 = vunpack.c.h.b16 %v206
  %v959 = vunpack.c.l.b16 %v207
  %v960 = vunpack.c.h.b16 %v207
  %v961 = vunpack.c.l.b16 %v208
  %v962 = vunpack.c.h.b16 %v208
  %v963 = vunpack.c.l.b16 %v209
  %v964 = vunpack.c.h.b16 %v209
  %v965 = vunpack.c.l.b16 %v210
  %v966 = vunpack.c.h.b16 %v210
  %v967 = vunpack.c.l.b16 %v211
  %v968 = vunpack.c.h.b16 %v211
  %v969 = vunpack.c.l.b16 %v212
  %v970 = vunpack.c.h.b16 %v212
  %v971 = vunpack.c.l.b16 %v213
  %v972 = vunpack.c.h.b16 %v213
  %v973 = vunpack.c.l.b16 %v214
  %v974 = vunpack.c.h.b16 %v214
  %v975 = vunpack.c.l.b16 %v215
  %v976 = vunpack.c.h.b16 %v215
  %v977 = vunpack.c.l.b16 %v216
  %v978 = vunpack.c.h.b16 %v216
  %v979 = vunpack.c.l.b16 %v217
  %v980 = vunpack.c.h.b16 %v217
  %v981 = vunpack.c.l.b16 %v218
  %v982 = vunpack.c.h.b16 %v218
  %v983 = vunpack.c.l.b16 %v219
  %v984 = vunpack.c.h.b16 %v219
  %v985 = vunpack.c.l.b16 %v220
  %v986 = vunpack.c.h.b16 %v220
  %v987 = vunpack.c.l.b16 %v221
  %v988 = vunpack.c.h.b16 %v221
  %v989 = vunpack.c.l.b16 %v222
  %v990 = vunpack.c.h.b16 %v222
  %v991 = vunpack.c.l.b16 %v223
  %v992 = vunpack.c.h.b16 %v223
  %v993 = vunpack.c.l.b16 %v224
  %v994 = vunpack.c.h.b16 %v224
  %v995 = vunpack.c.l.b16 %v225
  %v996 = vunpack.c.h.b16 %v225
  %v997 = vunpack.c.l.b16 %v226
  %v998 = vunpack.c.h.b16 %v226
  %v999 = vunpack.c.l.b16 %v227
  %v1000 = vunpack.c.h.b16 %v227
  %v1001 = vunpack.c.l.b16 %v228
  %v1002 = vunpack.c.h.b16 %v228
  %v1003 = vunpack.c.l.b16 %v229
  %v1004 = vunpack.c.h.b16 %v229
  %v1005 = vunpack.c.l.b16 %v230
  %v1006 = vunpack.c.h.b16 %v230
  %v1007 = vunpack.c.l.b16 %v231
  %v1008 = vunpack.c.h.b16 %v231
  %v1009 = vunpack.c.l.b16 %v232
  %v1010 = vunpack.c.h.b16 %v232
  %v1011 = vunpack.c.l.b16 %v233
  %v1012 = vunpack.c.h.b16 %v233
  %v1013 = vunpack.c.l.b16 %v234
  %v1014 = vunpack.c.h.b16 %v234
  %v1015 = vunpack.c.l.b16 %v235
  %v1016 = vunpack.c.h.b16 %v235
  %v1017 = vunpack.c.l.b16 %v236
  %v1018 = vunpack.c.h.b16 %v236
  %v1019 = vunpack.c.l.b16 %v237
  %v1020 = vunpack.c.h.b16 %v237
  %v1021 = vunpack.c.l.b16 %v238
  %v1022 = vunpack.c.h.b16 %v238
  %v1023 = vunpack.c.l.b16 %v239
  %v1024 = vunpack.c.h.b16 %v239
  %v1025 = vunpack.c.l.b16 %v240
  %v1026 = vunpack.c.h.b16 %v240
  %v1027 = vunpack.c.l.b16 %v241
  %v1028 = vunpack.c.h.b16 %v241
  %v1029 = vunpack.c.l.b16 %v242
  %v1030 = vunpack.c.h.b16 %v242
  %v1031 = vunpack.c.l.b16 %v243
  %v1032 = vunpack.c.h.b16 %v243
  %v1033 = vunpack.c.l.b16 %v244
  %v1034 = vunpack.c.h.b16 %v244
  %v1035 = vunpack.c.l.b16 %v245
  %v1036 = vunpack.c.h.b16 %v245
  %v1037 = vunpack.c.l.b16 %v246
  %v1038 = vunpack.c.h.b16 %v246
  %v1039 = vunpack.c.l.b16 %v247
  %v1040 = vunpack.c.h.b16 %v247
  %v1041 = vunpack.c.l.b16 %v248
  %v1042 = vunpack.c.h.b16 %v248
  %v1043 = vunpack.c.l.b16 %v249
  %v1044 = vunpack.c.h.b16 %v249
  %v1045 = vunpack.c.l.b16 %v250
  %v1046 = vunpack.c.h.b16 %v250
  %v1047 = vunpack.c.l.b16 %v251
  %v1048 = vunpack.c.h.b16 %v251
  %v1049 = vunpack.c.l.b16 %v252
  %v1050 = vunpack.c.h.b16 %v252
  %v1051 = vunpack.c.l.b16 %v253
  %v1052 = vunpack.c.h.b16 %v253
  %v1053 = vunpack.c.l.b16 %v254
  %v1054 = vunpack.c.h.b16 %v254
  %v1055 = vunpack.c.l.b16 %v255
  %v1056 = vunpack.c.h.b16 %v255
  %v1057 = vunpack.c.l.b16 %v256
  %v1058 = vunpack.c.h.b16 %v256
  %v1059 = vunpack.c.l.b16 %v257
  %v1060 = vunpack.c.h.b16 %v257
  %v1061 = vunpack.c.l.b16 %v258
  %v1062 = vunpack.c.h.b16 %v258
  %v1063 = vunpack.c.l.b16 %v259
  %v1064 = vunpack.c.h.b16 %v259
  %v1065 = vunpack.c.l.b16 %v260
  %v1066 = vunpack.c.h.b16 %v260
  %v1067 = vunpack.c.l.b16 %v261
  %v1068 = vunpack.c.h.b16 %v261
  %v1069 = vunpack.c.l.b16 %v262
  %v1070 = vunpack.c.h.b16 %v262
  %v1071 = vunpack.c.l.b16 %v263
  %v1072 = vunpack.c.h.b16 %v263
  %v1073 = vunpack.c.l.b16 %v264
  %v1074 = vunpack.c.h.b16 %v264
  %v1075 = vunpack.c.l.b16 %v265
  %v1076 = vunpack.c.h.b16 %v265
  %v1077 = vunpack.c.l.b16 %v266
  %v1078 = vunpack.c.h.b16 %v266
  %v1079 = vunpack.c.l.b16 %v267
  %v1080 = vunpack.c.h.b16 %v267
  %v1081 = vunpack.c.l.b16 %v268
  %v1082 = vunpack.c.h.b16 %v268
  %v1083 = vunpack.c.l.b16 %v269
  %v1084 = vunpack.c.h.b16 %v269
  %v1085 = vunpack.c.l.b16 %v270
  %v1086 = vunpack.c.h.b16 %v270
  %v1087 = vunpack.c.l.b16 %v271
  %v1088 = vunpack.c.h.b16 %v271
  %v1089 = vunpack.c.l.b16 %v272
  %v1090 = vunpack.c.h.b16 %v272
  %v1091 = vunpack.c.l.b16 %v273
  %v1092 = vunpack.c.h.b16 %v273
  %v1093 = vunpack.c.l.b16 %v274
  %v1094 = vunpack.c.h.b16 %v274
  %v1095 = vunpack.c.l.b16 %v275
  %v1096 = vunpack.c.h.b16 %v275
  %v1097 = vunpack.c.l.b16 %v276
  %v1098 = vunpack.c.h.b16 %v276
  %v1099 = vunpack.c.l.b16 %v277
  %v1100 = vunpack.c.h.b16 %v277
  %v1101 = vunpack.c.l.b16 %v278
  %v1102 = vunpack.c.h.b16 %v278
  %v1103 = vunpack.c.l.b16 %v279
  %v1104 = vunpack.c.h.b16 %v279
  %v1105 = vunpack.c.l.b16 %v280
  %v1106 = vunpack.c.h.b16 %v280
  %v1107 = vunpack.c.l.b16 %v281
  %v1108 = vunpack.c.h.b16 %v281
  %v1109 = vunpack.c.l.b16 %v282
  %v1110 = vunpack.c.h.b16 %v282
  %v1111 = vunpack.c.l.b16 %v283
  %v1112 = vunpack.c.h.b16 %v283
  %v1113 = vunpack.c.l.b16 %v284
  %v1114 = vunpack.c.h.b16 %v284
  %v1115 = vpack.c.b16 %v607, %v603
  %v1116 = vpack.c.b16 %v608, %v604
  %v1117 = vpack.c.b16 %v609, %v605
  %v1118 = vpack.c.b16 %v610, %v606
  %v1119 = vpack.c.b16 %v615, %v611
  %v1120 = vpack.c.b16 %v616, %v612
  %v1121 = vpack.c.b16 %v617, %v613
  %v1122 = vpack.c.b16 %v618, %v614
  %v1123 = vpack.c.b16 %v623, %v619
  %v1124 = vpack.c.b16 %v624, %v620
  %v1125 = vpack.c.b16 %v625, %v621
  %v1126 = vpack.c.b16 %v626, %v622
  %v1127 = vpack.c.b16 %v631, %v627
  %v1128 = vpack.c.b16 %v632, %v628
  %v1129 = vpack.c.b16 %v633, %v629
  %v1130 = vpack.c.b16 %v634, %v630
  %v1131 = vpack.c.b16 %v639, %v635
  %v1132 = vpack.c.b16 %v640, %v636
  %v1133 = vpack.c.b16 %v641, %v637
  %v1134 = vpack.c.b16 %v642, %v638
  %v1135 = vpack.c.b16 %v647, %v643
  %v1136 = vpack.c.b16 %v648, %v644
  %v1137 = vpack.c.b16 %v649, %v645
  %v1138 = vpack.c.b16 %v650, %v646
  %v1139 = vpack.c.b16 %v655, %v651
  %v1140 = vpack.c.b16 %v656, %v652
  %v1141 = vpack.c.b16 %v657, %v653
  %v1142 = vpack.c.b16 %v658, %v654
  %v1143 = vpack.c.b16 %v663, %v659
  %v1144 = vpack.c.b16 %v664, %v660
  %v1145 = vpack.c.b16 %v665, %v661
  %v1146 = vpack.c.b16 %v666, %v662
  %v1147 = vpack.c.b16 %v671, %v667
  %v1148 = vpack.c.b16 %v672, %v668
  %v1149 = vpack.c.b16 %v673, %v669
  %v1150 = vpack.c.b16 %v674, %v670
  %v1151 = vpack.c.b16 %v679, %v675
  %v1152 = vpack.c.b16 %v680, %v676
  %v1153 = vpack.c.b16 %v681, %v677
  %v1154 = vpack.c.b16 %v682, %v678
  %v1155 = vpack.c.b16 %v687, %v683
  %v1156 = vpack.c.b16 %v688, %v684
  %v1157 = vpack.c.b16 %v689, %v685
  %v1158 = vpack.c.b16 %v690, %v686
  %v1159 = vpack.c.b16 %v695, %v691
  %v1160 = vpack.c.b16 %v696, %v692
  %v1161 = vpack.c.b16 %v697, %v693
  %v1162 = vpack.c.b16 %v698, %v694
  %v1163 = vpack.c.b16 %v703, %v699
  %v1164 = vpack.c.b16 %v704, %v700
  %v1165 = vpack.c.b16 %v705, %v701
  %v1166 = vpack.c.b16 %v706, %v702
  %v1167 = vpack.c.b16 %v711, %v707
  %v1168 = vpack.c.b16 %v712, %v708
  %v1169 = vpack.c.b16 %v713, %v709
  %v1170 = vpack.c.b16 %v714, %v710
  %v1171 = vpack.c.b16 %v719, %v715
  %v1172 = vpack.c.b16 %v720, %v716
  %v1173 = vpack.c.b16 %v721, %v717
  %v1174 = vpack.c.b16 %v722, %v718
  %v1175 = vpack.c.b16 %v727, %v723
  %v1176 = vpack.c.b16 %v728, %v724
  %v1177 = vpack.c.b16 %v729, %v725
  %v1178 = vpack.c.b16 %v730, %v726
  %v1179 = vpack.c.b16 %v735, %v731
  %v1180 = vpack.c.b16 %v736, %v732
  %v1181 = vpack.c.b16 %v737, %v733
  %v1182 = vpack.c.b16 %v738, %v734
  %v1183 = vpack.c.b16 %v743, %v739
  %v1184 = vpack.c.b16 %v744, %v740
  %v1185 = vpack.c.b16 %v745, %v741
  %v1186 = vpack.c.b16 %v746, %v742
  %v1187 = vpack.c.b16 %v751, %v747
  %v1188 = vpack.c.b16 %v752, %v748
  %v1189 = vpack.c.b16 %v753, %v749
  %v1190 = vpack.c.b16 %v754, %v750
  %v1191 = vpack.c.b16 %v759, %v755
  %v1192 = vpack.c.b16 %v760, %v756
  %v1193 = vpack.c.b16 %v761, %v757
  %v1194 = vpack.c.b16 %v762, %v758
  %v1195 = vpack.c.b16 %v767, %v763
  %v1196 = vpack.c.b16 %v768, %v764
  %v1197 = vpack.c.b16 %v769, %v765
  %v1198 = vpack.c.b16 %v770, %v766
  %v1199 = vpack.c.b16 %v775, %v771
  %v1200 = vpack.c.b16 %v776, %v772
  %v1201 = vpack.c.b16 %v777, %v773
  %v1202 = vpack.c.b16 %v778, %v774
  %v1203 = vpack.c.b16 %v783, %v779
  %v1204 = vpack.c.b16 %v784, %v780
  %v1205 = vpack.c.b16 %v785, %v781
  %v1206 = vpack.c.b16 %v786, %v782
  %v1207 = vpack.c.b16 %v791, %v787
  %v1208 = vpack.c.b16 %v792, %v788
  %v1209 = vpack.c.b16 %v793, %v789
  %v1210 = vpack.c.b16 %v794, %v790
  %v1211 = vpack.c.b16 %v799, %v795
  %v1212 = vpack.c.b16 %v800, %v796
  %v1213 = vpack.c.b16 %v801, %v797
  %v1214 = vpack.c.b16 %v802, %v798
  %v1215 = vpack.c.b16 %v807, %v803
  %v1216 = vpack.c.b16 %v808, %v804
  %v1217 = vpack.c.b16 %v809, %v805
  %v1218 = vpack.c.b16 %v810, %v806
  %v1219 = vpack.c.b16 %v815, %v811
  %v1220 = vpack.c.b16 %v816, %v812
  %v1221 = vpack.c.b16 %v817, %v813
  %v1222 = vpack.c.b16 %v818, %v814
  %v1223 = vpack.c.b16 %v823, %v819
  %v1224 = vpack.c.b16 %v824, %v820
  %v1225 = vpack.c.b16 %v825, %v821
  %v1226 = vpack.c.b16 %v826, %v822
  %v1227 = vpack.c.b16 %v831, %v827
  %v1228 = vpack.c.b16 %v832, %v828
  %v1229 = vpack.c.b16 %v833, %v829
  %v1230 = vpack.c.b16 %v834, %v830
  %v1231 = vpack.c.b16 %v839, %v835
  %v1232 = vpack.c.b16 %v840, %v836
  %v1233 = vpack.c.b16 %v841, %v837
  %v1234 = vpack.c.b16 %v842, %v838
  %v1235 = vpack.c.b16 %v847, %v843
  %v1236 = vpack.c.b16 %v848, %v844
  %v1237 = vpack.c.b16 %v849, %v845
  %v1238 = vpack.c.b16 %v850, %v846
  %v1239 = vpack.c.b16 %v855, %v851
  %v1240 = vpack.c.b16 %v856, %v852
  %v1241 = vpack.c.b16 %v857, %v853
  %v1242 = vpack.c.b16 %v858, %v854
  %v1243 = vpack.c.b16 %v863, %v859
  %v1244 = vpack.c.b16 %v864, %v860
  %v1245 = vpack.c.b16 %v865, %v861
  %v1246 = vpack.c.b16 %v866, %v862
  %v1247 = vpack.c.b16 %v871, %v867
  %v1248 = vpack.c.b16 %v872, %v868
  %v1249 = vpack.c.b16 %v873, %v869
  %v1250 = vpack.c.b16 %v874, %v870
  %v1251 = vpack.c.b16 %v879, %v875
  %v1252 = vpack.c.b16 %v880, %v876
  %v1253 = vpack.c.b16 %v881, %v877
  %v1254 = vpack.c.b16 %v882, %v878
  %v1255 = vpack.c.b16 %v887, %v883
  %v1256 = vpack.c.b16 %v888, %v884
  %v1257 = vpack.c.b16 %v889, %v885
  %v1258 = vpack.c.b16 %v890, %v886
  %v1259 = vpack.c.b16 %v895, %v891
  %v1260 = vpack.c.b16 %v896, %v892
  %v1261 = vpack.c.b16 %v897, %v893
  %v1262 = vpack.c.b16 %v898, %v894
  %v1263 = vpack.c.b16 %v903, %v899
  %v1264 = vpack.c.b16 %v904, %v900
  %v1265 = vpack.c.b16 %v905, %v901
  %v1266 = vpack.c.b16 %v906, %v902
  %v1267 = vpack.c.b16 %v911, %v907
  %v1268 = vpack.c.b16 %v912, %v908
  %v1269 = vpack.c.b16 %v913, %v909
  %v1270 = vpack.c.b16 %v914, %v910
  %v1271 = vpack.c.b16 %v919, %v915
  %v1272 = vpack.c.b16 %v920, %v916
  %v1273 = vpack.c.b16 %v921, %v917
  %v1274 = vpack.c.b16 %v922, %v918
  %v1275 = vpack.c.b16 %v927, %v923
  %v1276 = vpack.c.b16 %v928, %v924
  %v1277 = vpack.c.b16 %v929, %v925
  %v1278 = vpack.c.b16 %v930, %v926
  %v1279 = vpack.c.b16 %v935, %v931
  %v1280 = vpack.c.b16 %v936, %v932
  %v1281 = vpack.c.b16 %v937, %v933
  %v1282 = vpack.c.b16 %v938, %v934
  %v1283 = vpack.c.b16 %v943, %v939
  %v1284 = vpack.c.b16 %v944, %v940
  %v1285 = vpack.c.b16 %v945, %v941
  %v1286 = vpack.c.b16 %v946, %v942
  %v1287 = vpack.c.b16 %v951, %v947
  %v1288 = vpack.c.b16 %v952, %v948
  %v1289 = vpack.c.b16 %v953, %v949
  %v1290 = vpack.c.b16 %v954, %v950
  %v1291 = vpack.c.b16 %v959, %v955
  %v1292 = vpack.c.b16 %v960, %v956
  %v1293 = vpack.c.b16 %v961, %v957
  %v1294 = vpack.c.b16 %v962, %v958
  %v1295 = vpack.c.b16 %v967, %v963
  %v1296 = vpack.c.b16 %v968, %v964
  %v1297 = vpack.c.b16 %v969, %v965
  %v1298 = vpack.c.b16 %v970, %v966
  %v1299 = vpack.c.b16 %v975, %v971
  %v1300 = vpack.c.b16 %v976, %v972
  %v1301 = vpack.c.b16 %v977, %v973
  %v1302 = vpack.c.b16 %v978, %v974
  %v1303 = vpack.c.b16 %v983, %v979
  %v1304 = vpack.c.b16 %v984, %v980
  %v1305 = vpack.c.b16 %v985, %v981
  %v1306 = vpack.c.b16 %v986, %v982
  %v1307 = vpack.c.b16 %v991, %v987
  %v1308 = vpack.c.b16 %v992, %v988
  %v1309 = vpack.c.b16 %v993, %v989
  %v1310 = vpack.c.b16 %v994, %v990
  %v1311 = vpack.c.b16 %v999, %v995
  %v1312 = vpack.c.b16 %v1000, %v996
  %v1313 = vpack.c.b16 %v1001, %v997
  %v1314 = vpack.c.b16 %v1002, %v998
  %v1315 = vpack.c.b16 %v1007, %v1003
  %v1316 = vpack.c.b16 %v1008, %v1004
  %v1317 = vpack.c.b16 %v1009, %v1005
  %v1318 = vpack.c.b16 %v1010, %v1006
  %v1319 = vpack.c.b16 %v1015, %v1011
  %v1320 = vpack.c.b16 %v1016, %v1012
  %v1321 = vpack.c.b16 %v1017, %v1013
  %v1322 = vpack.c.b16 %v1018, %v1014
  %v1323 = vpack.c.b16 %v1023, %v1019
  %v1324 = vpack.c.b16 %v1024, %v1020
  %v1325 = vpack.c.b16 %v1025, %v1021
  %v1326 = vpack.c.b16 %v1026, %v1022
  %v1327 = vpack.c.b16 %v1031, %v1027
  %v1328 = vpack.c.b16 %v1032, %v1028
  %v1329 = vpack.c.b16 %v1033, %v1029
  %v1330 = vpack.c.b16 %v1034, %v1030
  %v1331 = vpack.c.b16 %v1039, %v1035
  %v1332 = vpack.c.b16 %v1040, %v1036
  %v1333 = vpack.c.b16 %v1041, %v1037
  %v1334 = vpack.c.b16 %v1042, %v1038
  %v1335 = vpack.c.b16 %v1047, %v1043
  %v1336 = vpack.c.b16 %v1048, %v1044
  %v1337 = vpack.c.b16 %v1049, %v1045
  %v1338 = vpack.c.b16 %v1050, %v1046
  %v1339 = vpack.c.b16 %v1055, %v1051
  %v1340 = vpack.c.b16 %v1056, %v1052
  %v1341 = vpack.c.b16 %v1057, %v1053
  %v1342 = vpack.c.b16 %v1058, %v1054
  %v1343 = vpack.c.b16 %v1063, %v1059
  %v1344 = vpack.c.b16 %v1064, %v1060
  %v1345 = vpack.c.b16 %v1065, %v1061
  %v1346 = vpack.c.b16 %v1066, %v1062
  %v1347 = vpack.c.b16 %v1071, %v1067
  %v1348 = vpack.c.b16 %v1072, %v1068
  %v1349 = vpack.c.b16 %v1073, %v1069
  %v1350 = vpack.c.b16 %v1074, %v1070
  %v1351 = vpack.c.b16 %v1079, %v1075
  %v1352 = vpack.c.b16 %v1080, %v1076
  %v1353 = vpack.c.b16 %v1081, %v1077
  %v1354 = vpack.c.b16 %v1082, %v1078
  %v1355 = vpack.c.b16 %v1087, %v1083
  %v1356 = vpack.c.b16 %v1088, %v1084
  %v1357 = vpack.c.b16 %v1089, %v1085
  %v1358 = vpack.c.b16 %v1090, %v1086
  %v1359 = vpack.c.b16 %v1095, %v1091
  %v1360 = vpack.c.b16 %v1096, %v1092
  %v1361 = vpack.c.b16 %v1097, %v1093
  %v1362 = vpack.c.b16 %v1098, %v1094
  %v1363 = vpack.c.b16 %v1103, %v1099
  %v1364 = vpack.c.b16 %v1104, %v1100
  %v1365 = vpack.c.b16 %v1105, %v1101
  %v1366 = vpack.c.b16 %v1106, %v1102
  %v1367 = vpack.c.b16 %v1111, %v1107
  %v1368 = vpack.c.b16 %v1112, %v1108
  %v1369 = vpack.c.b16 %v1113, %v1109
  %v1370 = vpack.c.b16 %v1114, %v1110
  %1627 = vmatprep.subr.bf16.mxu0 %v1116
  %1628 = vmatpush1.bf16.msra.mxu0 %v1115
  %1629 = vmatprep.subr.bf16.mxu0 %v1120
  %1630 = vmatpush1.bf16.msra.mxu0 %v1119
  %1631 = vmatprep.subr.bf16.mxu0 %v1124
  %1632 = vmatpush1.bf16.msra.mxu0 %v1123
  %1633 = vmatprep.subr.bf16.mxu0 %v1128
  %1634 = vmatpush1.bf16.msra.mxu0 %v1127
  %1635 = vmatprep.subr.bf16.mxu0 %v1132
  %1636 = vmatpush1.bf16.msra.mxu0 %v1131
  %1637 = vmatprep.subr.bf16.mxu0 %v1136
  %1638 = vmatpush1.bf16.msra.mxu0 %v1135
  %1639 = vmatprep.subr.bf16.mxu0 %v1140
  %1640 = vmatpush1.bf16.msra.mxu0 %v1139
  %1641 = vmatprep.subr.bf16.mxu0 %v1144
  %1642 = vmatpush1.bf16.msra.mxu0 %v1143
  %1643 = vmatprep.subr.bf16.mxu0 %v1148
  %1644 = vmatpush1.bf16.msra.mxu0 %v1147
  %1645 = vmatprep.subr.bf16.mxu0 %v1152
  %1646 = vmatpush1.bf16.msra.mxu0 %v1151
  %1647 = vmatprep.subr.bf16.mxu0 %v1156
  %1648 = vmatpush1.bf16.msra.mxu0 %v1155
  %1649 = vmatprep.subr.bf16.mxu0 %v1160
  %1650 = vmatpush1.bf16.msra.mxu0 %v1159
  %1651 = vmatprep.subr.bf16.mxu0 %v1164
  %1652 = vmatpush1.bf16.msra.mxu0 %v1163
  %1653 = vmatprep.subr.bf16.mxu0 %v1168
  %1654 = vmatpush1.bf16.msra.mxu0 %v1167
  %1655 = vmatprep.subr.bf16.mxu0 %v1172
  %1656 = vmatpush1.bf16.msra.mxu0 %v1171
  %1657 = vmatprep.subr.bf16.mxu0 %v1176
  %1658 = vmatpush1.bf16.msra.mxu0 %v1175
  %1659 = vmatprep.mubr.bf16.mxu0 %v332
  %1660 = vmatmul.mubr.bf16.gmra.mrb[0].mxu0 %v331
  %v1661 = vpop.f32.mrb[0].mxu0
  %v1662 = vadd.f32 %v290, %v1661
  %v1663 = vpop.f32.mrb[0].mxu0
  %v1664 = vadd.f32 %v294, %v1663
  %v1665 = vpop.f32.mrb[0].mxu0
  %v1666 = vadd.f32 %v290, %v1665
  %v1667 = vpop.f32.mrb[0].mxu0
  %v1668 = vadd.f32 %v294, %v1667
  %1669 = vdwg.mxu0
  %1670 = vmatprep.subr.bf16.mxu0 %v1180
  %1671 = vmatpush1.bf16.msra.mxu0 %v1179
  %1672 = vmatprep.subr.bf16.mxu0 %v1184
  %1673 = vmatpush1.bf16.msra.mxu0 %v1183
  %1674 = vmatprep.subr.bf16.mxu0 %v1188
  %1675 = vmatpush1.bf16.msra.mxu0 %v1187
  %1676 = vmatprep.subr.bf16.mxu0 %v1192
  %1677 = vmatpush1.bf16.msra.mxu0 %v1191
  %1678 = vmatprep.subr.bf16.mxu0 %v1196
  %1679 = vmatpush1.bf16.msra.mxu0 %v1195
  %1680 = vmatprep.subr.bf16.mxu0 %v1200
  %1681 = vmatpush1.bf16.msra.mxu0 %v1199
  %1682 = vmatprep.subr.bf16.mxu0 %v1204
  %1683 = vmatpush1.bf16.msra.mxu0 %v1203
  %1684 = vmatprep.subr.bf16.mxu0 %v1208
  %1685 = vmatpush1.bf16.msra.mxu0 %v1207
  %1686 = vmatprep.subr.bf16.mxu0 %v1212
  %1687 = vmatpush1.bf16.msra.mxu0 %v1211
  %1688 = vmatprep.subr.bf16.mxu0 %v1216
  %1689 = vmatpush1.bf16.msra.mxu0 %v1215
  %1690 = vmatprep.subr.bf16.mxu0 %v1220
  %1691 = vmatpush1.bf16.msra.mxu0 %v1219
  %1692 = vmatprep.subr.bf16.mxu0 %v1224
  %1693 = vmatpush1.bf16.msra.mxu0 %v1223
  %1694 = vmatprep.subr.bf16.mxu0 %v1228
  %1695 = vmatpush1.bf16.msra.mxu0 %v1227
  %1696 = vmatprep.subr.bf16.mxu0 %v1232
  %1697 = vmatpush1.bf16.msra.mxu0 %v1231
  %1698 = vmatprep.subr.bf16.mxu0 %v1236
  %1699 = vmatpush1.bf16.msra.mxu0 %v1235
  %1700 = vmatprep.subr.bf16.mxu0 %v1240
  %1701 = vmatpush1.bf16.msra.mxu0 %v1239
  %1702 = vmatprep.mubr.bf16.mxu0 %v334
  %1703 = vmatmul.mubr.bf16.gmra.mrb[0].mxu0 %v333
  %v1704 = vpop.f32.mrb[0].mxu0
  %v1705 = vadd.f32 %v1662, %v1704
  %v1706 = vpop.f32.mrb[0].mxu0
  %v1707 = vadd.f32 %v1664, %v1706
  %v1708 = vpop.f32.mrb[0].mxu0
  %v1709 = vadd.f32 %v1666, %v1708
  %v1710 = vpop.f32.mrb[0].mxu0
  %v1711 = vadd.f32 %v1668, %v1710
  %1712 = vdwg.mxu0
  %1713 = vmatprep.subr.bf16.mxu0 %v1244
  %1714 = vmatpush1.bf16.msra.mxu0 %v1243
  %1715 = vmatprep.subr.bf16.mxu0 %v1248
  %1716 = vmatpush1.bf16.msra.mxu0 %v1247
  %1717 = vmatprep.subr.bf16.mxu0 %v1252
  %1718 = vmatpush1.bf16.msra.mxu0 %v1251
  %1719 = vmatprep.subr.bf16.mxu0 %v1256
  %1720 = vmatpush1.bf16.msra.mxu0 %v1255
  %1721 = vmatprep.subr.bf16.mxu0 %v1260
  %1722 = vmatpush1.bf16.msra.mxu0 %v1259
  %1723 = vmatprep.subr.bf16.mxu0 %v1264
  %1724 = vmatpush1.bf16.msra.mxu0 %v1263
  %1725 = vmatprep.subr.bf16.mxu0 %v1268
  %1726 = vmatpush1.bf16.msra.mxu0 %v1267
  %1727 = vmatprep.subr.bf16.mxu0 %v1272
  %1728 = vmatpush1.bf16.msra.mxu0 %v1271
  %1729 = vmatprep.subr.bf16.mxu0 %v1276
  %1730 = vmatpush1.bf16.msra.mxu0 %v1275
  %1731 = vmatprep.subr.bf16.mxu0 %v1280
  %1732 = vmatpush1.bf16.msra.mxu0 %v1279
  %1733 = vmatprep.subr.bf16.mxu0 %v1284
  %1734 = vmatpush1.bf16.msra.mxu0 %v1283
  %1735 = vmatprep.subr.bf16.mxu0 %v1288
  %1736 = vmatpush1.bf16.msra.mxu0 %v1287
  %1737 = vmatprep.subr.bf16.mxu0 %v1292
  %1738 = vmatpush1.bf16.msra.mxu0 %v1291
  %1739 = vmatprep.subr.bf16.mxu0 %v1296
  %1740 = vmatpush1.bf16.msra.mxu0 %v1295
  %1741 = vmatprep.subr.bf16.mxu0 %v1300
  %1742 = vmatpush1.bf16.msra.mxu0 %v1299
  %1743 = vmatprep.subr.bf16.mxu0 %v1304
  %1744 = vmatpush1.bf16.msra.mxu0 %v1303
  %1745 = vmatprep.mubr.bf16.mxu0 %v336
  %1746 = vmatmul.mubr.bf16.gmra.mrb[0].mxu0 %v335
  %v1747 = vpop.f32.mrb[0].mxu0
  %v1748 = vadd.f32 %v1705, %v1747
  %v1749 = vpop.f32.mrb[0].mxu0
  %v1750 = vadd.f32 %v1707, %v1749
  %v1751 = vpop.f32.mrb[0].mxu0
  %v1752 = vadd.f32 %v1709, %v1751
  %v1753 = vpop.f32.mrb[0].mxu0
  %v1754 = vadd.f32 %v1711, %v1753
  %1755 = vdwg.mxu0
  %1756 = vmatprep.subr.bf16.mxu0 %v1308
  %1757 = vmatpush1.bf16.msra.mxu0 %v1307
  %1758 = vmatprep.subr.bf16.mxu0 %v1312
  %1759 = vmatpush1.bf16.msra.mxu0 %v1311
  %1760 = vmatprep.subr.bf16.mxu0 %v1316
  %1761 = vmatpush1.bf16.msra.mxu0 %v1315
  %1762 = vmatprep.subr.bf16.mxu0 %v1320
  %1763 = vmatpush1.bf16.msra.mxu0 %v1319
  %1764 = vmatprep.subr.bf16.mxu0 %v1324
  %1765 = vmatpush1.bf16.msra.mxu0 %v1323
  %1766 = vmatprep.subr.bf16.mxu0 %v1328
  %1767 = vmatpush1.bf16.msra.mxu0 %v1327
  %1768 = vmatprep.subr.bf16.mxu0 %v1332
  %1769 = vmatpush1.bf16.msra.mxu0 %v1331
  %1770 = vmatprep.subr.bf16.mxu0 %v1336
  %1771 = vmatpush1.bf16.msra.mxu0 %v1335
  %1772 = vmatprep.subr.bf16.mxu0 %v1340
  %1773 = vmatpush1.bf16.msra.mxu0 %v1339
  %1774 = vmatprep.subr.bf16.mxu0 %v1344
  %1775 = vmatpush1.bf16.msra.mxu0 %v1343
  %1776 = vmatprep.subr.bf16.mxu0 %v1348
  %1777 = vmatpush1.bf16.msra.mxu0 %v1347
  %1778 = vmatprep.subr.bf16.mxu0 %v1352
  %1779 = vmatpush1.bf16.msra.mxu0 %v1351
  %1780 = vmatprep.subr.bf16.mxu0 %v1356
  %1781 = vmatpush1.bf16.msra.mxu0 %v1355
  %1782 = vmatprep.subr.bf16.mxu0 %v1360
  %1783 = vmatpush1.bf16.msra.mxu0 %v1359
  %1784 = vmatprep.subr.bf16.mxu0 %v1364
  %1785 = vmatpush1.bf16.msra.mxu0 %v1363
  %1786 = vmatprep.subr.bf16.mxu0 %v1368
  %1787 = vmatpush1.bf16.msra.mxu0 %v1367
  %1788 = vmatprep.mubr.bf16.mxu0 %v338
  %1789 = vmatmul.mubr.bf16.gmra.mrb[0].mxu0 %v337
  %v1790 = vpop.f32.mrb[0].mxu0
  %v1791 = vadd.f32 %v1748, %v1790
  %v1792 = vpop.f32.mrb[0].mxu0
  %v1793 = vadd.f32 %v1750, %v1792
  %v1794 = vpop.f32.mrb[0].mxu0
  %v1795 = vadd.f32 %v1752, %v1794
  %v1796 = vpop.f32.mrb[0].mxu0
  %v1797 = vadd.f32 %v1754, %v1796
  %1798 = vdwg.mxu0
  %1799 = vmatprep.subr.bf16.mxu0 %v1118
  %1800 = vmatpush1.bf16.msra.mxu0 %v1117
  %1801 = vmatprep.subr.bf16.mxu0 %v1122
  %1802 = vmatpush1.bf16.msra.mxu0 %v1121
  %1803 = vmatprep.subr.bf16.mxu0 %v1126
  %1804 = vmatpush1.bf16.msra.mxu0 %v1125
  %1805 = vmatprep.subr.bf16.mxu0 %v1130
  %1806 = vmatpush1.bf16.msra.mxu0 %v1129
  %1807 = vmatprep.subr.bf16.mxu0 %v1134
  %1808 = vmatpush1.bf16.msra.mxu0 %v1133
  %1809 = vmatprep.subr.bf16.mxu0 %v1138
  %1810 = vmatpush1.bf16.msra.mxu0 %v1137
  %1811 = vmatprep.subr.bf16.mxu0 %v1142
  %1812 = vmatpush1.bf16.msra.mxu0 %v1141
  %1813 = vmatprep.subr.bf16.mxu0 %v1146
  %1814 = vmatpush1.bf16.msra.mxu0 %v1145
  %1815 = vmatprep.subr.bf16.mxu0 %v1150
  %1816 = vmatpush1.bf16.msra.mxu0 %v1149
  %1817 = vmatprep.subr.bf16.mxu0 %v1154
  %1818 = vmatpush1.bf16.msra.mxu0 %v1153
  %1819 = vmatprep.subr.bf16.mxu0 %v1158
  %1820 = vmatpush1.bf16.msra.mxu0 %v1157
  %1821 = vmatprep.subr.bf16.mxu0 %v1162
  %1822 = vmatpush1.bf16.msra.mxu0 %v1161
  %1823 = vmatprep.subr.bf16.mxu0 %v1166
  %1824 = vmatpush1.bf16.msra.mxu0 %v1165
  %1825 = vmatprep.subr.bf16.mxu0 %v1170
  %1826 = vmatpush1.bf16.msra.mxu0 %v1169
  %1827 = vmatprep.subr.bf16.mxu0 %v1174
  %1828 = vmatpush1.bf16.msra.mxu0 %v1173
  %1829 = vmatprep.subr.bf16.mxu0 %v1178
  %1830 = vmatpush1.bf16.msra.mxu0 %v1177
  %1831 = vmatprep.mubr.bf16.mxu0 %v332
  %1832 = vmatmul.mubr.bf16.gmra.mrb[0].mxu0 %v331
  %v1833 = vpop.f32.mrb[0].mxu0
  %v1834 = vadd.f32 %v298, %v1833
  %v1835 = vpop.f32.mrb[0].mxu0
  %v1836 = vadd.f32 %v302, %v1835
  %v1837 = vpop.f32.mrb[0].mxu0
  %v1838 = vadd.f32 %v298, %v1837
  %v1839 = vpop.f32.mrb[0].mxu0
  %v1840 = vadd.f32 %v302, %v1839
  %1841 = vdwg.mxu0
  %1842 = vmatprep.subr.bf16.mxu0 %v1182
  %1843 = vmatpush1.bf16.msra.mxu0 %v1181
  %1844 = vmatprep.subr.bf16.mxu0 %v1186
  %1845 = vmatpush1.bf16.msra.mxu0 %v1185
  %1846 = vmatprep.subr.bf16.mxu0 %v1190
  %1847 = vmatpush1.bf16.msra.mxu0 %v1189
  %1848 = vmatprep.subr.bf16.mxu0 %v1194
  %1849 = vmatpush1.bf16.msra.mxu0 %v1193
  %1850 = vmatprep.subr.bf16.mxu0 %v1198
  %1851 = vmatpush1.bf16.msra.mxu0 %v1197
  %1852 = vmatprep.subr.bf16.mxu0 %v1202
  %1853 = vmatpush1.bf16.msra.mxu0 %v1201
  %1854 = vmatprep.subr.bf16.mxu0 %v1206
  %1855 = vmatpush1.bf16.msra.mxu0 %v1205
  %1856 = vmatprep.subr.bf16.mxu0 %v1210
  %1857 = vmatpush1.bf16.msra.mxu0 %v1209
  %1858 = vmatprep.subr.bf16.mxu0 %v1214
  %1859 = vmatpush1.bf16.msra.mxu0 %v1213
  %1860 = vmatprep.subr.bf16.mxu0 %v1218
  %1861 = vmatpush1.bf16.msra.mxu0 %v1217
  %1862 = vmatprep.subr.bf16.mxu0 %v1222
  %1863 = vmatpush1.bf16.msra.mxu0 %v1221
  %1864 = vmatprep.subr.bf16.mxu0 %v1226
  %1865 = vmatpush1.bf16.msra.mxu0 %v1225
  %1866 = vmatprep.subr.bf16.mxu0 %v1230
  %1867 = vmatpush1.bf16.msra.mxu0 %v1229
  %1868 = vmatprep.subr.bf16.mxu0 %v1234
  %1869 = vmatpush1.bf16.msra.mxu0 %v1233
  %1870 = vmatprep.subr.bf16.mxu0 %v1238
  %1871 = vmatpush1.bf16.msra.mxu0 %v1237
  %1872 = vmatprep.subr.bf16.mxu0 %v1242
  %1873 = vmatpush1.bf16.msra.mxu0 %v1241
  %1874 = vmatprep.mubr.bf16.mxu0 %v334
  %1875 = vmatmul.mubr.bf16.gmra.mrb[0].mxu0 %v333
  %v1876 = vpop.f32.mrb[0].mxu0
  %v1877 = vadd.f32 %v1834, %v1876
  %v1878 = vpop.f32.mrb[0].mxu0
  %v1879 = vadd.f32 %v1836, %v1878
  %v1880 = vpop.f32.mrb[0].mxu0
  %v1881 = vadd.f32 %v1838, %v1880
  %v1882 = vpop.f32.mrb[0].mxu0
  %v1883 = vadd.f32 %v1840, %v1882
  %1884 = vdwg.mxu0
  %1885 = vmatprep.subr.bf16.mxu0 %v1246
  %1886 = vmatpush1.bf16.msra.mxu0 %v1245
  %1887 = vmatprep.subr.bf16.mxu0 %v1250
  %1888 = vmatpush1.bf16.msra.mxu0 %v1249
  %1889 = vmatprep.subr.bf16.mxu0 %v1254
  %1890 = vmatpush1.bf16.msra.mxu0 %v1253
  %1891 = vmatprep.subr.bf16.mxu0 %v1258
  %1892 = vmatpush1.bf16.msra.mxu0 %v1257
  %1893 = vmatprep.subr.bf16.mxu0 %v1262
  %1894 = vmatpush1.bf16.msra.mxu0 %v1261
  %1895 = vmatprep.subr.bf16.mxu0 %v1266
  %1896 = vmatpush1.bf16.msra.mxu0 %v1265
  %1897 = vmatprep.subr.bf16.mxu0 %v1270
  %1898 = vmatpush1.bf16.msra.mxu0 %v1269
  %1899 = vmatprep.subr.bf16.mxu0 %v1274
  %1900 = vmatpush1.bf16.msra.mxu0 %v1273
  %1901 = vmatprep.subr.bf16.mxu0 %v1278
  %1902 = vmatpush1.bf16.msra.mxu0 %v1277
  %1903 = vmatprep.subr.bf16.mxu0 %v1282
  %1904 = vmatpush1.bf16.msra.mxu0 %v1281
  %1905 = vmatprep.subr.bf16.mxu0 %v1286
  %1906 = vmatpush1.bf16.msra.mxu0 %v1285
  %1907 = vmatprep.subr.bf16.mxu0 %v1290
  %1908 = vmatpush1.bf16.msra.mxu0 %v1289
  %1909 = vmatprep.subr.bf16.mxu0 %v1294
  %1910 = vmatpush1.bf16.msra.mxu0 %v1293
  %1911 = vmatprep.subr.bf16.mxu0 %v1298
  %1912 = vmatpush1.bf16.msra.mxu0 %v1297
  %1913 = vmatprep.subr.bf16.mxu0 %v1302
  %1914 = vmatpush1.bf16.msra.mxu0 %v1301
  %1915 = vmatprep.subr.bf16.mxu0 %v1306
  %1916 = vmatpush1.bf16.msra.mxu0 %v1305
  %1917 = vmatprep.mubr.bf16.mxu0 %v336
  %1918 = vmatmul.mubr.bf16.gmra.mrb[0].mxu0 %v335
  %v1919 = vpop.f32.mrb[0].mxu0
  %v1920 = vadd.f32 %v1877, %v1919
  %v1921 = vpop.f32.mrb[0].mxu0
  %v1922 = vadd.f32 %v1879, %v1921
  %v1923 = vpop.f32.mrb[0].mxu0
  %v1924 = vadd.f32 %v1881, %v1923
  %v1925 = vpop.f32.mrb[0].mxu0
  %v1926 = vadd.f32 %v1883, %v1925
  %1927 = vdwg.mxu0
  %1928 = vmatprep.subr.bf16.mxu0 %v1310
  %1929 = vmatpush1.bf16.msra.mxu0 %v1309
  %1930 = vmatprep.subr.bf16.mxu0 %v1314
  %1931 = vmatpush1.bf16.msra.mxu0 %v1313
  %1932 = vmatprep.subr.bf16.mxu0 %v1318
  %1933 = vmatpush1.bf16.msra.mxu0 %v1317
  %1934 = vmatprep.subr.bf16.mxu0 %v1322
  %1935 = vmatpush1.bf16.msra.mxu0 %v1321
  %1936 = vmatprep.subr.bf16.mxu0 %v1326
  %1937 = vmatpush1.bf16.msra.mxu0 %v1325
  %1938 = vmatprep.subr.bf16.mxu0 %v1330
  %1939 = vmatpush1.bf16.msra.mxu0 %v1329
  %1940 = vmatprep.subr.bf16.mxu0 %v1334
  %1941 = vmatpush1.bf16.msra.mxu0 %v1333
  %1942 = vmatprep.subr.bf16.mxu0 %v1338
  %1943 = vmatpush1.bf16.msra.mxu0 %v1337
  %1944 = vmatprep.subr.bf16.mxu0 %v1342
  %1945 = vmatpush1.bf16.msra.mxu0 %v1341
  %1946 = vmatprep.subr.bf16.mxu0 %v1346
  %1947 = vmatpush1.bf16.msra.mxu0 %v1345
  %1948 = vmatprep.subr.bf16.mxu0 %v1350
  %1949 = vmatpush1.bf16.msra.mxu0 %v1349
  %1950 = vmatprep.subr.bf16.mxu0 %v1354
  %1951 = vmatpush1.bf16.msra.mxu0 %v1353
  %1952 = vmatprep.subr.bf16.mxu0 %v1358
  %1953 = vmatpush1.bf16.msra.mxu0 %v1357
  %1954 = vmatprep.subr.bf16.mxu0 %v1362
  %1955 = vmatpush1.bf16.msra.mxu0 %v1361
  %1956 = vmatprep.subr.bf16.mxu0 %v1366
  %1957 = vmatpush1.bf16.msra.mxu0 %v1365
  %1958 = vmatprep.subr.bf16.mxu0 %v1370
  %1959 = vmatpush1.bf16.msra.mxu0 %v1369
  %1960 = vmatprep.mubr.bf16.mxu0 %v338
  %1961 = vmatmul.mubr.bf16.gmra.mrb[0].mxu0 %v337
  %v1962 = vpop.f32.mrb[0].mxu0
  %v1963 = vadd.f32 %v1920, %v1962
  %v1964 = vpop.f32.mrb[0].mxu0
  %v1965 = vadd.f32 %v1922, %v1964
  %v1966 = vpop.f32.mrb[0].mxu0
  %v1967 = vadd.f32 %v1924, %v1966
  %v1968 = vpop.f32.mrb[0].mxu0
  %v1969 = vadd.f32 %v1926, %v1968
  %1970 = vdwg.mxu0
  %v1971 = vmax.f32 %v1791, 0.0
  %v1972 = vmax.f32 %v1793, 0.0
  %v1973 = vmax.f32 %v1963, 0.0
  %v1974 = vmax.f32 %v1965, 0.0
  %v1975 = vmax.f32 %v1795, 0.0
  %v1976 = vmax.f32 %v1797, 0.0
  %v1977 = vmax.f32 %v1967, 0.0
  %v1978 = vmax.f32 %v1969, 0.0
  %v1979 = vpack.c.bf16 %v1975, %v1971
  %v1980 = vpack.c.bf16 %v1976, %v1972
  %v1981 = vpack.c.bf16 %v1977, %v1973
  %v1982 = vpack.c.bf16 %v1978, %v1974
  %v1983 = vld [vmem:[%s3] sm:$0xf]
  %v1984 = vld [vmem:[%s3 + $0x4] sm:$0xf]
  %v1985 = vld [vmem:[%s3 + $0x8] sm:$0xf]
  %v1986 = vld [vmem:[%s3 + $0xc] sm:$0xf]
  %v1987 = vld [vmem:[%s3 + $0x10] sm:$0xf]
  %v1988 = vld [vmem:[%s3 + $0x14] sm:$0xf]
  %v1989 = vld [vmem:[%s3 + $0x18] sm:$0xf]
  %v1990 = vld [vmem:[%s3 + $0x1c] sm:$0xf]
  %v1991 = vld [vmem:[%s3 + $0x20] sm:$0xf]
  %v1992 = vld [vmem:[%s3 + $0x24] sm:$0xf]
  %v1993 = vld [vmem:[%s3 + $0x28] sm:$0xf]
  %v1994 = vld [vmem:[%s3 + $0x2c] sm:$0xf]
  %v1995 = vld [vmem:[%s3 + $0x30] sm:$0xf]
  %v1996 = vld [vmem:[%s3 + $0x34] sm:$0xf]
  %v1997 = vld [vmem:[%s3 + $0x38] sm:$0xf]
  %v1998 = vld [vmem:[%s3 + $0x3c] sm:$0xf]
  %v1999 = vld [vmem:[%s3 + $0x40] sm:$0xf]
  %v2000 = vld [vmem:[%s3 + $0x44] sm:$0xf]
  %v2001 = vld [vmem:[%s3 + $0x48] sm:$0xf]
  %v2002 = vld [vmem:[%s3 + $0x4c] sm:$0xf]
  %v2003 = vld [vmem:[%s3 + $0x50] sm:$0xf]
  %v2004 = vld [vmem:[%s3 + $0x54] sm:$0xf]
  %v2005 = vld [vmem:[%s3 + $0x58] sm:$0xf]
  %v2006 = vld [vmem:[%s3 + $0x5c] sm:$0xf]
  %v2007 = vld [vmem:[%s3 + $0x60] sm:$0xf]
  %v2008 = vld [vmem:[%s3 + $0x64] sm:$0xf]
  %v2009 = vld [vmem:[%s3 + $0x68] sm:$0xf]
  %v2010 = vld [vmem:[%s3 + $0x6c] sm:$0xf]
  %v2011 = vld [vmem:[%s3 + $0x70] sm:$0xf]
  %v2012 = vld [vmem:[%s3 + $0x74] sm:$0xf]
  %v2013 = vld [vmem:[%s3 + $0x78] sm:$0xf]
  %v2014 = vld [vmem:[%s3 + $0x7c] sm:$0xf]
  %v2015 = vld [vmem:[%s3 + $0x80] sm:$0xf]
  %v2016 = vld [vmem:[%s3 + $0x84] sm:$0xf]
  %v2017 = vld [vmem:[%s3 + $0x88] sm:$0xf]
  %v2018 = vld [vmem:[%s3 + $0x8c] sm:$0xf]
  %v2019 = vld [vmem:[%s3 + $0x90] sm:$0xf]
  %v2020 = vld [vmem:[%s3 + $0x94] sm:$0xf]
  %v2021 = vld [vmem:[%s3 + $0x98] sm:$0xf]
  %v2022 = vld [vmem:[%s3 + $0x9c] sm:$0xf]
  %v2023 = vld [vmem:[%s3 + $0xa0] sm:$0xf]
  %v2024 = vld [vmem:[%s3 + $0xa4] sm:$0xf]
  %v2025 = vld [vmem:[%s3 + $0xa8] sm:$0xf]
  %v2026 = vld [vmem:[%s3 + $0xac] sm:$0xf]
  %v2027 = vld [vmem:[%s3 + $0xb0] sm:$0xf]
  %v2028 = vld [vmem:[%s3 + $0xb4] sm:$0xf]
  %v2029 = vld [vmem:[%s3 + $0xb8] sm:$0xf]
  %v2030 = vld [vmem:[%s3 + $0xbc] sm:$0xf]
  %v2031 = vld [vmem:[%s3 + $0xc0] sm:$0xf]
  %v2032 = vld [vmem:[%s3 + $0xc4] sm:$0xf]
  %v2033 = vld [vmem:[%s3 + $0xc8] sm:$0xf]
  %v2034 = vld [vmem:[%s3 + $0xcc] sm:$0xf]
  %v2035 = vld [vmem:[%s3 + $0xd0] sm:$0xf]
  %v2036 = vld [vmem:[%s3 + $0xd4] sm:$0xf]
  %v2037 = vld [vmem:[%s3 + $0xd8] sm:$0xf]
  %v2038 = vld [vmem:[%s3 + $0xdc] sm:$0xf]
  %v2039 = vld [vmem:[%s3 + $0xe0] sm:$0xf]
  %v2040 = vld [vmem:[%s3 + $0xe4] sm:$0xf]
  %v2041 = vld [vmem:[%s3 + $0xe8] sm:$0xf]
  %v2042 = vld [vmem:[%s3 + $0xec] sm:$0xf]
  %v2043 = vld [vmem:[%s3 + $0xf0] sm:$0xf]
  %v2044 = vld [vmem:[%s3 + $0xf4] sm:$0xf]
  %v2045 = vld [vmem:[%s3 + $0xf8] sm:$0xf]
  %v2046 = vld [vmem:[%s3 + $0xfc] sm:$0xf]
  %v2047 = vld [vmem:[%s4] sm:$0x1]
  %v2049 = vlaneseq
  %v2050 = vshrl.u32 %v2049, 7
  %v2051 = vsub.s32 0, %v2050
  %v2052 = vrot.slane %v2047, %v2051
  %v2118 = vunpack.c.l.b16 %v1983
  %v2119 = vunpack.c.l.b16 %v1984
  %v2120 = vunpack.c.l.b16 %v1985
  %v2121 = vunpack.c.l.b16 %v1986
  %v2122 = vunpack.c.l.b16 %v1987
  %v2123 = vunpack.c.l.b16 %v1988
  %v2124 = vunpack.c.l.b16 %v1989
  %v2125 = vunpack.c.l.b16 %v1990
  %v2126 = vunpack.c.l.b16 %v1991
  %v2127 = vunpack.c.l.b16 %v1992
  %v2128 = vunpack.c.l.b16 %v1993
  %v2129 = vunpack.c.l.b16 %v1994
  %v2130 = vunpack.c.l.b16 %v1995
  %v2131 = vunpack.c.l.b16 %v1996
  %v2132 = vunpack.c.l.b16 %v1997
  %v2133 = vunpack.c.l.b16 %v1998
  %v2134 = vunpack.c.l.b16 %v1999
  %v2135 = vunpack.c.l.b16 %v2000
  %v2136 = vunpack.c.l.b16 %v2001
  %v2137 = vunpack.c.l.b16 %v2002
  %v2138 = vunpack.c.l.b16 %v2003
  %v2139 = vunpack.c.l.b16 %v2004
  %v2140 = vunpack.c.l.b16 %v2005
  %v2141 = vunpack.c.l.b16 %v2006
  %v2142 = vunpack.c.l.b16 %v2007
  %v2143 = vunpack.c.l.b16 %v2008
  %v2144 = vunpack.c.l.b16 %v2009
  %v2145 = vunpack.c.l.b16 %v2010
  %v2146 = vunpack.c.l.b16 %v2011
  %v2147 = vunpack.c.l.b16 %v2012
  %v2148 = vunpack.c.l.b16 %v2013
  %v2149 = vunpack.c.l.b16 %v2014
  %v2150 = vunpack.c.l.b16 %v2015
  %v2151 = vunpack.c.l.b16 %v2016
  %v2152 = vunpack.c.l.b16 %v2017
  %v2153 = vunpack.c.l.b16 %v2018
  %v2154 = vunpack.c.l.b16 %v2019
  %v2155 = vunpack.c.l.b16 %v2020
  %v2156 = vunpack.c.l.b16 %v2021
  %v2157 = vunpack.c.l.b16 %v2022
  %v2158 = vunpack.c.l.b16 %v2023
  %v2159 = vunpack.c.l.b16 %v2024
  %v2160 = vunpack.c.l.b16 %v2025
  %v2161 = vunpack.c.l.b16 %v2026
  %v2162 = vunpack.c.l.b16 %v2027
  %v2163 = vunpack.c.l.b16 %v2028
  %v2164 = vunpack.c.l.b16 %v2029
  %v2165 = vunpack.c.l.b16 %v2030
  %v2166 = vunpack.c.l.b16 %v2031
  %v2167 = vunpack.c.l.b16 %v2032
  %v2168 = vunpack.c.l.b16 %v2033
  %v2169 = vunpack.c.l.b16 %v2034
  %v2170 = vunpack.c.l.b16 %v2035
  %v2171 = vunpack.c.l.b16 %v2036
  %v2172 = vunpack.c.l.b16 %v2037
  %v2173 = vunpack.c.l.b16 %v2038
  %v2174 = vunpack.c.l.b16 %v2039
  %v2175 = vunpack.c.l.b16 %v2040
  %v2176 = vunpack.c.l.b16 %v2041
  %v2177 = vunpack.c.l.b16 %v2042
  %v2178 = vunpack.c.l.b16 %v2043
  %v2179 = vunpack.c.l.b16 %v2044
  %v2180 = vunpack.c.l.b16 %v2045
  %v2181 = vunpack.c.l.b16 %v2046
  %v2182 = vpack.c.b16 %v2119, %v2118
  %v2183 = vpack.c.b16 %v2121, %v2120
  %v2184 = vpack.c.b16 %v2123, %v2122
  %v2185 = vpack.c.b16 %v2125, %v2124
  %v2186 = vpack.c.b16 %v2127, %v2126
  %v2187 = vpack.c.b16 %v2129, %v2128
  %v2188 = vpack.c.b16 %v2131, %v2130
  %v2189 = vpack.c.b16 %v2133, %v2132
  %v2190 = vpack.c.b16 %v2135, %v2134
  %v2191 = vpack.c.b16 %v2137, %v2136
  %v2192 = vpack.c.b16 %v2139, %v2138
  %v2193 = vpack.c.b16 %v2141, %v2140
  %v2194 = vpack.c.b16 %v2143, %v2142
  %v2195 = vpack.c.b16 %v2145, %v2144
  %v2196 = vpack.c.b16 %v2147, %v2146
  %v2197 = vpack.c.b16 %v2149, %v2148
  %v2198 = vpack.c.b16 %v2151, %v2150
  %v2199 = vpack.c.b16 %v2153, %v2152
  %v2200 = vpack.c.b16 %v2155, %v2154
  %v2201 = vpack.c.b16 %v2157, %v2156
  %v2202 = vpack.c.b16 %v2159, %v2158
  %v2203 = vpack.c.b16 %v2161, %v2160
  %v2204 = vpack.c.b16 %v2163, %v2162
  %v2205 = vpack.c.b16 %v2165, %v2164
  %v2206 = vpack.c.b16 %v2167, %v2166
  %v2207 = vpack.c.b16 %v2169, %v2168
  %v2208 = vpack.c.b16 %v2171, %v2170
  %v2209 = vpack.c.b16 %v2173, %v2172
  %v2210 = vpack.c.b16 %v2175, %v2174
  %v2211 = vpack.c.b16 %v2177, %v2176
  %v2212 = vpack.c.b16 %v2179, %v2178
  %v2213 = vpack.c.b16 %v2181, %v2180
  %2246 = vmatprep.subr.bf16.mxu0 0
  %2247 = vmatpush1.bf16.msra.mxu0 %v2182
  %2248 = vmatprep.subr.bf16.mxu0 0
  %2249 = vmatpush1.bf16.msra.mxu0 %v2183
  %2250 = vmatprep.subr.bf16.mxu0 0
  %2251 = vmatpush1.bf16.msra.mxu0 %v2184
  %2252 = vmatprep.subr.bf16.mxu0 0
  %2253 = vmatpush1.bf16.msra.mxu0 %v2185
  %2254 = vmatprep.subr.bf16.mxu0 0
  %2255 = vmatpush1.bf16.msra.mxu0 %v2186
  %2256 = vmatprep.subr.bf16.mxu0 0
  %2257 = vmatpush1.bf16.msra.mxu0 %v2187
  %2258 = vmatprep.subr.bf16.mxu0 0
  %2259 = vmatpush1.bf16.msra.mxu0 %v2188
  %2260 = vmatprep.subr.bf16.mxu0 0
  %2261 = vmatpush1.bf16.msra.mxu0 %v2189
  %2262 = vmatprep.subr.bf16.mxu0 0
  %2263 = vmatpush1.bf16.msra.mxu0 %v2190
  %2264 = vmatprep.subr.bf16.mxu0 0
  %2265 = vmatpush1.bf16.msra.mxu0 %v2191
  %2266 = vmatprep.subr.bf16.mxu0 0
  %2267 = vmatpush1.bf16.msra.mxu0 %v2192
  %2268 = vmatprep.subr.bf16.mxu0 0
  %2269 = vmatpush1.bf16.msra.mxu0 %v2193
  %2270 = vmatprep.subr.bf16.mxu0 0
  %2271 = vmatpush1.bf16.msra.mxu0 %v2194
  %2272 = vmatprep.subr.bf16.mxu0 0
  %2273 = vmatpush1.bf16.msra.mxu0 %v2195
  %2274 = vmatprep.subr.bf16.mxu0 0
  %2275 = vmatpush1.bf16.msra.mxu0 %v2196
  %2276 = vmatprep.subr.bf16.mxu0 0
  %2277 = vmatpush1.bf16.msra.mxu0 %v2197
  %2278 = vmatprep.mubr.bf16.mxu0 %v1980
  %2279 = vmatmul.mubr.bf16.gmra.mrb[0].mxu0 %v1979
  %v2280 = vpop.f32.mrb[0].mxu0
  %v2281 = vadd.f32 %v2052, %v2280
  %v2282 = vpop.f32.mrb[0].mxu0
  %v2283 = vpop.f32.mrb[0].mxu0
  %v2284 = vadd.f32 %v2052, %v2283
  %v2285 = vpop.f32.mrb[0].mxu0
  %2286 = vdwg.mxu0
  %2287 = vmatprep.subr.bf16.mxu0 0
  %2288 = vmatpush1.bf16.msra.mxu0 %v2198
  %2289 = vmatprep.subr.bf16.mxu0 0
  %2290 = vmatpush1.bf16.msra.mxu0 %v2199
  %2291 = vmatprep.subr.bf16.mxu0 0
  %2292 = vmatpush1.bf16.msra.mxu0 %v2200
  %2293 = vmatprep.subr.bf16.mxu0 0
  %2294 = vmatpush1.bf16.msra.mxu0 %v2201
  %2295 = vmatprep.subr.bf16.mxu0 0
  %2296 = vmatpush1.bf16.msra.mxu0 %v2202
  %2297 = vmatprep.subr.bf16.mxu0 0
  %2298 = vmatpush1.bf16.msra.mxu0 %v2203
  %2299 = vmatprep.subr.bf16.mxu0 0
  %2300 = vmatpush1.bf16.msra.mxu0 %v2204
  %2301 = vmatprep.subr.bf16.mxu0 0
  %2302 = vmatpush1.bf16.msra.mxu0 %v2205
  %2303 = vmatprep.subr.bf16.mxu0 0
  %2304 = vmatpush1.bf16.msra.mxu0 %v2206
  %2305 = vmatprep.subr.bf16.mxu0 0
  %2306 = vmatpush1.bf16.msra.mxu0 %v2207
  %2307 = vmatprep.subr.bf16.mxu0 0
  %2308 = vmatpush1.bf16.msra.mxu0 %v2208
  %2309 = vmatprep.subr.bf16.mxu0 0
  %2310 = vmatpush1.bf16.msra.mxu0 %v2209
  %2311 = vmatprep.subr.bf16.mxu0 0
  %2312 = vmatpush1.bf16.msra.mxu0 %v2210
  %2313 = vmatprep.subr.bf16.mxu0 0
  %2314 = vmatpush1.bf16.msra.mxu0 %v2211
  %2315 = vmatprep.subr.bf16.mxu0 0
  %2316 = vmatpush1.bf16.msra.mxu0 %v2212
  %2317 = vmatprep.subr.bf16.mxu0 0
  %2318 = vmatpush1.bf16.msra.mxu0 %v2213
  %2319 = vmatprep.mubr.bf16.mxu0 %v1982
  %2320 = vmatmul.mubr.bf16.gmra.mrb[0].mxu0 %v1981
  %v2321 = vpop.f32.mrb[0].mxu0
  %v2322 = vadd.f32 %v2281, %v2321
  %v2323 = vpop.f32.mrb[0].mxu0
  %v2324 = vpop.f32.mrb[0].mxu0
  %v2325 = vadd.f32 %v2284, %v2324
  %v2326 = vpop.f32.mrb[0].mxu0
  %2327 = vdwg.mxu0
  %2328 = vmax.xlane.f32.xlu0 %v2322
  %v2329 = vpop.xlane.xlu0 %2328
  %2330 = vmax.xlane.f32.xlu0 %v2325
  %v2331 = vpop.xlane.xlu0 %2330
  %v2332 = vsub.f32 %v2322, %v2329
  %v2333 = vsub.f32 %v2325, %v2331
  %v2334 = vmul.f32 %v2332, 1.442695
  %v2335 = vpow.pop %v2334
  %v2336 = vmul.f32 %v2333, 1.442695
  %v2337 = vpow.pop %v2336
  %2338 = vadd.xlane.f32.xlu0 %v2335
  %v2339 = vpop.xlane.xlu0 %2338
  %2340 = vadd.xlane.f32.xlu0 %v2337
  %v2341 = vpop.xlane.xlu0 %2340
  %v2342 = vlog2.pop %v2339
  %v2343 = vmul.f32 %v2342, 0.6931472
  %v2344 = vlog2.pop %v2341
  %v2345 = vmul.f32 %v2344, 0.6931472
  %v2346 = vsub.f32 %v2332, %v2343
  %v2347 = vsub.f32 %v2333, %v2345
  %2348 = vst [vmem:[%s5] sm:$0xff] %v2346
  %2349 = vst [vmem:[%s5 + $0x8] sm:$0xff] %v2347
  // Predicated region
  $region22: #{lenet_forward.5} parent=0 // pred_check
    _
  $region23: #{lenet_forward.5} parent=0 // pred_check_branch
    %2351 = sbr.rel (0) target = $region25
  $region24: #{lenet_forward.5} parent=0 // pred_region
    _
  $region25: #{lenet_forward.5} parent=0 // pred_fallthru
    _
  // Predicated region
  $region26: #{lenet_forward.5} parent=0 // pred_check
    _
  $region27: #{lenet_forward.5} parent=0 // pred_check_branch
    %2353 = sbr.rel (0) target = $region29
  $region28: #{lenet_forward.5} parent=0 // pred_region
    _
  $region29: #{lenet_forward.5} parent=0 // pred_fallthru
    _

</llo_original>
